<compile_context>
chip_gen: v7x
topology: tpu7x:2x2x1
jax: 0.10.0
libtpu: 0.0.40
codegen_flags: <defaults>
</compile_context>

<pallas_src>
import functools

import jax
import jax.numpy as jnp
from jax.experimental import pallas as pl
from jax.experimental.pallas import tpu as pltpu


# ----------------------------------------------------------------------------- #
# Tiling helper: largest multiple of one of `aligns` dividing `dim`, <= target.
# Dims that already fit stay untiled (full dim always satisfies BlockSpec rules).
# ----------------------------------------------------------------------------- #
def _pick_tile(dim, target, aligns):
    if dim <= target:
        return dim
    for align in aligns:
        t = (target // align) * align
        while t >= align:
            if dim % t == 0:
                return t
            t -= align
    return dim


# ----------------------------------------------------------------------------- #
# Tiled dense:  y = act(x @ W + b)
# ----------------------------------------------------------------------------- #
def _dense_kernel(x_ref, w_ref, b_ref, o_ref, acc_ref, *, activation):
    @pl.when(pl.program_id(2) == 0)
    def _init():
        acc_ref[...] = jnp.zeros_like(acc_ref)

    acc_ref[...] += jnp.dot(x_ref[...], w_ref[...],
                            preferred_element_type=jnp.float32)

    @pl.when(pl.program_id(2) == pl.num_programs(2) - 1)
    def _finalize():
        y = acc_ref[...] + b_ref[...]
        if activation == "gelu":
            # exact (erf) GELU, as used by BERT
            y = 0.5 * y * (1.0 + jax.lax.erf(y * 0.7071067811865476))
        elif activation == "tanh":
            y = jnp.tanh(y)
        o_ref[...] = y.astype(o_ref.dtype)


def dense(x, w, b, activation=None):
    M, K = x.shape
    K2, N = w.shape
    assert K == K2
    tm = _pick_tile(M, 512, (8,))
    tn = N if N <= 1024 else _pick_tile(N, 768, (256, 128))
    tk = K if K <= 1024 else _pick_tile(K, 512, (256, 128))
    grid = (M // tm, N // tn, K // tk)
    return pl.pallas_call(
        functools.partial(_dense_kernel, activation=activation),
        out_shape=jax.ShapeDtypeStruct((M, N), jnp.bfloat16),
        grid=grid,
        in_specs=[
            pl.BlockSpec((tm, tk), lambda i, j, k: (i, k)),
            pl.BlockSpec((tk, tn), lambda i, j, k: (k, j)),
            pl.BlockSpec((1, tn), lambda i, j, k: (0, j)),
        ],
        out_specs=pl.BlockSpec((tm, tn), lambda i, j, k: (i, j)),
        scratch_shapes=[pltpu.VMEM((tm, tn), jnp.float32)],
        compiler_params=pltpu.CompilerParams(
            dimension_semantics=("parallel", "parallel", "arbitrary")),
    )(x.astype(jnp.bfloat16), w.astype(jnp.bfloat16),
      b.reshape(1, N).astype(jnp.float32))


# ----------------------------------------------------------------------------- #
# Fused dense + bias + residual-add + LayerNorm  (full output width per block)
# ----------------------------------------------------------------------------- #
def _dense_ln_kernel(x_ref, w_ref, b_ref, r_ref, g_ref, beta_ref, o_ref, acc_ref,
                     *, eps):
    @pl.when(pl.program_id(1) == 0)
    def _init():
        acc_ref[...] = jnp.zeros_like(acc_ref)

    acc_ref[...] += jnp.dot(x_ref[...], w_ref[...],
                            preferred_element_type=jnp.float32)

    @pl.when(pl.program_id(1) == pl.num_programs(1) - 1)
    def _finalize():
        y = acc_ref[...] + b_ref[...] + r_ref[...].astype(jnp.float32)
        mean = jnp.mean(y, axis=-1, keepdims=True)
        var = jnp.mean((y - mean) ** 2, axis=-1, keepdims=True)
        out = (y - mean) * jax.lax.rsqrt(var + eps) * g_ref[...] + beta_ref[...]
        o_ref[...] = out.astype(o_ref.dtype)


def dense_add_layernorm(x, w, b, gamma, beta, residual, eps=1e-12):
    M, K = x.shape
    K2, N = w.shape
    assert K == K2
    tm = _pick_tile(M, 512, (8,))
    tk = K if K <= 1024 else _pick_tile(K, 512, (256, 128))
    grid = (M // tm, K // tk)
    return pl.pallas_call(
        functools.partial(_dense_ln_kernel, eps=eps),
        out_shape=jax.ShapeDtypeStruct((M, N), jnp.bfloat16),
        grid=grid,
        in_specs=[
            pl.BlockSpec((tm, tk), lambda i, k: (i, k)),
            pl.BlockSpec((tk, N), lambda i, k: (k, 0)),
            pl.BlockSpec((1, N), lambda i, k: (0, 0)),
            pl.BlockSpec((tm, N), lambda i, k: (i, 0)),   # residual (resident over k)
            pl.BlockSpec((1, N), lambda i, k: (0, 0)),    # gamma
            pl.BlockSpec((1, N), lambda i, k: (0, 0)),    # beta
        ],
        out_specs=pl.BlockSpec((tm, N), lambda i, k: (i, 0)),
        scratch_shapes=[pltpu.VMEM((tm, N), jnp.float32)],
        compiler_params=pltpu.CompilerParams(
            dimension_semantics=("parallel", "arbitrary")),
    )(x.astype(jnp.bfloat16), w.astype(jnp.bfloat16),
      b.reshape(1, N).astype(jnp.float32),
      residual.astype(jnp.bfloat16),
      gamma.reshape(1, N).astype(jnp.float32),
      beta.reshape(1, N).astype(jnp.float32))


# ----------------------------------------------------------------------------- #
# Stand-alone row-tiled LayerNorm (embeddings only)
# ----------------------------------------------------------------------------- #
def _ln_kernel(x_ref, g_ref, b_ref, o_ref, *, eps):
    y = x_ref[...].astype(jnp.float32)
    mean = jnp.mean(y, axis=-1, keepdims=True)
    var = jnp.mean((y - mean) ** 2, axis=-1, keepdims=True)
    o_ref[...] = ((y - mean) * jax.lax.rsqrt(var + eps) * g_ref[...]
                  + b_ref[...]).astype(o_ref.dtype)


def layernorm(x, gamma, beta, eps=1e-12):
    M, H = x.shape
    tm = _pick_tile(M, 512, (8,))
    row_spec = pl.BlockSpec((tm, H), lambda i: (i, 0))
    vec_spec = pl.BlockSpec((1, H), lambda i: (0, 0))
    return pl.pallas_call(
        functools.partial(_ln_kernel, eps=eps),
        out_shape=jax.ShapeDtypeStruct((M, H), jnp.bfloat16),
        grid=(M // tm,),
        in_specs=[row_spec, vec_spec, vec_spec],
        out_specs=row_spec,
        compiler_params=pltpu.CompilerParams(dimension_semantics=("parallel",)),
    )(x.astype(jnp.bfloat16),
      gamma.reshape(1, H).astype(jnp.float32),
      beta.reshape(1, H).astype(jnp.float32))


# ----------------------------------------------------------------------------- #
# Multi-head attention: grid over (batch, 128-lane head groups).  Per-group Q/K/V
# column blocks are selected by the BlockSpec index_maps on the fused (S,3H) slab.
# ----------------------------------------------------------------------------- #
def _softmax_head(q, k, v, bias, scale):
    # contract last dims directly (no K transpose inside the kernel)
    s = jax.lax.dot_general(q, k, (((1,), (1,)), ((), ())),
                            preferred_element_type=jnp.float32) * scale
    s = s + bias
    s = s - jnp.max(s, axis=-1, keepdims=True)
    p = jnp.exp(s)
    p = p * pl.reciprocal(jnp.sum(p, axis=-1, keepdims=True), approx=True)
    # cast to bf16 at the head boundary -> bounded live ranges, bf16 store traffic
    return jnp.dot(p.astype(jnp.bfloat16), v,
                   preferred_element_type=jnp.float32).astype(jnp.bfloat16)


def _attn_group_kernel(q_ref, k_ref, v_ref, bias_ref, o_ref, *,
                       heads_per_group, head_dim, scale):
    bias = bias_ref[0]                       # (1, S) f32, broadcast over q rows
    outs = []
    for h in range(heads_per_group):         # small static loop (2 heads per group)
        lo = h * head_dim
        outs.append(_softmax_head(q_ref[0][:, lo:lo + head_dim],
                                  k_ref[0][:, lo:lo + head_dim],
                                  v_ref[0][:, lo:lo + head_dim],
                                  bias, scale))
    # single lane-dense (S, group_width) bf16 store
    o_ref[0] = outs[0] if len(outs) == 1 else jnp.concatenate(outs, axis=-1)


def _attn_full_kernel(qkv_ref, bias_ref, o_ref, *, n_heads, head_dim, scale):
    hidden = n_heads * head_dim
    qkv = qkv_ref[0]                         # (S, 3H) bf16
    bias = bias_ref[0]                       # (1, S) f32
    outs = []
    for h in range(n_heads):
        lo = h * head_dim
        outs.append(_softmax_head(qkv[:, lo:lo + head_dim],
                                  qkv[:, hidden + lo:hidden + lo + head_dim],
                                  qkv[:, 2 * hidden + lo:2 * hidden + lo + head_dim],
                                  bias, scale))
    o_ref[0] = jnp.concatenate(outs, axis=-1)


def attention(qkv, bias, n_heads, head_dim):
    # qkv: (B, S, 3H) bf16; bias: (B, 1, S) additive mask ((1-mask)*-10000)
    B, S, threeH = qkv.shape
    H = n_heads * head_dim
    scale = 1.0 / float(head_dim) ** 0.5
    qkv = qkv.astype(jnp.bfloat16)
    bias = bias.astype(jnp.float32)

    # group as many heads as fit in 128 lanes (lane-dense blocks & stores)
    hpg = max(1, 128 // head_dim)
    while n_heads % hpg:
        hpg -= 1
    gw = hpg * head_dim

    if gw % 128 == 0:
        n_groups = n_heads // hpg
        q_spec = pl.BlockSpec((1, S, gw), lambda b, j: (b, 0, j))
        k_spec = pl.BlockSpec((1, S, gw), lambda b, j, ng=n_groups: (b, 0, ng + j))
        v_spec = pl.BlockSpec((1, S, gw), lambda b, j, ng=n_groups: (b, 0, 2 * ng + j))
        bias_spec = pl.BlockSpec((1, 1, S), lambda b, j: (b, 0, 0))
        return pl.pallas_call(
            functools.partial(_attn_group_kernel, heads_per_group=hpg,
                              head_dim=head_dim, scale=scale),
            out_shape=jax.ShapeDtypeStruct((B, S, H), jnp.bfloat16),
            grid=(B, n_groups),
            in_specs=[q_spec, k_spec, v_spec, bias_spec],
            out_specs=pl.BlockSpec((1, S, gw), lambda b, j: (b, 0, j)),
            compiler_params=pltpu.CompilerParams(
                dimension_semantics=("parallel", "parallel")),
        )(qkv, qkv, qkv, bias)

    # Fallback for head widths that do not tile to 128 lanes: monolithic per-batch block.
    return pl.pallas_call(
        functools.partial(_attn_full_kernel, n_heads=n_heads,
                          head_dim=head_dim, scale=scale),
        out_shape=jax.ShapeDtypeStruct((B, S, H), jnp.bfloat16),
        grid=(B,),
        in_specs=[pl.BlockSpec((1, S, threeH), lambda b: (b, 0, 0)),
                  pl.BlockSpec((1, 1, S), lambda b: (b, 0, 0))],
        out_specs=pl.BlockSpec((1, S, H), lambda b: (b, 0, 0)),
        compiler_params=pltpu.CompilerParams(dimension_semantics=("parallel",)),
    )(qkv, bias)


# ----------------------------------------------------------------------------- #
# Parameter init (deterministic, synthetic small BERT config)
# ----------------------------------------------------------------------------- #
def init_params(key, cfg):
    H, I = cfg["hidden"], cfg["intermediate"]

    def nrm(k, shape, dtype=jnp.bfloat16):
        return (0.02 * jax.random.normal(k, shape, dtype=jnp.float32)).astype(dtype)

    keys = iter(jax.random.split(key, 3 + cfg["layers"] * 4 + 2))

    params = {
        # embedding tables stay f32 (gather + sum done in plain JAX)
        "word_emb": nrm(next(keys), (cfg["vocab"], H), jnp.float32),
        "pos_emb": nrm(next(keys), (cfg["max_pos"], H), jnp.float32),
        "type_emb": nrm(next(keys), (cfg["type_vocab"], H), jnp.float32),
        "emb_ln_g": jnp.ones((H,), jnp.float32),
        "emb_ln_b": jnp.zeros((H,), jnp.float32),
        "layers": [],
    }
    for _ in range(cfg["layers"]):
        params["layers"].append({
            # fused QKV projection: (H, 3H) weight, (3H,) bias
            "w_qkv": nrm(next(keys), (H, 3 * H)),
            "b_qkv": jnp.zeros((3 * H,), jnp.float32),
            "wo": nrm(next(keys), (H, H)), "bo": jnp.zeros((H,), jnp.float32),
            "ln1_g": jnp.ones((H,), jnp.float32), "ln1_b": jnp.zeros((H,), jnp.float32),
            "wi": nrm(next(keys), (H, I)), "bi": jnp.zeros((I,), jnp.float32),
            "wf": nrm(next(keys), (I, H)), "bf": jnp.zeros((H,), jnp.float32),
            "ln2_g": jnp.ones((H,), jnp.float32), "ln2_b": jnp.zeros((H,), jnp.float32),
        })
    # pooler + tiny (H, 1) classifier head stay in plain JAX -> keep f32
    params["pool_w"] = nrm(next(keys), (H, H), jnp.float32)
    params["pool_b"] = jnp.zeros((H,), jnp.float32)
    params["out_w"] = nrm(next(keys), (H, 1), jnp.float32)
    params["out_b"] = jnp.zeros((1,), jnp.float32)
    return params


# ----------------------------------------------------------------------------- #
# Forward pass
# ----------------------------------------------------------------------------- #
def bert_base_cased_forward(params, ids, mask, token_type_ids, cfg):
    B, S = ids.shape
    H = cfg["hidden"]
    nH = cfg["heads"]
    dh = H // nH

    # --- embeddings ------------------------------------------------------------
    # TODO(synk): embedding row-gather stays in plain JAX (data-dependent gather).
    we = params["word_emb"][ids]                              # (B, S, H)
    pe = params["pos_emb"][jnp.arange(S)][None, :, :]         # (1, S, H)
    te = params["type_emb"][token_type_ids]                   # (B, S, H)
    emb = (we + pe + te).astype(jnp.bfloat16).reshape(B * S, H)
    x = layernorm(emb, params["emb_ln_g"], params["emb_ln_b"])   # LN-only path

    # additive attention mask bias, shape (B, 1, S)
    bias = ((1.0 - mask.astype(jnp.float32)) * -10000.0).reshape(B, 1, S)

    # --- encoder layers (post-LN BERT) ------------------------------------------
    for layer in params["layers"]:
        qkv = dense(x, layer["w_qkv"], layer["b_qkv"])            # (B*S, 3H) bf16
        ctx = attention(qkv.reshape(B, S, 3 * H), bias, nH, dh)   # (B, S, H) bf16
        # wo projection with fused bias + residual-add + LayerNorm epilogue
        x = dense_add_layernorm(ctx.reshape(B * S, H), layer["wo"], layer["bo"],
                                layer["ln1_g"], layer["ln1_b"], residual=x)
        ff = dense(x, layer["wi"], layer["bi"], activation="gelu")
        # wf projection with fused bias + residual-add + LayerNorm epilogue
        x = dense_add_layernorm(ff, layer["wf"], layer["bf"],
                                layer["ln2_g"], layer["ln2_b"], residual=x)

    # --- pooler (dense+tanh on [CLS]) + dropout(identity) + classifier ----------
    # Per perf review: tiny-B pooler and the (H,1) head run in plain JAX (pallas_call
    # overhead / sub-8-row tiles / lane-width-1 stores would cost more than the math).
    cls = x.reshape(B, S, H)[:, 0, :].astype(jnp.float32)     # (B, H)
    pooled = jnp.tanh(cls @ params["pool_w"] + params["pool_b"])
    logits = pooled @ params["out_w"] + params["out_b"]       # nn.Dropout(0.3) == id
    return logits                                             # (B, 1) f32


# ----------------------------------------------------------------------------- #
if __name__ == "__main__":
    # Small synthetic BERT config consistent with the module's forward.
    # head_dim=64 matches real BERT and exercises the 128-lane head-pair attention path.
    cfg = dict(vocab=128, hidden=128, heads=2, layers=2,
               intermediate=512, max_pos=32, type_vocab=2)
    B, S = 2, 16

    root = jax.random.PRNGKey(0)
    k_params, k_ids, k_types = jax.random.split(root, 3)

    params = init_params(k_params, cfg)
    ids = jax.random.randint(k_ids, (B, S), 0, cfg["vocab"], dtype=jnp.int32)
    mask = jnp.ones((B, S), dtype=jnp.int32)
    token_type_ids = jax.random.randint(k_types, (B, S), 0, cfg["type_vocab"],
                                        dtype=jnp.int32)

    fwd = jax.jit(functools.partial(bert_base_cased_forward, cfg=cfg))
    logits = fwd(params, ids, mask, token_type_ids)
    logits = jax.block_until_ready(logits)
    assert logits.shape == (B, 1) and logits.dtype == jnp.float32
    print("KERNEL_OK")
</pallas_src>

<mosaic_0001>
module attributes {stable_mosaic.version = 11 : i64} {
  func.func @_ln_kernel(%arg0: i32, %arg1: memref<32x128xbf16, #tpu.memory_space<vmem>>, %arg2: memref<1x128xf32, #tpu.memory_space<vmem>>, %arg3: memref<1x128xf32, #tpu.memory_space<vmem>>, %arg4: memref<32x128xbf16, #tpu.memory_space<vmem>>) attributes {dimension_semantics = [#tpu.dimension_semantics<parallel>], iteration_bounds = array<i64: 1>, scalar_prefetch = 0 : i64, scratch_operands = 0 : i64, tpu.core_type = #tpu.core_type<tc>, window_params = [{transform_indices = @transform_0, window_bounds = array<i64: 32, 128>}, {pipeline_mode = #tpu.pipeline_mode<synchronous>, transform_indices = @transform_1, window_bounds = array<i64: 1, 128>}, {pipeline_mode = #tpu.pipeline_mode<synchronous>, transform_indices = @transform_2, window_bounds = array<i64: 1, 128>}, {transform_indices = @transform_3, window_bounds = array<i64: 32, 128>}]} {
    %c0 = arith.constant 0 : index
    %c0_0 = arith.constant 0 : index
    %0 = vector.load %arg1[%c0, %c0_0] : memref<32x128xbf16, #tpu.memory_space<vmem>>, vector<32x128xbf16>
    %1 = arith.extf %0 : vector<32x128xbf16> to vector<32x128xf32>
    %cst = arith.constant dense<0.000000e+00> : vector<32xf32>
    %2 = vector.multi_reduction <add>, %1, %cst [1] : vector<32x128xf32> to vector<32xf32>
    %3 = vector.shape_cast %2 : vector<32xf32> to vector<32x1xf32>
    %cst_1 = arith.constant 1.280000e+02 : f32
    %4 = vector.broadcast %cst_1 : f32 to vector<32x1xf32>
    %5 = arith.divf %3, %4 : vector<32x1xf32>
    %6 = vector.broadcast %5 : vector<32x1xf32> to vector<32x128xf32>
    %7 = arith.subf %1, %6 : vector<32x128xf32>
    %8 = arith.mulf %7, %7 : vector<32x128xf32>
    %cst_2 = arith.constant dense<0.000000e+00> : vector<32xf32>
    %9 = vector.multi_reduction <add>, %8, %cst_2 [1] : vector<32x128xf32> to vector<32xf32>
    %10 = vector.shape_cast %9 : vector<32xf32> to vector<32x1xf32>
    %cst_3 = arith.constant 1.280000e+02 : f32
    %11 = vector.broadcast %cst_3 : f32 to vector<32x1xf32>
    %12 = arith.divf %10, %11 : vector<32x1xf32>
    %13 = vector.broadcast %5 : vector<32x1xf32> to vector<32x128xf32>
    %14 = arith.subf %1, %13 : vector<32x128xf32>
    %cst_4 = arith.constant 9.99999996E-13 : f32
    %15 = vector.broadcast %cst_4 : f32 to vector<32x1xf32>
    %16 = arith.addf %12, %15 : vector<32x1xf32>
    %17 = math.rsqrt %16 : vector<32x1xf32>
    %18 = vector.broadcast %17 : vector<32x1xf32> to vector<32x128xf32>
    %19 = arith.mulf %14, %18 : vector<32x128xf32>
    %c0_5 = arith.constant 0 : index
    %c0_6 = arith.constant 0 : index
    %20 = vector.load %arg2[%c0_5, %c0_6] : memref<1x128xf32, #tpu.memory_space<vmem>>, vector<1x128xf32>
    %21 = vector.broadcast %20 : vector<1x128xf32> to vector<32x128xf32>
    %22 = arith.mulf %19, %21 : vector<32x128xf32>
    %c0_7 = arith.constant 0 : index
    %c0_8 = arith.constant 0 : index
    %23 = vector.load %arg3[%c0_7, %c0_8] : memref<1x128xf32, #tpu.memory_space<vmem>>, vector<1x128xf32>
    %24 = vector.broadcast %23 : vector<1x128xf32> to vector<32x128xf32>
    %25 = arith.addf %22, %24 : vector<32x128xf32>
    %26 = arith.truncf %25 : vector<32x128xf32> to vector<32x128xbf16>
    %c0_9 = arith.constant 0 : index
    %c0_10 = arith.constant 0 : index
    %27 = vector.load %arg4[%c0_9, %c0_10] : memref<32x128xbf16, #tpu.memory_space<vmem>>, vector<32x128xbf16>
    tpu.vector_store %arg4[%c0_9, %c0_10], %26 {strides = array<i32>} : memref<32x128xbf16, #tpu.memory_space<vmem>>, vector<32x128xbf16>,
    return
  }
  func.func @transform_0(%arg0: i32) -> (i32, i32) {
    %c0_i32 = arith.constant 0 : i32
    %c0_i32_0 = arith.constant 0 : i32
    return %arg0, %c0_i32 : i32, i32
  }
  func.func @transform_1(%arg0: i32) -> (i32, i32) {
    %c0_i32 = arith.constant 0 : i32
    %c0_i32_0 = arith.constant 0 : i32
    %c0_i32_1 = arith.constant 0 : i32
    return %c0_i32, %c0_i32_0 : i32, i32
  }
  func.func @transform_2(%arg0: i32) -> (i32, i32) {
    %c0_i32 = arith.constant 0 : i32
    %c0_i32_0 = arith.constant 0 : i32
    %c0_i32_1 = arith.constant 0 : i32
    return %c0_i32, %c0_i32_0 : i32, i32
  }
  func.func @transform_3(%arg0: i32) -> (i32, i32) {
    %c0_i32 = arith.constant 0 : i32
    %c0_i32_0 = arith.constant 0 : i32
    return %arg0, %c0_i32 : i32, i32
  }
}

module attributes {stable_mosaic.version = 11 : i64} {
  func.func @_dense_ln_kernel(%arg0: i32, %arg1: i32, %arg2: memref<32x128xbf16, #tpu.memory_space<vmem>>, %arg3: memref<128x128xbf16, #tpu.memory_space<vmem>>, %arg4: memref<1x128xf32, #tpu.memory_space<vmem>>, %arg5: memref<32x128xbf16, #tpu.memory_space<vmem>>, %arg6: memref<1x128xf32, #tpu.memory_space<vmem>>, %arg7: memref<1x128xf32, #tpu.memory_space<vmem>>, %arg8: memref<32x128xbf16, #tpu.memory_space<vmem>>, %arg9: memref<32x128xf32, #tpu.memory_space<vmem>>) attributes {dimension_semantics = [#tpu.dimension_semantics<parallel>, #tpu.dimension_semantics<arbitrary>], iteration_bounds = array<i64: 1, 1>, scalar_prefetch = 0 : i64, scratch_operands = 1 : i64, tpu.core_type = #tpu.core_type<tc>, window_params = [{transform_indices = @transform_0, window_bounds = array<i64: 32, 128>}, {transform_indices = @transform_1, window_bounds = array<i64: 128, 128>}, {pipeline_mode = #tpu.pipeline_mode<synchronous>, transform_indices = @transform_2, window_bounds = array<i64: 1, 128>}, {transform_indices = @transform_3, window_bounds = array<i64: 32, 128>}, {pipeline_mode = #tpu.pipeline_mode<synchronous>, transform_indices = @transform_4, window_bounds = array<i64: 1, 128>}, {pipeline_mode = #tpu.pipeline_mode<synchronous>, transform_indices = @transform_5, window_bounds = array<i64: 1, 128>}, {transform_indices = @transform_6, window_bounds = array<i64: 32, 128>}]} {
    %c0_i32 = arith.constant 0 : i32
    %0 = arith.cmpi eq, %arg1, %c0_i32 : i32
    %1 = arith.extui %0 : i1 to i32
    %c0_i32_0 = arith.constant 0 : i32
    %2 = arith.cmpi ne, %1, %c0_i32_0 : i32
    scf.if %2 {
      %cst_10 = arith.constant 0.000000e+00 : f32
      %12 = vector.broadcast %cst_10 : f32 to vector<32x128xf32>
      %c0_11 = arith.constant 0 : index
      %c0_12 = arith.constant 0 : index
      %13 = vector.load %arg9[%c0_11, %c0_12] : memref<32x128xf32, #tpu.memory_space<vmem>>, vector<32x128xf32>
      tpu.vector_store %arg9[%c0_11, %c0_12], %12 {strides = array<i32>} : memref<32x128xf32, #tpu.memory_space<vmem>>, vector<32x128xf32>,
    } else {
    }
    %c0 = arith.constant 0 : index
    %c0_1 = arith.constant 0 : index
    %3 = vector.load %arg9[%c0, %c0_1] : memref<32x128xf32, #tpu.memory_space<vmem>>, vector<32x128xf32>
    %c0_2 = arith.constant 0 : index
    %c0_3 = arith.constant 0 : index
    %4 = vector.load %arg2[%c0_2, %c0_3] : memref<32x128xbf16, #tpu.memory_space<vmem>>, vector<32x128xbf16>
    %c0_4 = arith.constant 0 : index
    %c0_5 = arith.constant 0 : index
    %5 = vector.load %arg3[%c0_4, %c0_5] : memref<128x128xbf16, #tpu.memory_space<vmem>>, vector<128x128xbf16>
    %cst = arith.constant dense<0.000000e+00> : vector<32x128xf32>
    %6 = tpu.matmul %4, %5, %cst {dimension_numbers = #tpu.dot_dimension_numbers<[1], [0], [0], [1], [0, 0, 1, 1], [], []>} : vector<32x128xbf16>, vector<128x128xbf16>, vector<32x128xf32> -> vector<32x128xf32>
    %7 = arith.addf %3, %6 : vector<32x128xf32>
    %c0_6 = arith.constant 0 : index
    %c0_7 = arith.constant 0 : index
    %8 = vector.load %arg9[%c0_6, %c0_7] : memref<32x128xf32, #tpu.memory_space<vmem>>, vector<32x128xf32>
    tpu.vector_store %arg9[%c0_6, %c0_7], %7 {strides = array<i32>} : memref<32x128xf32, #tpu.memory_space<vmem>>, vector<32x128xf32>,
    %c0_i32_8 = arith.constant 0 : i32
    %9 = arith.cmpi eq, %arg1, %c0_i32_8 : i32
    %10 = arith.extui %9 : i1 to i32
    %c0_i32_9 = arith.constant 0 : i32
    %11 = arith.cmpi ne, %10, %c0_i32_9 : i32
    scf.if %11 {
      %c0_10 = arith.constant 0 : index
      %c0_11 = arith.constant 0 : index
      %12 = vector.load %arg9[%c0_10, %c0_11] : memref<32x128xf32, #tpu.memory_space<vmem>>, vector<32x128xf32>
      %c0_12 = arith.constant 0 : index
      %c0_13 = arith.constant 0 : index
      %13 = vector.load %arg4[%c0_12, %c0_13] : memref<1x128xf32, #tpu.memory_space<vmem>>, vector<1x128xf32>
      %14 = vector.broadcast %13 : vector<1x128xf32> to vector<32x128xf32>
      %15 = arith.addf %12, %14 : vector<32x128xf32>
      %c0_14 = arith.constant 0 : index
      %c0_15 = arith.constant 0 : index
      %16 = vector.load %arg5[%c0_14, %c0_15] : memref<32x128xbf16, #tpu.memory_space<vmem>>, vector<32x128xbf16>
      %17 = arith.extf %16 : vector<32x128xbf16> to vector<32x128xf32>
      %18 = arith.addf %15, %17 : vector<32x128xf32>
      %cst_16 = arith.constant dense<0.000000e+00> : vector<32xf32>
      %19 = vector.multi_reduction <add>, %18, %cst_16 [1] : vector<32x128xf32> to vector<32xf32>
      %20 = vector.shape_cast %19 : vector<32xf32> to vector<32x1xf32>
      %cst_17 = arith.constant 1.280000e+02 : f32
      %21 = vector.broadcast %cst_17 : f32 to vector<32x1xf32>
      %22 = arith.divf %20, %21 : vector<32x1xf32>
      %23 = vector.broadcast %22 : vector<32x1xf32> to vector<32x128xf32>
      %24 = arith.subf %18, %23 : vector<32x128xf32>
      %25 = arith.mulf %24, %24 : vector<32x128xf32>
      %cst_18 = arith.constant dense<0.000000e+00> : vector<32xf32>
      %26 = vector.multi_reduction <add>, %25, %cst_18 [1] : vector<32x128xf32> to vector<32xf32>
      %27 = vector.shape_cast %26 : vector<32xf32> to vector<32x1xf32>
      %cst_19 = arith.constant 1.280000e+02 : f32
      %28 = vector.broadcast %cst_19 : f32 to vector<32x1xf32>
      %29 = arith.divf %27, %28 : vector<32x1xf32>
      %30 = vector.broadcast %22 : vector<32x1xf32> to vector<32x128xf32>
      %31 = arith.subf %18, %30 : vector<32x128xf32>
      %cst_20 = arith.constant 9.99999996E-13 : f32
      %32 = vector.broadcast %cst_20 : f32 to vector<32x1xf32>
      %33 = arith.addf %29, %32 : vector<32x1xf32>
      %34 = math.rsqrt %33 : vector<32x1xf32>
      %35 = vector.broadcast %34 : vector<32x1xf32> to vector<32x128xf32>
      %36 = arith.mulf %31, %35 : vector<32x128xf32>
      %c0_21 = arith.constant 0 : index
      %c0_22 = arith.constant 0 : index
      %37 = vector.load %arg6[%c0_21, %c0_22] : memref<1x128xf32, #tpu.memory_space<vmem>>, vector<1x128xf32>
      %38 = vector.broadcast %37 : vector<1x128xf32> to vector<32x128xf32>
      %39 = arith.mulf %36, %38 : vector<32x128xf32>
      %c0_23 = arith.constant 0 : index
      %c0_24 = arith.constant 0 : index
      %40 = vector.load %arg7[%c0_23, %c0_24] : memref<1x128xf32, #tpu.memory_space<vmem>>, vector<1x128xf32>
      %41 = vector.broadcast %40 : vector<1x128xf32> to vector<32x128xf32>
      %42 = arith.addf %39, %41 : vector<32x128xf32>
      %43 = arith.truncf %42 : vector<32x128xf32> to vector<32x128xbf16>
      %c0_25 = arith.constant 0 : index
      %c0_26 = arith.constant 0 : index
      %44 = vector.load %arg8[%c0_25, %c0_26] : memref<32x128xbf16, #tpu.memory_space<vmem>>, vector<32x128xbf16>
      tpu.vector_store %arg8[%c0_25, %c0_26], %43 {strides = array<i32>} : memref<32x128xbf16, #tpu.memory_space<vmem>>, vector<32x128xbf16>,
    } else {
    }
    return
  }
  func.func @transform_0(%arg0: i32, %arg1: i32) -> (i32, i32) {
    %c0_i32 = arith.constant 0 : i32
    return %arg0, %arg1 : i32, i32
  }
  func.func @transform_1(%arg0: i32, %arg1: i32) -> (i32, i32) {
    %c0_i32 = arith.constant 0 : i32
    %c0_i32_0 = arith.constant 0 : i32
    return %arg1, %c0_i32 : i32, i32
  }
  func.func @transform_2(%arg0: i32, %arg1: i32) -> (i32, i32) {
    %c0_i32 = arith.constant 0 : i32
    %c0_i32_0 = arith.constant 0 : i32
    %c0_i32_1 = arith.constant 0 : i32
    return %c0_i32, %c0_i32_0 : i32, i32
  }
  func.func @transform_3(%arg0: i32, %arg1: i32) -> (i32, i32) {
    %c0_i32 = arith.constant 0 : i32
    %c0_i32_0 = arith.constant 0 : i32
    return %arg0, %c0_i32 : i32, i32
  }
  func.func @transform_4(%arg0: i32, %arg1: i32) -> (i32, i32) {
    %c0_i32 = arith.constant 0 : i32
    %c0_i32_0 = arith.constant 0 : i32
    %c0_i32_1 = arith.constant 0 : i32
    return %c0_i32, %c0_i32_0 : i32, i32
  }
  func.func @transform_5(%arg0: i32, %arg1: i32) -> (i32, i32) {
    %c0_i32 = arith.constant 0 : i32
    %c0_i32_0 = arith.constant 0 : i32
    %c0_i32_1 = arith.constant 0 : i32
    return %c0_i32, %c0_i32_0 : i32, i32
  }
  func.func @transform_6(%arg0: i32, %arg1: i32) -> (i32, i32) {
    %c0_i32 = arith.constant 0 : i32
    %c0_i32_0 = arith.constant 0 : i32
    return %arg0, %c0_i32 : i32, i32
  }
}

module attributes {stable_mosaic.version = 11 : i64} {
  func.func @_dense_kernel(%arg0: i32, %arg1: i32, %arg2: i32, %arg3: memref<32x128xbf16, #tpu.memory_space<vmem>>, %arg4: memref<128x384xbf16, #tpu.memory_space<vmem>>, %arg5: memref<1x384xf32, #tpu.memory_space<vmem>>, %arg6: memref<32x384xbf16, #tpu.memory_space<vmem>>, %arg7: memref<32x384xf32, #tpu.memory_space<vmem>>) attributes {dimension_semantics = [#tpu.dimension_semantics<parallel>, #tpu.dimension_semantics<parallel>, #tpu.dimension_semantics<arbitrary>], iteration_bounds = array<i64: 1, 1, 1>, scalar_prefetch = 0 : i64, scratch_operands = 1 : i64, tpu.core_type = #tpu.core_type<tc>, window_params = [{transform_indices = @transform_0, window_bounds = array<i64: 32, 128>}, {transform_indices = @transform_1, window_bounds = array<i64: 128, 384>}, {transform_indices = @transform_2, window_bounds = array<i64: 1, 384>}, {transform_indices = @transform_3, window_bounds = array<i64: 32, 384>}]} {
    %c0_i32 = arith.constant 0 : i32
    %0 = arith.cmpi eq, %arg2, %c0_i32 : i32
    %1 = arith.extui %0 : i1 to i32
    %c0_i32_0 = arith.constant 0 : i32
    %2 = arith.cmpi ne, %1, %c0_i32_0 : i32
    scf.if %2 {
      %cst_10 = arith.constant 0.000000e+00 : f32
      %12 = vector.broadcast %cst_10 : f32 to vector<32x384xf32>
      %c0_11 = arith.constant 0 : index
      %c0_12 = arith.constant 0 : index
      %13 = vector.load %arg7[%c0_11, %c0_12] : memref<32x384xf32, #tpu.memory_space<vmem>>, vector<32x384xf32>
      tpu.vector_store %arg7[%c0_11, %c0_12], %12 {strides = array<i32>} : memref<32x384xf32, #tpu.memory_space<vmem>>, vector<32x384xf32>,
    } else {
    }
    %c0 = arith.constant 0 : index
    %c0_1 = arith.constant 0 : index
    %3 = vector.load %arg7[%c0, %c0_1] : memref<32x384xf32, #tpu.memory_space<vmem>>, vector<32x384xf32>
    %c0_2 = arith.constant 0 : index
    %c0_3 = arith.constant 0 : index
    %4 = vector.load %arg3[%c0_2, %c0_3] : memref<32x128xbf16, #tpu.memory_space<vmem>>, vector<32x128xbf16>
    %c0_4 = arith.constant 0 : index
    %c0_5 = arith.constant 0 : index
    %5 = vector.load %arg4[%c0_4, %c0_5] : memref<128x384xbf16, #tpu.memory_space<vmem>>, vector<128x384xbf16>
    %cst = arith.constant dense<0.000000e+00> : vector<32x384xf32>
    %6 = tpu.matmul %4, %5, %cst {dimension_numbers = #tpu.dot_dimension_numbers<[1], [0], [0], [1], [0, 0, 1, 1], [], []>} : vector<32x128xbf16>, vector<128x384xbf16>, vector<32x384xf32> -> vector<32x384xf32>
    %7 = arith.addf %3, %6 : vector<32x384xf32>
    %c0_6 = arith.constant 0 : index
    %c0_7 = arith.constant 0 : index
    %8 = vector.load %arg7[%c0_6, %c0_7] : memref<32x384xf32, #tpu.memory_space<vmem>>, vector<32x384xf32>
    tpu.vector_store %arg7[%c0_6, %c0_7], %7 {strides = array<i32>} : memref<32x384xf32, #tpu.memory_space<vmem>>, vector<32x384xf32>,
    %c0_i32_8 = arith.constant 0 : i32
    %9 = arith.cmpi eq, %arg2, %c0_i32_8 : i32
    %10 = arith.extui %9 : i1 to i32
    %c0_i32_9 = arith.constant 0 : i32
    %11 = arith.cmpi ne, %10, %c0_i32_9 : i32
    scf.if %11 {
      %c0_10 = arith.constant 0 : index
      %c0_11 = arith.constant 0 : index
      %12 = vector.load %arg7[%c0_10, %c0_11] : memref<32x384xf32, #tpu.memory_space<vmem>>, vector<32x384xf32>
      %c0_12 = arith.constant 0 : index
      %c0_13 = arith.constant 0 : index
      %13 = vector.load %arg5[%c0_12, %c0_13] : memref<1x384xf32, #tpu.memory_space<vmem>>, vector<1x384xf32>
      %14 = vector.broadcast %13 : vector<1x384xf32> to vector<32x384xf32>
      %15 = arith.addf %12, %14 : vector<32x384xf32>
      %16 = arith.truncf %15 : vector<32x384xf32> to vector<32x384xbf16>
      %c0_14 = arith.constant 0 : index
      %c0_15 = arith.constant 0 : index
      %17 = vector.load %arg6[%c0_14, %c0_15] : memref<32x384xbf16, #tpu.memory_space<vmem>>, vector<32x384xbf16>
      tpu.vector_store %arg6[%c0_14, %c0_15], %16 {strides = array<i32>} : memref<32x384xbf16, #tpu.memory_space<vmem>>, vector<32x384xbf16>,
    } else {
    }
    return
  }
  func.func @transform_0(%arg0: i32, %arg1: i32, %arg2: i32) -> (i32, i32) {
    %c0_i32 = arith.constant 0 : i32
    return %arg0, %arg2 : i32, i32
  }
  func.func @transform_1(%arg0: i32, %arg1: i32, %arg2: i32) -> (i32, i32) {
    %c0_i32 = arith.constant 0 : i32
    return %arg2, %arg1 : i32, i32
  }
  func.func @transform_2(%arg0: i32, %arg1: i32, %arg2: i32) -> (i32, i32) {
    %c0_i32 = arith.constant 0 : i32
    %c0_i32_0 = arith.constant 0 : i32
    return %c0_i32, %arg1 : i32, i32
  }
  func.func @transform_3(%arg0: i32, %arg1: i32, %arg2: i32) -> (i32, i32) {
    %c0_i32 = arith.constant 0 : i32
    return %arg0, %arg1 : i32, i32
  }
}

module attributes {stable_mosaic.version = 11 : i64} {
  func.func @_attn_group_kernel(%arg0: i32, %arg1: i32, %arg2: memref<1x16x128xbf16, #tpu.memory_space<vmem>>, %arg3: memref<1x16x128xbf16, #tpu.memory_space<vmem>>, %arg4: memref<1x16x128xbf16, #tpu.memory_space<vmem>>, %arg5: memref<1x1x16xf32, #tpu.memory_space<vmem>>, %arg6: memref<1x16x128xbf16, #tpu.memory_space<vmem>>) attributes {dimension_semantics = [#tpu.dimension_semantics<parallel>, #tpu.dimension_semantics<parallel>], iteration_bounds = array<i64: 2, 1>, scalar_prefetch = 0 : i64, scratch_operands = 0 : i64, tpu.core_type = #tpu.core_type<tc>, window_params = [{transform_indices = @transform_0, window_bounds = array<i64: 1, 16, 128>}, {transform_indices = @transform_1, window_bounds = array<i64: 1, 16, 128>}, {transform_indices = @transform_2, window_bounds = array<i64: 1, 16, 128>}, {transform_indices = @transform_3, window_bounds = array<i64: 1, 1, 16>}, {transform_indices = @transform_4, window_bounds = array<i64: 1, 16, 128>}]} {
    %c0 = arith.constant 0 : index
    %c0_0 = arith.constant 0 : index
    %c0_1 = arith.constant 0 : index
    %0 = vector.load %arg5[%c0, %c0_0, %c0_1] : memref<1x1x16xf32, #tpu.memory_space<vmem>>, vector<1x1x16xf32>
    %1 = vector.shape_cast %0 : vector<1x1x16xf32> to vector<1x16xf32>
    %c0_2 = arith.constant 0 : index
    %c0_3 = arith.constant 0 : index
    %c0_4 = arith.constant 0 : index
    %2 = vector.load %arg2[%c0_2, %c0_3, %c0_4] : memref<1x16x128xbf16, #tpu.memory_space<vmem>>, vector<1x16x128xbf16>
    %3 = vector.shape_cast %2 : vector<1x16x128xbf16> to vector<16x128xbf16>
    %4 = vector.extract_strided_slice %3 {offsets = [0, 0], sizes = [16, 64], strides = [1, 1]} : vector<16x128xbf16> to vector<16x64xbf16>
    %c0_5 = arith.constant 0 : index
    %c0_6 = arith.constant 0 : index
    %c0_7 = arith.constant 0 : index
    %5 = vector.load %arg3[%c0_5, %c0_6, %c0_7] : memref<1x16x128xbf16, #tpu.memory_space<vmem>>, vector<1x16x128xbf16>
    %6 = vector.shape_cast %5 : vector<1x16x128xbf16> to vector<16x128xbf16>
    %7 = vector.extract_strided_slice %6 {offsets = [0, 0], sizes = [16, 64], strides = [1, 1]} : vector<16x128xbf16> to vector<16x64xbf16>
    %c0_8 = arith.constant 0 : index
    %c0_9 = arith.constant 0 : index
    %c0_10 = arith.constant 0 : index
    %8 = vector.load %arg4[%c0_8, %c0_9, %c0_10] : memref<1x16x128xbf16, #tpu.memory_space<vmem>>, vector<1x16x128xbf16>
    %9 = vector.shape_cast %8 : vector<1x16x128xbf16> to vector<16x128xbf16>
    %10 = vector.extract_strided_slice %9 {offsets = [0, 0], sizes = [16, 64], strides = [1, 1]} : vector<16x128xbf16> to vector<16x64xbf16>
    %cst = arith.constant dense<0.000000e+00> : vector<16x16xf32>
    %11 = tpu.matmul %4, %7, %cst {dimension_numbers = #tpu.dot_dimension_numbers<[1], [1], [0], [0], [0, 0, 1, 0], [], []>} : vector<16x64xbf16>, vector<16x64xbf16>, vector<16x16xf32> -> vector<16x16xf32>
    %cst_11 = arith.constant 1.250000e-01 : f32
    %12 = vector.broadcast %cst_11 : f32 to vector<16x16xf32>
    %13 = arith.mulf %11, %12 : vector<16x16xf32>
    %14 = vector.broadcast %1 : vector<1x16xf32> to vector<16x16xf32>
    %15 = arith.addf %13, %14 : vector<16x16xf32>
    %cst_12 = arith.constant dense<0xFF800000> : vector<16xf32>
    %16 = vector.multi_reduction <maximumf>, %15, %cst_12 [1] : vector<16x16xf32> to vector<16xf32>
    %17 = vector.shape_cast %16 : vector<16xf32> to vector<16x1xf32>
    %18 = vector.broadcast %17 : vector<16x1xf32> to vector<16x16xf32>
    %19 = arith.subf %15, %18 : vector<16x16xf32>
    %20 = math.exp %19 : vector<16x16xf32>
    %cst_13 = arith.constant dense<0.000000e+00> : vector<16xf32>
    %21 = vector.multi_reduction <add>, %20, %cst_13 [1] : vector<16x16xf32> to vector<16xf32>
    %22 = vector.shape_cast %21 : vector<16xf32> to vector<16x1xf32>
    %23 = tpu.reciprocal %22 {approx = true} : vector<16x1xf32> -> vector<16x1xf32>
    %24 = vector.broadcast %23 : vector<16x1xf32> to vector<16x16xf32>
    %25 = arith.mulf %20, %24 : vector<16x16xf32>
    %26 = arith.truncf %25 : vector<16x16xf32> to vector<16x16xbf16>
    %cst_14 = arith.constant dense<0.000000e+00> : vector<16x64xf32>
    %27 = tpu.matmul %26, %10, %cst_14 {dimension_numbers = #tpu.dot_dimension_numbers<[1], [0], [0], [1], [0, 0, 1, 1], [], []>} : vector<16x16xbf16>, vector<16x64xbf16>, vector<16x64xf32> -> vector<16x64xf32>
    %28 = arith.truncf %27 : vector<16x64xf32> to vector<16x64xbf16>
    %c0_15 = arith.constant 0 : index
    %c0_16 = arith.constant 0 : index
    %c0_17 = arith.constant 0 : index
    %29 = vector.load %arg2[%c0_15, %c0_16, %c0_17] : memref<1x16x128xbf16, #tpu.memory_space<vmem>>, vector<1x16x128xbf16>
    %30 = vector.shape_cast %29 : vector<1x16x128xbf16> to vector<16x128xbf16>
    %31 = vector.extract_strided_slice %30 {offsets = [0, 64], sizes = [16, 64], strides = [1, 1]} : vector<16x128xbf16> to vector<16x64xbf16>
    %c0_18 = arith.constant 0 : index
    %c0_19 = arith.constant 0 : index
    %c0_20 = arith.constant 0 : index
    %32 = vector.load %arg3[%c0_18, %c0_19, %c0_20] : memref<1x16x128xbf16, #tpu.memory_space<vmem>>, vector<1x16x128xbf16>
    %33 = vector.shape_cast %32 : vector<1x16x128xbf16> to vector<16x128xbf16>
    %34 = vector.extract_strided_slice %33 {offsets = [0, 64], sizes = [16, 64], strides = [1, 1]} : vector<16x128xbf16> to vector<16x64xbf16>
    %c0_21 = arith.constant 0 : index
    %c0_22 = arith.constant 0 : index
    %c0_23 = arith.constant 0 : index
    %35 = vector.load %arg4[%c0_21, %c0_22, %c0_23] : memref<1x16x128xbf16, #tpu.memory_space<vmem>>, vector<1x16x128xbf16>
    %36 = vector.shape_cast %35 : vector<1x16x128xbf16> to vector<16x128xbf16>
    %37 = vector.extract_strided_slice %36 {offsets = [0, 64], sizes = [16, 64], strides = [1, 1]} : vector<16x128xbf16> to vector<16x64xbf16>
    %cst_24 = arith.constant dense<0.000000e+00> : vector<16x16xf32>
    %38 = tpu.matmul %31, %34, %cst_24 {dimension_numbers = #tpu.dot_dimension_numbers<[1], [1], [0], [0], [0, 0, 1, 0], [], []>} : vector<16x64xbf16>, vector<16x64xbf16>, vector<16x16xf32> -> vector<16x16xf32>
    %cst_25 = arith.constant 1.250000e-01 : f32
    %39 = vector.broadcast %cst_25 : f32 to vector<16x16xf32>
    %40 = arith.mulf %38, %39 : vector<16x16xf32>
    %41 = vector.broadcast %1 : vector<1x16xf32> to vector<16x16xf32>
    %42 = arith.addf %40, %41 : vector<16x16xf32>
    %cst_26 = arith.constant dense<0xFF800000> : vector<16xf32>
    %43 = vector.multi_reduction <maximumf>, %42, %cst_26 [1] : vector<16x16xf32> to vector<16xf32>
    %44 = vector.shape_cast %43 : vector<16xf32> to vector<16x1xf32>
    %45 = vector.broadcast %44 : vector<16x1xf32> to vector<16x16xf32>
    %46 = arith.subf %42, %45 : vector<16x16xf32>
    %47 = math.exp %46 : vector<16x16xf32>
    %cst_27 = arith.constant dense<0.000000e+00> : vector<16xf32>
    %48 = vector.multi_reduction <add>, %47, %cst_27 [1] : vector<16x16xf32> to vector<16xf32>
    %49 = vector.shape_cast %48 : vector<16xf32> to vector<16x1xf32>
    %50 = tpu.reciprocal %49 {approx = true} : vector<16x1xf32> -> vector<16x1xf32>
    %51 = vector.broadcast %50 : vector<16x1xf32> to vector<16x16xf32>
    %52 = arith.mulf %47, %51 : vector<16x16xf32>
    %53 = arith.truncf %52 : vector<16x16xf32> to vector<16x16xbf16>
    %cst_28 = arith.constant dense<0.000000e+00> : vector<16x64xf32>
    %54 = tpu.matmul %53, %37, %cst_28 {dimension_numbers = #tpu.dot_dimension_numbers<[1], [0], [0], [1], [0, 0, 1, 1], [], []>} : vector<16x16xbf16>, vector<16x64xbf16>, vector<16x64xf32> -> vector<16x64xf32>
    %55 = arith.truncf %54 : vector<16x64xf32> to vector<16x64xbf16>
    %56 = tpu.concatenate %28, %55 in 1 : vector<16x64xbf16>, vector<16x64xbf16> -> vector<16x128xbf16>
    %c0_29 = arith.constant 0 : index
    %c0_30 = arith.constant 0 : index
    %c0_31 = arith.constant 0 : index
    %57 = vector.load %arg6[%c0_29, %c0_30, %c0_31] : memref<1x16x128xbf16, #tpu.memory_space<vmem>>, vector<1x16x128xbf16>
    %58 = vector.shape_cast %57 : vector<1x16x128xbf16> to vector<16x128xbf16>
    %59 = vector.shape_cast %56 : vector<16x128xbf16> to vector<1x16x128xbf16>
    tpu.vector_store %arg6[%c0_29, %c0_30, %c0_31], %59 {strides = array<i32>} : memref<1x16x128xbf16, #tpu.memory_space<vmem>>, vector<1x16x128xbf16>,
    return
  }
  func.func @transform_0(%arg0: i32, %arg1: i32) -> (i32, i32, i32) {
    %c0_i32 = arith.constant 0 : i32
    %c0_i32_0 = arith.constant 0 : i32
    return %arg0, %c0_i32, %arg1 : i32, i32, i32
  }
  func.func @transform_1(%arg0: i32, %arg1: i32) -> (i32, i32, i32) {
    %c1_i32 = arith.constant 1 : i32
    %0 = arith.addi %c1_i32, %arg1 : i32
    %c0_i32 = arith.constant 0 : i32
    %c0_i32_0 = arith.constant 0 : i32
    return %arg0, %c0_i32, %0 : i32, i32, i32
  }
  func.func @transform_2(%arg0: i32, %arg1: i32) -> (i32, i32, i32) {
    %c2_i32 = arith.constant 2 : i32
    %0 = arith.addi %c2_i32, %arg1 : i32
    %c0_i32 = arith.constant 0 : i32
    %c0_i32_0 = arith.constant 0 : i32
    return %arg0, %c0_i32, %0 : i32, i32, i32
  }
  func.func @transform_3(%arg0: i32, %arg1: i32) -> (i32, i32, i32) {
    %c0_i32 = arith.constant 0 : i32
    %c0_i32_0 = arith.constant 0 : i32
    %c0_i32_1 = arith.constant 0 : i32
    return %arg0, %c0_i32, %c0_i32_0 : i32, i32, i32
  }
  func.func @transform_4(%arg0: i32, %arg1: i32) -> (i32, i32, i32) {
    %c0_i32 = arith.constant 0 : i32
    %c0_i32_0 = arith.constant 0 : i32
    return %arg0, %c0_i32, %arg1 : i32, i32, i32
  }
}

module attributes {stable_mosaic.version = 11 : i64} {
  func.func @_dense_kernel(%arg0: i32, %arg1: i32, %arg2: i32, %arg3: memref<32x128xbf16, #tpu.memory_space<vmem>>, %arg4: memref<128x512xbf16, #tpu.memory_space<vmem>>, %arg5: memref<1x512xf32, #tpu.memory_space<vmem>>, %arg6: memref<32x512xbf16, #tpu.memory_space<vmem>>, %arg7: memref<32x512xf32, #tpu.memory_space<vmem>>) attributes {dimension_semantics = [#tpu.dimension_semantics<parallel>, #tpu.dimension_semantics<parallel>, #tpu.dimension_semantics<arbitrary>], iteration_bounds = array<i64: 1, 1, 1>, scalar_prefetch = 0 : i64, scratch_operands = 1 : i64, tpu.core_type = #tpu.core_type<tc>, window_params = [{transform_indices = @transform_0, window_bounds = array<i64: 32, 128>}, {transform_indices = @transform_1, window_bounds = array<i64: 128, 512>}, {transform_indices = @transform_2, window_bounds = array<i64: 1, 512>}, {transform_indices = @transform_3, window_bounds = array<i64: 32, 512>}]} {
    %c0_i32 = arith.constant 0 : i32
    %0 = arith.cmpi eq, %arg2, %c0_i32 : i32
    %1 = arith.extui %0 : i1 to i32
    %c0_i32_0 = arith.constant 0 : i32
    %2 = arith.cmpi ne, %1, %c0_i32_0 : i32
    scf.if %2 {
      %cst_10 = arith.constant 0.000000e+00 : f32
      %12 = vector.broadcast %cst_10 : f32 to vector<32x512xf32>
      %c0_11 = arith.constant 0 : index
      %c0_12 = arith.constant 0 : index
      %13 = vector.load %arg7[%c0_11, %c0_12] : memref<32x512xf32, #tpu.memory_space<vmem>>, vector<32x512xf32>
      tpu.vector_store %arg7[%c0_11, %c0_12], %12 {strides = array<i32>} : memref<32x512xf32, #tpu.memory_space<vmem>>, vector<32x512xf32>,
    } else {
    }
    %c0 = arith.constant 0 : index
    %c0_1 = arith.constant 0 : index
    %3 = vector.load %arg7[%c0, %c0_1] : memref<32x512xf32, #tpu.memory_space<vmem>>, vector<32x512xf32>
    %c0_2 = arith.constant 0 : index
    %c0_3 = arith.constant 0 : index
    %4 = vector.load %arg3[%c0_2, %c0_3] : memref<32x128xbf16, #tpu.memory_space<vmem>>, vector<32x128xbf16>
    %c0_4 = arith.constant 0 : index
    %c0_5 = arith.constant 0 : index
    %5 = vector.load %arg4[%c0_4, %c0_5] : memref<128x512xbf16, #tpu.memory_space<vmem>>, vector<128x512xbf16>
    %cst = arith.constant dense<0.000000e+00> : vector<32x512xf32>
    %6 = tpu.matmul %4, %5, %cst {dimension_numbers = #tpu.dot_dimension_numbers<[1], [0], [0], [1], [0, 0, 1, 1], [], []>} : vector<32x128xbf16>, vector<128x512xbf16>, vector<32x512xf32> -> vector<32x512xf32>
    %7 = arith.addf %3, %6 : vector<32x512xf32>
    %c0_6 = arith.constant 0 : index
    %c0_7 = arith.constant 0 : index
    %8 = vector.load %arg7[%c0_6, %c0_7] : memref<32x512xf32, #tpu.memory_space<vmem>>, vector<32x512xf32>
    tpu.vector_store %arg7[%c0_6, %c0_7], %7 {strides = array<i32>} : memref<32x512xf32, #tpu.memory_space<vmem>>, vector<32x512xf32>,
    %c0_i32_8 = arith.constant 0 : i32
    %9 = arith.cmpi eq, %arg2, %c0_i32_8 : i32
    %10 = arith.extui %9 : i1 to i32
    %c0_i32_9 = arith.constant 0 : i32
    %11 = arith.cmpi ne, %10, %c0_i32_9 : i32
    scf.if %11 {
      %c0_10 = arith.constant 0 : index
      %c0_11 = arith.constant 0 : index
      %12 = vector.load %arg7[%c0_10, %c0_11] : memref<32x512xf32, #tpu.memory_space<vmem>>, vector<32x512xf32>
      %c0_12 = arith.constant 0 : index
      %c0_13 = arith.constant 0 : index
      %13 = vector.load %arg5[%c0_12, %c0_13] : memref<1x512xf32, #tpu.memory_space<vmem>>, vector<1x512xf32>
      %14 = vector.broadcast %13 : vector<1x512xf32> to vector<32x512xf32>
      %15 = arith.addf %12, %14 : vector<32x512xf32>
      %cst_14 = arith.constant 5.000000e-01 : f32
      %16 = vector.broadcast %cst_14 : f32 to vector<32x512xf32>
      %17 = arith.mulf %16, %15 : vector<32x512xf32>
      %cst_15 = arith.constant 0.707106769 : f32
      %18 = vector.broadcast %cst_15 : f32 to vector<32x512xf32>
      %19 = arith.mulf %15, %18 : vector<32x512xf32>
      %20 = math.erf %19 : vector<32x512xf32>
      %cst_16 = arith.constant 1.000000e+00 : f32
      %21 = vector.broadcast %cst_16 : f32 to vector<32x512xf32>
      %22 = arith.addf %21, %20 : vector<32x512xf32>
      %23 = arith.mulf %17, %22 : vector<32x512xf32>
      %24 = arith.truncf %23 : vector<32x512xf32> to vector<32x512xbf16>
      %c0_17 = arith.constant 0 : index
      %c0_18 = arith.constant 0 : index
      %25 = vector.load %arg6[%c0_17, %c0_18] : memref<32x512xbf16, #tpu.memory_space<vmem>>, vector<32x512xbf16>
      tpu.vector_store %arg6[%c0_17, %c0_18], %24 {strides = array<i32>} : memref<32x512xbf16, #tpu.memory_space<vmem>>, vector<32x512xbf16>,
    } else {
    }
    return
  }
  func.func @transform_0(%arg0: i32, %arg1: i32, %arg2: i32) -> (i32, i32) {
    %c0_i32 = arith.constant 0 : i32
    return %arg0, %arg2 : i32, i32
  }
  func.func @transform_1(%arg0: i32, %arg1: i32, %arg2: i32) -> (i32, i32) {
    %c0_i32 = arith.constant 0 : i32
    return %arg2, %arg1 : i32, i32
  }
  func.func @transform_2(%arg0: i32, %arg1: i32, %arg2: i32) -> (i32, i32) {
    %c0_i32 = arith.constant 0 : i32
    %c0_i32_0 = arith.constant 0 : i32
    return %c0_i32, %arg1 : i32, i32
  }
  func.func @transform_3(%arg0: i32, %arg1: i32, %arg2: i32) -> (i32, i32) {
    %c0_i32 = arith.constant 0 : i32
    return %arg0, %arg1 : i32, i32
  }
}

module attributes {stable_mosaic.version = 11 : i64} {
  func.func @_dense_ln_kernel(%arg0: i32, %arg1: i32, %arg2: memref<32x512xbf16, #tpu.memory_space<vmem>>, %arg3: memref<512x128xbf16, #tpu.memory_space<vmem>>, %arg4: memref<1x128xf32, #tpu.memory_space<vmem>>, %arg5: memref<32x128xbf16, #tpu.memory_space<vmem>>, %arg6: memref<1x128xf32, #tpu.memory_space<vmem>>, %arg7: memref<1x128xf32, #tpu.memory_space<vmem>>, %arg8: memref<32x128xbf16, #tpu.memory_space<vmem>>, %arg9: memref<32x128xf32, #tpu.memory_space<vmem>>) attributes {dimension_semantics = [#tpu.dimension_semantics<parallel>, #tpu.dimension_semantics<arbitrary>], iteration_bounds = array<i64: 1, 1>, scalar_prefetch = 0 : i64, scratch_operands = 1 : i64, tpu.core_type = #tpu.core_type<tc>, window_params = [{transform_indices = @transform_0, window_bounds = array<i64: 32, 512>}, {transform_indices = @transform_1, window_bounds = array<i64: 512, 128>}, {pipeline_mode = #tpu.pipeline_mode<synchronous>, transform_indices = @transform_2, window_bounds = array<i64: 1, 128>}, {transform_indices = @transform_3, window_bounds = array<i64: 32, 128>}, {pipeline_mode = #tpu.pipeline_mode<synchronous>, transform_indices = @transform_4, window_bounds = array<i64: 1, 128>}, {pipeline_mode = #tpu.pipeline_mode<synchronous>, transform_indices = @transform_5, window_bounds = array<i64: 1, 128>}, {transform_indices = @transform_6, window_bounds = array<i64: 32, 128>}]} {
    %c0_i32 = arith.constant 0 : i32
    %0 = arith.cmpi eq, %arg1, %c0_i32 : i32
    %1 = arith.extui %0 : i1 to i32
    %c0_i32_0 = arith.constant 0 : i32
    %2 = arith.cmpi ne, %1, %c0_i32_0 : i32
    scf.if %2 {
      %cst_10 = arith.constant 0.000000e+00 : f32
      %12 = vector.broadcast %cst_10 : f32 to vector<32x128xf32>
      %c0_11 = arith.constant 0 : index
      %c0_12 = arith.constant 0 : index
      %13 = vector.load %arg9[%c0_11, %c0_12] : memref<32x128xf32, #tpu.memory_space<vmem>>, vector<32x128xf32>
      tpu.vector_store %arg9[%c0_11, %c0_12], %12 {strides = array<i32>} : memref<32x128xf32, #tpu.memory_space<vmem>>, vector<32x128xf32>,
    } else {
    }
    %c0 = arith.constant 0 : index
    %c0_1 = arith.constant 0 : index
    %3 = vector.load %arg9[%c0, %c0_1] : memref<32x128xf32, #tpu.memory_space<vmem>>, vector<32x128xf32>
    %c0_2 = arith.constant 0 : index
    %c0_3 = arith.constant 0 : index
    %4 = vector.load %arg2[%c0_2, %c0_3] : memref<32x512xbf16, #tpu.memory_space<vmem>>, vector<32x512xbf16>
    %c0_4 = arith.constant 0 : index
    %c0_5 = arith.constant 0 : index
    %5 = vector.load %arg3[%c0_4, %c0_5] : memref<512x128xbf16, #tpu.memory_space<vmem>>, vector<512x128xbf16>
    %cst = arith.constant dense<0.000000e+00> : vector<32x128xf32>
    %6 = tpu.matmul %4, %5, %cst {dimension_numbers = #tpu.dot_dimension_numbers<[1], [0], [0], [1], [0, 0, 1, 1], [], []>} : vector<32x512xbf16>, vector<512x128xbf16>, vector<32x128xf32> -> vector<32x128xf32>
    %7 = arith.addf %3, %6 : vector<32x128xf32>
    %c0_6 = arith.constant 0 : index
    %c0_7 = arith.constant 0 : index
    %8 = vector.load %arg9[%c0_6, %c0_7] : memref<32x128xf32, #tpu.memory_space<vmem>>, vector<32x128xf32>
    tpu.vector_store %arg9[%c0_6, %c0_7], %7 {strides = array<i32>} : memref<32x128xf32, #tpu.memory_space<vmem>>, vector<32x128xf32>,
    %c0_i32_8 = arith.constant 0 : i32
    %9 = arith.cmpi eq, %arg1, %c0_i32_8 : i32
    %10 = arith.extui %9 : i1 to i32
    %c0_i32_9 = arith.constant 0 : i32
    %11 = arith.cmpi ne, %10, %c0_i32_9 : i32
    scf.if %11 {
      %c0_10 = arith.constant 0 : index
      %c0_11 = arith.constant 0 : index
      %12 = vector.load %arg9[%c0_10, %c0_11] : memref<32x128xf32, #tpu.memory_space<vmem>>, vector<32x128xf32>
      %c0_12 = arith.constant 0 : index
      %c0_13 = arith.constant 0 : index
      %13 = vector.load %arg4[%c0_12, %c0_13] : memref<1x128xf32, #tpu.memory_space<vmem>>, vector<1x128xf32>
      %14 = vector.broadcast %13 : vector<1x128xf32> to vector<32x128xf32>
      %15 = arith.addf %12, %14 : vector<32x128xf32>
      %c0_14 = arith.constant 0 : index
      %c0_15 = arith.constant 0 : index
      %16 = vector.load %arg5[%c0_14, %c0_15] : memref<32x128xbf16, #tpu.memory_space<vmem>>, vector<32x128xbf16>
      %17 = arith.extf %16 : vector<32x128xbf16> to vector<32x128xf32>
      %18 = arith.addf %15, %17 : vector<32x128xf32>
      %cst_16 = arith.constant dense<0.000000e+00> : vector<32xf32>
      %19 = vector.multi_reduction <add>, %18, %cst_16 [1] : vector<32x128xf32> to vector<32xf32>
      %20 = vector.shape_cast %19 : vector<32xf32> to vector<32x1xf32>
      %cst_17 = arith.constant 1.280000e+02 : f32
      %21 = vector.broadcast %cst_17 : f32 to vector<32x1xf32>
      %22 = arith.divf %20, %21 : vector<32x1xf32>
      %23 = vector.broadcast %22 : vector<32x1xf32> to vector<32x128xf32>
      %24 = arith.subf %18, %23 : vector<32x128xf32>
      %25 = arith.mulf %24, %24 : vector<32x128xf32>
      %cst_18 = arith.constant dense<0.000000e+00> : vector<32xf32>
      %26 = vector.multi_reduction <add>, %25, %cst_18 [1] : vector<32x128xf32> to vector<32xf32>
      %27 = vector.shape_cast %26 : vector<32xf32> to vector<32x1xf32>
      %cst_19 = arith.constant 1.280000e+02 : f32
      %28 = vector.broadcast %cst_19 : f32 to vector<32x1xf32>
      %29 = arith.divf %27, %28 : vector<32x1xf32>
      %30 = vector.broadcast %22 : vector<32x1xf32> to vector<32x128xf32>
      %31 = arith.subf %18, %30 : vector<32x128xf32>
      %cst_20 = arith.constant 9.99999996E-13 : f32
      %32 = vector.broadcast %cst_20 : f32 to vector<32x1xf32>
      %33 = arith.addf %29, %32 : vector<32x1xf32>
      %34 = math.rsqrt %33 : vector<32x1xf32>
      %35 = vector.broadcast %34 : vector<32x1xf32> to vector<32x128xf32>
      %36 = arith.mulf %31, %35 : vector<32x128xf32>
      %c0_21 = arith.constant 0 : index
      %c0_22 = arith.constant 0 : index
      %37 = vector.load %arg6[%c0_21, %c0_22] : memref<1x128xf32, #tpu.memory_space<vmem>>, vector<1x128xf32>
      %38 = vector.broadcast %37 : vector<1x128xf32> to vector<32x128xf32>
      %39 = arith.mulf %36, %38 : vector<32x128xf32>
      %c0_23 = arith.constant 0 : index
      %c0_24 = arith.constant 0 : index
      %40 = vector.load %arg7[%c0_23, %c0_24] : memref<1x128xf32, #tpu.memory_space<vmem>>, vector<1x128xf32>
      %41 = vector.broadcast %40 : vector<1x128xf32> to vector<32x128xf32>
      %42 = arith.addf %39, %41 : vector<32x128xf32>
      %43 = arith.truncf %42 : vector<32x128xf32> to vector<32x128xbf16>
      %c0_25 = arith.constant 0 : index
      %c0_26 = arith.constant 0 : index
      %44 = vector.load %arg8[%c0_25, %c0_26] : memref<32x128xbf16, #tpu.memory_space<vmem>>, vector<32x128xbf16>
      tpu.vector_store %arg8[%c0_25, %c0_26], %43 {strides = array<i32>} : memref<32x128xbf16, #tpu.memory_space<vmem>>, vector<32x128xbf16>,
    } else {
    }
    return
  }
  func.func @transform_0(%arg0: i32, %arg1: i32) -> (i32, i32) {
    %c0_i32 = arith.constant 0 : i32
    return %arg0, %arg1 : i32, i32
  }
  func.func @transform_1(%arg0: i32, %arg1: i32) -> (i32, i32) {
    %c0_i32 = arith.constant 0 : i32
    %c0_i32_0 = arith.constant 0 : i32
    return %arg1, %c0_i32 : i32, i32
  }
  func.func @transform_2(%arg0: i32, %arg1: i32) -> (i32, i32) {
    %c0_i32 = arith.constant 0 : i32
    %c0_i32_0 = arith.constant 0 : i32
    %c0_i32_1 = arith.constant 0 : i32
    return %c0_i32, %c0_i32_0 : i32, i32
  }
  func.func @transform_3(%arg0: i32, %arg1: i32) -> (i32, i32) {
    %c0_i32 = arith.constant 0 : i32
    %c0_i32_0 = arith.constant 0 : i32
    return %arg0, %c0_i32 : i32, i32
  }
  func.func @transform_4(%arg0: i32, %arg1: i32) -> (i32, i32) {
    %c0_i32 = arith.constant 0 : i32
    %c0_i32_0 = arith.constant 0 : i32
    %c0_i32_1 = arith.constant 0 : i32
    return %c0_i32, %c0_i32_0 : i32, i32
  }
  func.func @transform_5(%arg0: i32, %arg1: i32) -> (i32, i32) {
    %c0_i32 = arith.constant 0 : i32
    %c0_i32_0 = arith.constant 0 : i32
    %c0_i32_1 = arith.constant 0 : i32
    return %c0_i32, %c0_i32_0 : i32, i32
  }
  func.func @transform_6(%arg0: i32, %arg1: i32) -> (i32, i32) {
    %c0_i32 = arith.constant 0 : i32
    %c0_i32_0 = arith.constant 0 : i32
    return %arg0, %c0_i32 : i32, i32
  }
}

</mosaic_0001>

<llo_original>
// kernel: bert_base_cased_forward.11
$region0: #{bert_base_cased_forward.11}
  #allocation0 [shape = 'u32[]', space=smem, size = 0x4, offset = 0x4, fixed_abs, tag = 'smem constant byte address 0x4 - core index']
  #allocation1 [shape = 'u32[144,128]{1,0:T(1,128)}', space=vmem, size = 0x12000, scoped, tag = 'internal scratch']
  %s0 = inlined_call_operand.vmem [shape: bf16[32,128], index: 0, kind: input, shape index: {}]
  %s1 = inlined_call_operand.vmem [shape: f32[1,128], index: 1, kind: input, shape index: {}]
  %s2 = inlined_call_operand.vmem [shape: f32[1,128], index: 2, kind: input, shape index: {}]
  %s3 = inlined_call_operand.vmem [shape: bf16[32,128], index: 3, kind: output, shape index: {}]
  %s4 = sld [smem:[#allocation0]]
  $region22: #{bert_base_cased_forward.11} parent=0
    _
  %s6 = ssub.s32 1, %s4
  %s7 = scalar_select 0, %s6, %s4
  // Predicated region
  $region2: #{bert_base_cased_forward.11} parent=0 // pred_check
    _
  $region3: #{bert_base_cased_forward.11} parent=0 // pred_check_branch
    %9 = sbr.rel (0) target = $region5
  $region4: #{bert_base_cased_forward.11} parent=0 // pred_region
    _
  $region5: #{bert_base_cased_forward.11} parent=0 // pred_fallthru
    _
  // Predicated region
  $region6: #{bert_base_cased_forward.11} parent=0 // pred_check
    _
  $region7: #{bert_base_cased_forward.11} parent=0 // pred_check_branch
    %11 = sbr.rel (0) target = $region9
  $region8: #{bert_base_cased_forward.11} parent=0 // pred_region
    _
  $region9: #{bert_base_cased_forward.11} parent=0 // pred_fallthru
    _
  // Predicated region
  $region10: #{bert_base_cased_forward.11} parent=0 // pred_check
    _
  $region11: #{bert_base_cased_forward.11} parent=0 // pred_check_branch
    %13 = sbr.rel (0) target = $region13
  $region12: #{bert_base_cased_forward.11} parent=0 // pred_region
    _
  $region13: #{bert_base_cased_forward.11} parent=0 // pred_fallthru
    _
  %v14 = vld [vmem:[%s0] sm:$0xf]
  %v15 = vld [vmem:[%s0 + $0x4] sm:$0xf]
  %v16 = vld [vmem:[%s0 + $0x8] sm:$0xf]
  %v17 = vld [vmem:[%s0 + $0xc] sm:$0xf]
  %v18 = vunpack.c.l.bf16 %v14
  %v19 = vunpack.c.l.bf16 %v15
  %v20 = vunpack.c.l.bf16 %v16
  %v21 = vunpack.c.l.bf16 %v17
  %22 = vadd.xlane.f32.xlu0 %v18
  %v23 = vpop.xlane.xlu0 %22
  %24 = vadd.xlane.f32.xlu0 %v19
  %v25 = vpop.xlane.xlu0 %24
  %26 = vadd.xlane.f32.xlu0 %v20
  %v27 = vpop.xlane.xlu0 %26
  %28 = vadd.xlane.f32.xlu0 %v21
  %v29 = vpop.xlane.xlu0 %28
  %v30 = vrcp.pop 128.0
  %v31 = vmul.f32 %v23, %v30
  %v32 = vmul.f32 %v25, %v30
  %v33 = vmul.f32 %v27, %v30
  %v34 = vmul.f32 %v29, %v30
  %v35 = vsub.f32 %v18, %v31
  %v36 = vsub.f32 %v19, %v32
  %v37 = vsub.f32 %v20, %v33
  %v38 = vsub.f32 %v21, %v34
  %v39 = vmul.f32 %v35, %v35
  %v40 = vmul.f32 %v36, %v36
  %v41 = vmul.f32 %v37, %v37
  %v42 = vmul.f32 %v38, %v38
  %43 = vadd.xlane.f32.xlu0 %v39
  %v44 = vpop.xlane.xlu0 %43
  %45 = vadd.xlane.f32.xlu0 %v40
  %v46 = vpop.xlane.xlu0 %45
  %47 = vadd.xlane.f32.xlu0 %v41
  %v48 = vpop.xlane.xlu0 %47
  %49 = vadd.xlane.f32.xlu0 %v42
  %v50 = vpop.xlane.xlu0 %49
  %v51 = vmul.f32 %v44, %v30
  %v52 = vmul.f32 %v46, %v30
  %v53 = vmul.f32 %v48, %v30
  %v54 = vmul.f32 %v50, %v30
  %v55 = vadd.f32 %v51, 1e-12
  %v56 = vadd.f32 %v52, 1e-12
  %v57 = vadd.f32 %v53, 1e-12
  %v58 = vadd.f32 %v54, 1e-12
  %v59 = vrsqrt.pop %v55
  %v60 = vrsqrt.pop %v56
  %v61 = vrsqrt.pop %v57
  %v62 = vrsqrt.pop %v58
  %v63 = vmul.f32 %v35, %v59
  %v64 = vmul.f32 %v36, %v60
  %v65 = vmul.f32 %v37, %v61
  %v66 = vmul.f32 %v38, %v62
  %v67 = vld [vmem:[%s1] sm:$0x1]
  %v69 = vlaneseq
  %v70 = vshrl.u32 %v69, 7
  %v71 = vsub.s32 0, %v70
  %v72 = vrot.slane %v67, %v71
  %v74 = vmul.f32 %v63, %v72
  %v75 = vmul.f32 %v64, %v72
  %v76 = vmul.f32 %v65, %v72
  %v77 = vmul.f32 %v66, %v72
  %v78 = vld [vmem:[%s2] sm:$0x1]
  %v80 = vlaneseq
  %v81 = vshrl.u32 %v80, 7
  %v82 = vsub.s32 0, %v81
  %v83 = vrot.slane %v78, %v82
  %v85 = vadd.f32 %v74, %v83
  %v86 = vadd.f32 %v75, %v83
  %v87 = vadd.f32 %v76, %v83
  %v88 = vadd.f32 %v77, %v83
  %v89 = vpack.c.bf16 %v86, %v85
  %v90 = vpack.c.bf16 %v88, %v87
  %v93 = vunpack.c.l.b16 %v89
  %v94 = vunpack.c.h.b16 %v89
  %v95 = vunpack.c.l.b16 %v90
  %v96 = vunpack.c.h.b16 %v90
  %v97 = vpack.c.b16 %v93, %v93
  %v98 = vpack.c.b16 %v94, %v94
  %v99 = vpack.c.b16 %v95, %v95
  %v100 = vpack.c.b16 %v96, %v96
  %105 = vst [vmem:[%s3] sm:$0xf] %v97
  %106 = vst [vmem:[%s3 + $0x4] sm:$0xf] %v98
  %107 = vst [vmem:[%s3 + $0x8] sm:$0xf] %v99
  %108 = vst [vmem:[%s3 + $0xc] sm:$0xf] %v100
  // Predicated region
  $region14: #{bert_base_cased_forward.11} parent=0 // pred_check
    _
  $region15: #{bert_base_cased_forward.11} parent=0 // pred_check_branch
    %110 = sbr.rel (0) target = $region17
  $region16: #{bert_base_cased_forward.11} parent=0 // pred_region
    _
  $region17: #{bert_base_cased_forward.11} parent=0 // pred_fallthru
    _
  // Predicated region
  $region18: #{bert_base_cased_forward.11} parent=0 // pred_check
    _
  $region19: #{bert_base_cased_forward.11} parent=0 // pred_check_branch
    %112 = sbr.rel (0) target = $region21
  $region20: #{bert_base_cased_forward.11} parent=0 // pred_region
    _
  $region21: #{bert_base_cased_forward.11} parent=0 // pred_fallthru
    _

// kernel: bert_base_cased_forward.14
$region0: #{bert_base_cased_forward.14}
  #allocation0 [shape = 'u32[]', space=smem, size = 0x4, offset = 0x4, fixed_abs, tag = 'smem constant byte address 0x4 - core index']
  #allocation1 [shape = 'u32[144,128]{1,0:T(1,128)}', space=vmem, size = 0x12000, scoped, tag = 'internal scratch']
  #allocation2 [shape = 'f32[32,128]{1,0:T(8,128)}', space=vmem, size = 0x4000, scoped, tag = 'scratch operand']
  %s0 = inlined_call_operand.vmem [shape: bf16[32,128], index: 0, kind: input, shape index: {}]
  %s1 = inlined_call_operand.vmem [shape: bf16[128,128], index: 1, kind: input, shape index: {}]
  %s2 = inlined_call_operand.vmem [shape: f32[1,128], index: 2, kind: input, shape index: {}]
  %s3 = inlined_call_operand.vmem [shape: bf16[32,128], index: 3, kind: input, shape index: {}]
  %s4 = inlined_call_operand.vmem [shape: f32[1,128], index: 4, kind: input, shape index: {}]
  %s5 = inlined_call_operand.vmem [shape: f32[1,128], index: 5, kind: input, shape index: {}]
  %s6 = inlined_call_operand.vmem [shape: bf16[32,128], index: 6, kind: output, shape index: {}]
  %s7 = sld [smem:[#allocation0]]
  $region42: #{bert_base_cased_forward.14} parent=0
    _
  %s9 = ssub.s32 1, %s7
  %s10 = scalar_select 0, %s9, %s7
  // Predicated region
  $region2: #{bert_base_cased_forward.14} parent=0 // pred_check
    _
  $region3: #{bert_base_cased_forward.14} parent=0 // pred_check_branch
    %12 = sbr.rel (0) target = $region5
  $region4: #{bert_base_cased_forward.14} parent=0 // pred_region
    _
  $region5: #{bert_base_cased_forward.14} parent=0 // pred_fallthru
    _
  // Predicated region
  $region6: #{bert_base_cased_forward.14} parent=0 // pred_check
    _
  $region7: #{bert_base_cased_forward.14} parent=0 // pred_check_branch
    %14 = sbr.rel (0) target = $region9
  $region8: #{bert_base_cased_forward.14} parent=0 // pred_region
    _
  $region9: #{bert_base_cased_forward.14} parent=0 // pred_fallthru
    _
  // Predicated region
  $region10: #{bert_base_cased_forward.14} parent=0 // pred_check
    _
  $region11: #{bert_base_cased_forward.14} parent=0 // pred_check_branch
    %16 = sbr.rel (0) target = $region13
  $region12: #{bert_base_cased_forward.14} parent=0 // pred_region
    _
  $region13: #{bert_base_cased_forward.14} parent=0 // pred_fallthru
    _
  // Predicated region
  $region14: #{bert_base_cased_forward.14} parent=0 // pred_check
    _
  $region15: #{bert_base_cased_forward.14} parent=0 // pred_check_branch
    %18 = sbr.rel (0) target = $region17
  $region16: #{bert_base_cased_forward.14} parent=0 // pred_region
    _
  $region17: #{bert_base_cased_forward.14} parent=0 // pred_fallthru
    _
  // Predicated region
  $region18: #{bert_base_cased_forward.14} parent=0 // pred_check
    _
  $region19: #{bert_base_cased_forward.14} parent=0 // pred_check_branch
    %20 = sbr.rel (0) target = $region21
  $region20: #{bert_base_cased_forward.14} parent=0 // pred_region
    _
  $region21: #{bert_base_cased_forward.14} parent=0 // pred_fallthru
    _
  // Predicated region
  $region22: #{bert_base_cased_forward.14} parent=0 // pred_check
    _
  $region23: #{bert_base_cased_forward.14} parent=0 // pred_check_branch
    %22 = sbr.rel (0) target = $region25
  $region24: #{bert_base_cased_forward.14} parent=0 // pred_region
    _
  $region25: #{bert_base_cased_forward.14} parent=0 // pred_fallthru
    _
  %p24 = scmp.eq.s32.totalorder 0, 0
  // Predicated region
  $region26: #{bert_base_cased_forward.14} parent=0 // pred_check
    %p25 = pneg %p24
  $region27: #{bert_base_cased_forward.14} parent=0 // pred_check_branch
    %27 = sbr.rel (%p25) target = $region29
  $region28: #{bert_base_cased_forward.14} parent=0 // pred_region
    %28 = vst [vmem:[#allocation2] sm:$0xff] 0.0
    %29 = vst [vmem:[#allocation2 + $0x8] sm:$0xff] 0.0
    %30 = vst [vmem:[#allocation2 + $0x10] sm:$0xff] 0.0
    %31 = vst [vmem:[#allocation2 + $0x18] sm:$0xff] 0.0
  $region29: #{bert_base_cased_forward.14} parent=0 // pred_fallthru
    _
  %v32 = vld [vmem:[#allocation2] sm:$0xff]
  %v33 = vld [vmem:[#allocation2 + $0x8] sm:$0xff]
  %v34 = vld [vmem:[#allocation2 + $0x10] sm:$0xff]
  %v35 = vld [vmem:[#allocation2 + $0x18] sm:$0xff]
  %v36 = vld [vmem:[%s0] sm:$0xf]
  %v37 = vld [vmem:[%s0 + $0x4] sm:$0xf]
  %v38 = vld [vmem:[%s0 + $0x8] sm:$0xf]
  %v39 = vld [vmem:[%s0 + $0xc] sm:$0xf]
  %v40 = vld [vmem:[%s1] sm:$0xf]
  %v41 = vld [vmem:[%s1 + $0x4] sm:$0xf]
  %v42 = vld [vmem:[%s1 + $0x8] sm:$0xf]
  %v43 = vld [vmem:[%s1 + $0xc] sm:$0xf]
  %v44 = vld [vmem:[%s1 + $0x10] sm:$0xf]
  %v45 = vld [vmem:[%s1 + $0x14] sm:$0xf]
  %v46 = vld [vmem:[%s1 + $0x18] sm:$0xf]
  %v47 = vld [vmem:[%s1 + $0x1c] sm:$0xf]
  %v48 = vld [vmem:[%s1 + $0x20] sm:$0xf]
  %v49 = vld [vmem:[%s1 + $0x24] sm:$0xf]
  %v50 = vld [vmem:[%s1 + $0x28] sm:$0xf]
  %v51 = vld [vmem:[%s1 + $0x2c] sm:$0xf]
  %v52 = vld [vmem:[%s1 + $0x30] sm:$0xf]
  %v53 = vld [vmem:[%s1 + $0x34] sm:$0xf]
  %v54 = vld [vmem:[%s1 + $0x38] sm:$0xf]
  %v55 = vld [vmem:[%s1 + $0x3c] sm:$0xf]
  %v60 = vunpack.c.l.b16 %v36
  %v61 = vunpack.c.l.b16 %v37
  %v62 = vunpack.c.l.b16 %v38
  %v63 = vunpack.c.l.b16 %v39
  %v64 = vpack.c.b16 %v61, %v60
  %v65 = vpack.c.b16 %v63, %v62
  %v84 = vunpack.c.l.b16 %v40
  %v85 = vunpack.c.l.b16 %v41
  %v86 = vunpack.c.l.b16 %v42
  %v87 = vunpack.c.l.b16 %v43
  %v88 = vunpack.c.l.b16 %v44
  %v89 = vunpack.c.l.b16 %v45
  %v90 = vunpack.c.l.b16 %v46
  %v91 = vunpack.c.l.b16 %v47
  %v92 = vunpack.c.l.b16 %v48
  %v93 = vunpack.c.l.b16 %v49
  %v94 = vunpack.c.l.b16 %v50
  %v95 = vunpack.c.l.b16 %v51
  %v96 = vunpack.c.l.b16 %v52
  %v97 = vunpack.c.l.b16 %v53
  %v98 = vunpack.c.l.b16 %v54
  %v99 = vunpack.c.l.b16 %v55
  %v100 = vpack.c.b16 %v85, %v84
  %v101 = vpack.c.b16 %v87, %v86
  %v102 = vpack.c.b16 %v89, %v88
  %v103 = vpack.c.b16 %v91, %v90
  %v104 = vpack.c.b16 %v93, %v92
  %v105 = vpack.c.b16 %v95, %v94
  %v106 = vpack.c.b16 %v97, %v96
  %v107 = vpack.c.b16 %v99, %v98
  %116 = vmatprep.subr.bf16.mxu0 0
  %117 = vmatpush1.bf16.msra.mxu0 %v100
  %118 = vmatprep.subr.bf16.mxu0 0
  %119 = vmatpush1.bf16.msra.mxu0 %v101
  %120 = vmatprep.subr.bf16.mxu0 0
  %121 = vmatpush1.bf16.msra.mxu0 %v102
  %122 = vmatprep.subr.bf16.mxu0 0
  %123 = vmatpush1.bf16.msra.mxu0 %v103
  %124 = vmatprep.subr.bf16.mxu0 0
  %125 = vmatpush1.bf16.msra.mxu0 %v104
  %126 = vmatprep.subr.bf16.mxu0 0
  %127 = vmatpush1.bf16.msra.mxu0 %v105
  %128 = vmatprep.subr.bf16.mxu0 0
  %129 = vmatpush1.bf16.msra.mxu0 %v106
  %130 = vmatprep.subr.bf16.mxu0 0
  %131 = vmatpush1.bf16.msra.mxu0 %v107
  %132 = vmatprep.subr.bf16.mxu0 0
  %133 = vmatpush1.bf16.msra.mxu0 0
  %134 = vmatprep.subr.bf16.mxu0 0
  %135 = vmatpush1.bf16.msra.mxu0 0
  %136 = vmatprep.subr.bf16.mxu0 0
  %137 = vmatpush1.bf16.msra.mxu0 0
  %138 = vmatprep.subr.bf16.mxu0 0
  %139 = vmatpush1.bf16.msra.mxu0 0
  %140 = vmatprep.subr.bf16.mxu0 0
  %141 = vmatpush1.bf16.msra.mxu0 0
  %142 = vmatprep.subr.bf16.mxu0 0
  %143 = vmatpush1.bf16.msra.mxu0 0
  %144 = vmatprep.subr.bf16.mxu0 0
  %145 = vmatpush1.bf16.msra.mxu0 0
  %146 = vmatprep.subr.bf16.mxu0 0
  %147 = vmatpush1.bf16.msra.mxu0 0
  %148 = vmatprep.mubr.bf16.mxu0 0
  %149 = vmatmul.mubr.bf16.gmra.mrb[0].mxu0 %v64
  %v150 = vpop.f32.mrb[0].mxu0
  %v151 = vadd.f32 0.0, %v150
  %v152 = vpop.f32.mrb[0].mxu0
  %v153 = vpop.f32.mrb[0].mxu0
  %v154 = vadd.f32 0.0, %v153
  %v155 = vpop.f32.mrb[0].mxu0
  %156 = vmatprep.mubr.bf16.mxu0 0
  %157 = vmatmul.mubr.bf16.gmra.mrb[0].mxu0 %v65
  %v158 = vpop.f32.mrb[0].mxu0
  %v159 = vadd.f32 0.0, %v158
  %v160 = vpop.f32.mrb[0].mxu0
  %v161 = vpop.f32.mrb[0].mxu0
  %v162 = vadd.f32 0.0, %v161
  %v163 = vpop.f32.mrb[0].mxu0
  %164 = vdwg.mxu0
  %v165 = vadd.f32 %v32, %v151
  %v166 = vadd.f32 %v33, %v154
  %v167 = vadd.f32 %v34, %v159
  %v168 = vadd.f32 %v35, %v162
  %169 = vst [vmem:[#allocation2] sm:$0xff] %v165
  %170 = vst [vmem:[#allocation2 + $0x8] sm:$0xff] %v166
  %171 = vst [vmem:[#allocation2 + $0x10] sm:$0xff] %v167
  %172 = vst [vmem:[#allocation2 + $0x18] sm:$0xff] %v168
  // Predicated region
  $region30: #{bert_base_cased_forward.14} parent=0 // pred_check
    %p173 = pneg %p24
  $region31: #{bert_base_cased_forward.14} parent=0 // pred_check_branch
    %175 = sbr.rel (%p173) target = $region33
  $region32: #{bert_base_cased_forward.14} parent=0 // pred_region
    %v176 = vld [vmem:[#allocation2] sm:$0xff]
    %v177 = vld [vmem:[#allocation2 + $0x8] sm:$0xff]
    %v178 = vld [vmem:[#allocation2 + $0x10] sm:$0xff]
    %v179 = vld [vmem:[#allocation2 + $0x18] sm:$0xff]
    %v180 = vld [vmem:[%s2] sm:$0x1]
    %v182 = vlaneseq
    %v183 = vshrl.u32 %v182, 7
    %v184 = vsub.s32 0, %v183
    %v185 = vrot.slane %v180, %v184
    %v187 = vadd.f32 %v176, %v185
    %v188 = vadd.f32 %v177, %v185
    %v189 = vadd.f32 %v178, %v185
    %v190 = vadd.f32 %v179, %v185
    %v191 = vld [vmem:[%s3] sm:$0xf]
    %v192 = vld [vmem:[%s3 + $0x4] sm:$0xf]
    %v193 = vld [vmem:[%s3 + $0x8] sm:$0xf]
    %v194 = vld [vmem:[%s3 + $0xc] sm:$0xf]
    %v195 = vunpack.c.l.bf16 %v191
    %v196 = vunpack.c.l.bf16 %v192
    %v197 = vunpack.c.l.bf16 %v193
    %v198 = vunpack.c.l.bf16 %v194
    %v199 = vadd.f32 %v187, %v195
    %v200 = vadd.f32 %v188, %v196
    %v201 = vadd.f32 %v189, %v197
    %v202 = vadd.f32 %v190, %v198
    %203 = vadd.xlane.f32.xlu0 %v199
    %v204 = vpop.xlane.xlu0 %203
    %205 = vadd.xlane.f32.xlu0 %v200
    %v206 = vpop.xlane.xlu0 %205
    %207 = vadd.xlane.f32.xlu0 %v201
    %v208 = vpop.xlane.xlu0 %207
    %209 = vadd.xlane.f32.xlu0 %v202
    %v210 = vpop.xlane.xlu0 %209
    %v211 = vrcp.pop 128.0
    %v212 = vmul.f32 %v204, %v211
    %v213 = vmul.f32 %v206, %v211
    %v214 = vmul.f32 %v208, %v211
    %v215 = vmul.f32 %v210, %v211
    %v216 = vsub.f32 %v199, %v212
    %v217 = vsub.f32 %v200, %v213
    %v218 = vsub.f32 %v201, %v214
    %v219 = vsub.f32 %v202, %v215
    %v220 = vmul.f32 %v216, %v216
    %v221 = vmul.f32 %v217, %v217
    %v222 = vmul.f32 %v218, %v218
    %v223 = vmul.f32 %v219, %v219
    %224 = vadd.xlane.f32.xlu0 %v220
    %v225 = vpop.xlane.xlu0 %224
    %226 = vadd.xlane.f32.xlu0 %v221
    %v227 = vpop.xlane.xlu0 %226
    %228 = vadd.xlane.f32.xlu0 %v222
    %v229 = vpop.xlane.xlu0 %228
    %230 = vadd.xlane.f32.xlu0 %v223
    %v231 = vpop.xlane.xlu0 %230
    %v232 = vmul.f32 %v225, %v211
    %v233 = vmul.f32 %v227, %v211
    %v234 = vmul.f32 %v229, %v211
    %v235 = vmul.f32 %v231, %v211
    %v236 = vadd.f32 %v232, 1e-12
    %v237 = vadd.f32 %v233, 1e-12
    %v238 = vadd.f32 %v234, 1e-12
    %v239 = vadd.f32 %v235, 1e-12
    %v240 = vrsqrt.pop %v236
    %v241 = vrsqrt.pop %v237
    %v242 = vrsqrt.pop %v238
    %v243 = vrsqrt.pop %v239
    %v244 = vmul.f32 %v216, %v240
    %v245 = vmul.f32 %v217, %v241
    %v246 = vmul.f32 %v218, %v242
    %v247 = vmul.f32 %v219, %v243
    %v248 = vld [vmem:[%s4] sm:$0x1]
    %v250 = vlaneseq
    %v251 = vshrl.u32 %v250, 7
    %v252 = vsub.s32 0, %v251
    %v253 = vrot.slane %v248, %v252
    %v255 = vmul.f32 %v244, %v253
    %v256 = vmul.f32 %v245, %v253
    %v257 = vmul.f32 %v246, %v253
    %v258 = vmul.f32 %v247, %v253
    %v259 = vld [vmem:[%s5] sm:$0x1]
    %v261 = vlaneseq
    %v262 = vshrl.u32 %v261, 7
    %v263 = vsub.s32 0, %v262
    %v264 = vrot.slane %v259, %v263
    %v266 = vadd.f32 %v255, %v264
    %v267 = vadd.f32 %v256, %v264
    %v268 = vadd.f32 %v257, %v264
    %v269 = vadd.f32 %v258, %v264
    %v270 = vpack.c.bf16 %v267, %v266
    %v271 = vpack.c.bf16 %v269, %v268
    %v274 = vunpack.c.l.b16 %v270
    %v275 = vunpack.c.h.b16 %v270
    %v276 = vunpack.c.l.b16 %v271
    %v277 = vunpack.c.h.b16 %v271
    %v278 = vpack.c.b16 %v274, %v274
    %v279 = vpack.c.b16 %v275, %v275
    %v280 = vpack.c.b16 %v276, %v276
    %v281 = vpack.c.b16 %v277, %v277
    %286 = vst [vmem:[%s6] sm:$0xf] %v278
    %287 = vst [vmem:[%s6 + $0x4] sm:$0xf] %v279
    %288 = vst [vmem:[%s6 + $0x8] sm:$0xf] %v280
    %289 = vst [vmem:[%s6 + $0xc] sm:$0xf] %v281
  $region33: #{bert_base_cased_forward.14} parent=0 // pred_fallthru
    _
  // Predicated region
  $region34: #{bert_base_cased_forward.14} parent=0 // pred_check
    _
  $region35: #{bert_base_cased_forward.14} parent=0 // pred_check_branch
    %291 = sbr.rel (0) target = $region37
  $region36: #{bert_base_cased_forward.14} parent=0 // pred_region
    _
  $region37: #{bert_base_cased_forward.14} parent=0 // pred_fallthru
    _
  // Predicated region
  $region38: #{bert_base_cased_forward.14} parent=0 // pred_check
    _
  $region39: #{bert_base_cased_forward.14} parent=0 // pred_check_branch
    %293 = sbr.rel (0) target = $region41
  $region40: #{bert_base_cased_forward.14} parent=0 // pred_region
    _
  $region41: #{bert_base_cased_forward.14} parent=0 // pred_fallthru
    _

// kernel: bert_base_cased_forward.13
$region0: #{bert_base_cased_forward.13}
  #allocation0 [shape = 'u32[]', space=smem, size = 0x4, offset = 0x4, fixed_abs, tag = 'smem constant byte address 0x4 - core index']
  #allocation1 [shape = 'u32[144,128]{1,0:T(1,128)}', space=vmem, size = 0x12000, scoped, tag = 'internal scratch']
  %s0 = inlined_call_operand.vmem [shape: bf16[2,16,384], index: 0, kind: input, shape index: {}, may-alias: {0,1,2}]
  %s1 = inlined_call_operand.vmem [shape: bf16[2,16,384], index: 1, kind: input, shape index: {}, may-alias: {0,1,2}]
  %s2 = inlined_call_operand.vmem [shape: bf16[2,16,384], index: 2, kind: input, shape index: {}, may-alias: {0,1,2}]
  %s3 = inlined_call_operand.vmem [shape: f32[2,1,16], index: 3, kind: input, shape index: {}]
  %s4 = inlined_call_operand.vmem [shape: bf16[2,16,128], index: 4, kind: output, shape index: {}]
  %s5 = sld [smem:[#allocation0]]
  $region172: #{bert_base_cased_forward.13} parent=0
    _
  %s7 = ssub.s32 1, %s5
  %s8 = scalar_select 0, %s7, %s5
  $region1: #{bert_base_cased_forward.13} parent=0
    #allocation2 [shape = 'u8[8192]{0}', space=vmem, size = 0x2000, scoped, tag = 'input window, operand 0']
    #allocation3 [shape = 'u8[8192]{0}', space=vmem, size = 0x2000, scoped, tag = 'input window, operand 1']
    #allocation4 [shape = 'u8[8192]{0}', space=vmem, size = 0x2000, scoped, tag = 'input window, operand 2']
    loop: start=0, step=1, limit=4
    $region2: #{bert_base_cased_forward.13} parent=1 // loop_pre_header
      _
    $region3: #{bert_base_cased_forward.13} parent=1 // loop_header
      %s10 = sphi 0, %s14
      %p11 = scmp.ge.s32.totalorder %s10, 4
      %s17 = sphi 0, %s29
      %s18 = sphi 0, %s25
      %s19 = sphi 0, %s17
      %s20 = sphi 0, %s18
      %s21 = sphi 0, %s19
      %s22 = sphi 0, %s20
      %s34 = sphi 0, %s36
      %s37 = sphi 0, %s34
      %s38 = sphi 0, %s37
      %s54 = sphi 0, %s38
      %s64 = sphi 0, %s66
      %s67 = sphi 0, %s64
      %s68 = sphi 0, %s67
      %s84 = sphi 0, %s68
      %s94 = sphi 0, %s96
      %s97 = sphi 0, %s94
      %s98 = sphi 0, %s97
      %s114 = sphi 0, %s98
      %s120 = sphi 0, %s122
      %s123 = sphi 0, %s120
      %s124 = sphi 0, %s123
      %s140 = sphi 0, %s124
      %s148 = sphi 0, %s150
      %s151 = sphi 0, %s148
      %s152 = sphi 0, %s151
      %s168 = sphi 0, %s152
    $region4: #{bert_base_cased_forward.13} parent=1 // loop_header_branch
      %13 = sbr.rel (%p11) target = $region8
    $region5: #{bert_base_cased_forward.13} parent=1 // loop_body
      %s15 = ssub.s32 %s10, 1
      %s16 = ssub.s32 %s10, 2
      %s23 = sadd.s32 1, %s18
      %p24 = scmp.ge.s32.totalorder %s23, 1
      %s25 = scalar_select %p24, 0, %s23
      %s26 = sadd.s32 1, %s17
      %s27 = scalar_select %p24, %s26, %s17
      %p28 = scmp.ge.s32.totalorder %s27, 2
      %s29 = scalar_select %p28, 0, %s27
      %s30 = ssub.s32 %s17, %s29
      %s31 = ssub.s32 %s18, %s25
      %s32 = sor.u32 %s30, %s31
      %p33 = scmp.eq.s32.totalorder %s32, 0
      %s35 = sadd.s32 %s34, 1
      %s36 = scalar_select %p33, %s34, %s35
      %p39 = pneg %p33
      %p40 = scmp.eq.s32.totalorder %s10, 1
      %p41 = por %p39, %p40
      %p42 = scmp.ne.s32.totalorder %s34, %s37
      %p43 = scmp.eq.s32.totalorder %s10, 0
      %p44 = por %p42, %p43
      %p45 = scmp.ne.s32.totalorder %s34, %s37
      %p46 = scmp.eq.s32.totalorder %s15, 1
      %p47 = por %p45, %p46
      %p48 = scmp.ne.s32.totalorder %s37, %s38
      %p49 = scmp.eq.s32.totalorder %s15, 0
      %p50 = por %p48, %p49
      %p51 = scmp.ne.s32.totalorder %s37, %s38
      %p52 = scmp.eq.s32.totalorder %s16, 1
      %p53 = por %p51, %p52
      %p55 = scmp.ne.s32.totalorder %s38, %s54
      %p56 = scmp.eq.s32.totalorder %s16, 0
      %p57 = por %p55, %p56
      %s58 = sadd.s32 %s18, 1
      %s59 = sadd.s32 %s25, 1
      %s60 = ssub.s32 %s17, %s29
      %s61 = ssub.s32 %s58, %s59
      %s62 = sor.u32 %s60, %s61
      %p63 = scmp.eq.s32.totalorder %s62, 0
      %s65 = sadd.s32 %s64, 1
      %s66 = scalar_select %p63, %s64, %s65
      %p69 = pneg %p63
      %p70 = scmp.eq.s32.totalorder %s10, 1
      %p71 = por %p69, %p70
      %p72 = scmp.ne.s32.totalorder %s64, %s67
      %p73 = scmp.eq.s32.totalorder %s10, 0
      %p74 = por %p72, %p73
      %p75 = scmp.ne.s32.totalorder %s64, %s67
      %p76 = scmp.eq.s32.totalorder %s15, 1
      %p77 = por %p75, %p76
      %p78 = scmp.ne.s32.totalorder %s67, %s68
      %p79 = scmp.eq.s32.totalorder %s15, 0
      %p80 = por %p78, %p79
      %p81 = scmp.ne.s32.totalorder %s67, %s68
      %p82 = scmp.eq.s32.totalorder %s16, 1
      %p83 = por %p81, %p82
      %p85 = scmp.ne.s32.totalorder %s68, %s84
      %p86 = scmp.eq.s32.totalorder %s16, 0
      %p87 = por %p85, %p86
      %s88 = sadd.s32 %s18, 2
      %s89 = sadd.s32 %s25, 2
      %s90 = ssub.s32 %s17, %s29
      %s91 = ssub.s32 %s88, %s89
      %s92 = sor.u32 %s90, %s91
      %p93 = scmp.eq.s32.totalorder %s92, 0
      %s95 = sadd.s32 %s94, 1
      %s96 = scalar_select %p93, %s94, %s95
      %p99 = pneg %p93
      %p100 = scmp.eq.s32.totalorder %s10, 1
      %p101 = por %p99, %p100
      %p102 = scmp.ne.s32.totalorder %s94, %s97
      %p103 = scmp.eq.s32.totalorder %s10, 0
      %p104 = por %p102, %p103
      %p105 = scmp.ne.s32.totalorder %s94, %s97
      %p106 = scmp.eq.s32.totalorder %s15, 1
      %p107 = por %p105, %p106
      %p108 = scmp.ne.s32.totalorder %s97, %s98
      %p109 = scmp.eq.s32.totalorder %s15, 0
      %p110 = por %p108, %p109
      %p111 = scmp.ne.s32.totalorder %s97, %s98
      %p112 = scmp.eq.s32.totalorder %s16, 1
      %p113 = por %p111, %p112
      %p115 = scmp.ne.s32.totalorder %s98, %s114
      %p116 = scmp.eq.s32.totalorder %s16, 0
      %p117 = por %p115, %p116
      %s118 = ssub.s32 %s17, %s29
      %p119 = scmp.eq.s32.totalorder %s118, 0
      %s121 = sadd.s32 %s120, 1
      %s122 = scalar_select %p119, %s120, %s121
      %p125 = pneg %p119
      %p126 = scmp.eq.s32.totalorder %s10, 1
      %p127 = por %p125, %p126
      %p128 = scmp.ne.s32.totalorder %s120, %s123
      %p129 = scmp.eq.s32.totalorder %s10, 0
      %p130 = por %p128, %p129
      %p131 = scmp.ne.s32.totalorder %s120, %s123
      %p132 = scmp.eq.s32.totalorder %s15, 1
      %p133 = por %p131, %p132
      %p134 = scmp.ne.s32.totalorder %s123, %s124
      %p135 = scmp.eq.s32.totalorder %s15, 0
      %p136 = por %p134, %p135
      %p137 = scmp.ne.s32.totalorder %s123, %s124
      %p138 = scmp.eq.s32.totalorder %s16, 1
      %p139 = por %p137, %p138
      %p141 = scmp.ne.s32.totalorder %s124, %s140
      %p142 = scmp.eq.s32.totalorder %s16, 0
      %p143 = por %p141, %p142
      %s144 = ssub.s32 %s17, %s29
      %s145 = ssub.s32 %s18, %s25
      %s146 = sor.u32 %s144, %s145
      %p147 = scmp.eq.s32.totalorder %s146, 0
      %s149 = sadd.s32 %s148, 1
      %s150 = scalar_select %p147, %s148, %s149
      %p153 = pneg %p147
      %p154 = scmp.eq.s32.totalorder %s10, 1
      %p155 = por %p153, %p154
      %p156 = scmp.ne.s32.totalorder %s148, %s151
      %p157 = scmp.eq.s32.totalorder %s10, 0
      %p158 = por %p156, %p157
      %p159 = scmp.ne.s32.totalorder %s148, %s151
      %p160 = scmp.eq.s32.totalorder %s15, 1
      %p161 = por %p159, %p160
      %p162 = scmp.ne.s32.totalorder %s151, %s152
      %p163 = scmp.eq.s32.totalorder %s15, 0
      %p164 = por %p162, %p163
      %p165 = scmp.ne.s32.totalorder %s151, %s152
      %p166 = scmp.eq.s32.totalorder %s16, 1
      %p167 = por %p165, %p166
      %p169 = scmp.ne.s32.totalorder %s152, %s168
      %p170 = scmp.eq.s32.totalorder %s16, 0
      %p171 = por %p169, %p170
      %p172 = scmp.le.s32.totalorder 1, %s10
      %p173 = scmp.lt.s32.totalorder %s10, 3
      %p174 = pnand %p172, %p173
      %p175 = pneg %p174
      // Predicated region
      $region9: #{bert_base_cased_forward.13} parent=5 // pred_check
        _
      $region10: #{bert_base_cased_forward.13} parent=5 // pred_check_branch
        %177 = sbr.rel (%p174) target = $region12
      $region11: #{bert_base_cased_forward.13} parent=5 // pred_region
        %s178 = ssub.s32 %s10, 1
      $region12: #{bert_base_cased_forward.13} parent=5 // pred_fallthru
        _
      %p179 = scmp.lt.s32.totalorder %s10, 2
      // Predicated region
      $region13: #{bert_base_cased_forward.13} parent=5 // pred_check
        %p180 = pneg %p179
      $region14: #{bert_base_cased_forward.13} parent=5 // pred_check_branch
        %182 = sbr.rel (%p180) target = $region16
      $region15: #{bert_base_cased_forward.13} parent=5 // pred_region
        // Predicated region
        $region17: #{bert_base_cased_forward.13} parent=15 // pred_check
          %p183 = pneg %p44
        $region18: #{bert_base_cased_forward.13} parent=15 // pred_check_branch
          %185 = sbr.rel (%p183) target = $region20
        $region19: #{bert_base_cased_forward.13} parent=15 // pred_region
          %s186 = sand.u32 %s34, 1
          %s187 = sand.u32 %s34, 1
          %s188 = smul.addr %s187, 8
          %s189 = scalar_lea.vmem [#allocation2], %s188
          %s190 = smul.addr %s17, 6
          %s191 = sadd.s32 %s18, %s190
          %s192 = smul.addr %s191, 4
          %s193 = scalar_lea.vmem %s0, %s192
          // Predicated region
          $region21: #{bert_base_cased_forward.13} parent=19 // pred_check
            _
          $region22: #{bert_base_cased_forward.13} parent=19 // pred_check_branch
            %195 = sbr.rel (0) target = $region24
          $region23: #{bert_base_cased_forward.13} parent=19 // pred_region
            // Predicated region
            $region25: #{bert_base_cased_forward.13} parent=23 // pred_check
              _
            $region26: #{bert_base_cased_forward.13} parent=23 // pred_check_branch
              %197 = sbr.rel target = $region28
            $region27: #{bert_base_cased_forward.13} parent=23 // pred_region
              // Predicated region
              $region40: #{bert_base_cased_forward.13} parent=27 // pred_check
                _
              $region41: #{bert_base_cased_forward.13} parent=27 // pred_check_branch
                %214 = sbr.rel (0) target = $region43
              $region42: #{bert_base_cased_forward.13} parent=27 // pred_region
                loop: start=0, step=1, limit=1
                $region44: #{bert_base_cased_forward.13} parent=42 // loop_pre_header
                  _
                $region45: #{bert_base_cased_forward.13} parent=42 // loop_header
                  %s216 = sphi 0, %s220
                  %p217 = scmp.ge.s32.totalorder %s216, 1
                  %s221 = sphi %s193, %s193
                  %s222 = sphi %s189, %s189
                $region46: #{bert_base_cased_forward.13} parent=42 // loop_header_branch
                  %219 = sbr.rel (%p217) target = $region50
                $region47: #{bert_base_cased_forward.13} parent=42 // loop_body
                  _
                $region48: #{bert_base_cased_forward.13} parent=42 // loop_footer
                  %s220 = sadd.s32 1, %s216
                $region49: #{bert_base_cased_forward.13} parent=42 // loop_footer_branch
                  %215 = sbr.rel target = $region45
                $region50: #{bert_base_cased_forward.13} parent=42 // loop_exit
                  _
                loop: start=0, step=1, limit=1
                $region51: #{bert_base_cased_forward.13} parent=42 // loop_pre_header
                  _
                $region52: #{bert_base_cased_forward.13} parent=42 // loop_header
                  %s225 = sphi 0, %s229
                  %p226 = scmp.ge.s32.totalorder %s225, 1
                  %s230 = sphi %s193, %s193
                  %s231 = sphi %s189, %s189
                $region53: #{bert_base_cased_forward.13} parent=42 // loop_header_branch
                  %228 = sbr.rel (%p226) target = $region57
                $region54: #{bert_base_cased_forward.13} parent=42 // loop_body
                  %v232 = vld [vmem:[%s230] sm:$0xf]
                  %233 = vst [vmem:[%s231] sm:$0xf] %v232
                  %v234 = vld [vmem:[%s230 + $0xc] sm:$0xf]
                  %235 = vst [vmem:[%s231 + $0x4] sm:$0xf] %v234
                $region55: #{bert_base_cased_forward.13} parent=42 // loop_footer
                  %s229 = sadd.s32 1, %s225
                $region56: #{bert_base_cased_forward.13} parent=42 // loop_footer_branch
                  %224 = sbr.rel target = $region52
                $region57: #{bert_base_cased_forward.13} parent=42 // loop_exit
                  _
              $region43: #{bert_base_cased_forward.13} parent=27 // pred_fallthru
                _
            $region28: #{bert_base_cased_forward.13} parent=23 // pred_fallthru
              _
            // Predicated region
            $region29: #{bert_base_cased_forward.13} parent=23 // pred_check
              _
            $region30: #{bert_base_cased_forward.13} parent=23 // pred_check_branch
              %199 = sbr.rel (0) target = $region32
            $region31: #{bert_base_cased_forward.13} parent=23 // pred_region
              loop: start=0, step=1, limit=1
              $region33: #{bert_base_cased_forward.13} parent=31 // loop_pre_header
                _
              $region34: #{bert_base_cased_forward.13} parent=31 // loop_header
                %s202 = sphi 0, %s206
                %p203 = scmp.ge.s32.totalorder %s202, 1
                %s207 = sphi %s193, %s193
                %s208 = sphi %s189, %s189
              $region35: #{bert_base_cased_forward.13} parent=31 // loop_header_branch
                %205 = sbr.rel (%p203) target = $region39
              $region36: #{bert_base_cased_forward.13} parent=31 // loop_body
                %v209 = vld [vmem:[%s207] sm:$0xf]
                %210 = vst [vmem:[%s208] sm:$0xf] %v209
                %v211 = vld [vmem:[%s207 + $0xc] sm:$0xf]
                %212 = vst [vmem:[%s208 + $0x4] sm:$0xf] %v211
              $region37: #{bert_base_cased_forward.13} parent=31 // loop_footer
                %s206 = sadd.s32 1, %s202
              $region38: #{bert_base_cased_forward.13} parent=31 // loop_footer_branch
                %201 = sbr.rel target = $region34
              $region39: #{bert_base_cased_forward.13} parent=31 // loop_exit
                _
            $region32: #{bert_base_cased_forward.13} parent=23 // pred_fallthru
              _
          $region24: #{bert_base_cased_forward.13} parent=19 // pred_fallthru
            _
          %236 = vnop
        $region20: #{bert_base_cased_forward.13} parent=15 // pred_fallthru
          _
        // Predicated region
        $region58: #{bert_base_cased_forward.13} parent=15 // pred_check
          %p237 = pneg %p74
        $region59: #{bert_base_cased_forward.13} parent=15 // pred_check_branch
          %239 = sbr.rel (%p237) target = $region61
        $region60: #{bert_base_cased_forward.13} parent=15 // pred_region
          %s240 = sand.u32 %s64, 1
          %s241 = sand.u32 %s64, 1
          %s242 = smul.addr %s241, 8
          %s243 = scalar_lea.vmem [#allocation3], %s242
          %s244 = sadd.s32 %s18, 1
          %s245 = smul.addr %s17, 6
          %s246 = sadd.s32 %s244, %s245
          %s247 = smul.addr %s246, 4
          %s248 = scalar_lea.vmem %s1, %s247
          // Predicated region
          $region62: #{bert_base_cased_forward.13} parent=60 // pred_check
            _
          $region63: #{bert_base_cased_forward.13} parent=60 // pred_check_branch
            %250 = sbr.rel (0) target = $region65
          $region64: #{bert_base_cased_forward.13} parent=60 // pred_region
            // Predicated region
            $region66: #{bert_base_cased_forward.13} parent=64 // pred_check
              _
            $region67: #{bert_base_cased_forward.13} parent=64 // pred_check_branch
              %252 = sbr.rel target = $region69
            $region68: #{bert_base_cased_forward.13} parent=64 // pred_region
              // Predicated region
              $region81: #{bert_base_cased_forward.13} parent=68 // pred_check
                _
              $region82: #{bert_base_cased_forward.13} parent=68 // pred_check_branch
                %269 = sbr.rel (0) target = $region84
              $region83: #{bert_base_cased_forward.13} parent=68 // pred_region
                loop: start=0, step=1, limit=1
                $region85: #{bert_base_cased_forward.13} parent=83 // loop_pre_header
                  _
                $region86: #{bert_base_cased_forward.13} parent=83 // loop_header
                  %s271 = sphi 0, %s275
                  %p272 = scmp.ge.s32.totalorder %s271, 1
                  %s276 = sphi %s248, %s248
                  %s277 = sphi %s243, %s243
                $region87: #{bert_base_cased_forward.13} parent=83 // loop_header_branch
                  %274 = sbr.rel (%p272) target = $region91
                $region88: #{bert_base_cased_forward.13} parent=83 // loop_body
                  _
                $region89: #{bert_base_cased_forward.13} parent=83 // loop_footer
                  %s275 = sadd.s32 1, %s271
                $region90: #{bert_base_cased_forward.13} parent=83 // loop_footer_branch
                  %270 = sbr.rel target = $region86
                $region91: #{bert_base_cased_forward.13} parent=83 // loop_exit
                  _
                loop: start=0, step=1, limit=1
                $region92: #{bert_base_cased_forward.13} parent=83 // loop_pre_header
                  _
                $region93: #{bert_base_cased_forward.13} parent=83 // loop_header
                  %s280 = sphi 0, %s284
                  %p281 = scmp.ge.s32.totalorder %s280, 1
                  %s285 = sphi %s248, %s248
                  %s286 = sphi %s243, %s243
                $region94: #{bert_base_cased_forward.13} parent=83 // loop_header_branch
                  %283 = sbr.rel (%p281) target = $region98
                $region95: #{bert_base_cased_forward.13} parent=83 // loop_body
                  %v287 = vld [vmem:[%s285] sm:$0xf]
                  %288 = vst [vmem:[%s286] sm:$0xf] %v287
                  %v289 = vld [vmem:[%s285 + $0xc] sm:$0xf]
                  %290 = vst [vmem:[%s286 + $0x4] sm:$0xf] %v289
                $region96: #{bert_base_cased_forward.13} parent=83 // loop_footer
                  %s284 = sadd.s32 1, %s280
                $region97: #{bert_base_cased_forward.13} parent=83 // loop_footer_branch
                  %279 = sbr.rel target = $region93
                $region98: #{bert_base_cased_forward.13} parent=83 // loop_exit
                  _
              $region84: #{bert_base_cased_forward.13} parent=68 // pred_fallthru
                _
            $region69: #{bert_base_cased_forward.13} parent=64 // pred_fallthru
              _
            // Predicated region
            $region70: #{bert_base_cased_forward.13} parent=64 // pred_check
              _
            $region71: #{bert_base_cased_forward.13} parent=64 // pred_check_branch
              %254 = sbr.rel (0) target = $region73
            $region72: #{bert_base_cased_forward.13} parent=64 // pred_region
              loop: start=0, step=1, limit=1
              $region74: #{bert_base_cased_forward.13} parent=72 // loop_pre_header
                _
              $region75: #{bert_base_cased_forward.13} parent=72 // loop_header
                %s257 = sphi 0, %s261
                %p258 = scmp.ge.s32.totalorder %s257, 1
                %s262 = sphi %s248, %s248
                %s263 = sphi %s243, %s243
              $region76: #{bert_base_cased_forward.13} parent=72 // loop_header_branch
                %260 = sbr.rel (%p258) target = $region80
              $region77: #{bert_base_cased_forward.13} parent=72 // loop_body
                %v264 = vld [vmem:[%s262] sm:$0xf]
                %265 = vst [vmem:[%s263] sm:$0xf] %v264
                %v266 = vld [vmem:[%s262 + $0xc] sm:$0xf]
                %267 = vst [vmem:[%s263 + $0x4] sm:$0xf] %v266
              $region78: #{bert_base_cased_forward.13} parent=72 // loop_footer
                %s261 = sadd.s32 1, %s257
              $region79: #{bert_base_cased_forward.13} parent=72 // loop_footer_branch
                %256 = sbr.rel target = $region75
              $region80: #{bert_base_cased_forward.13} parent=72 // loop_exit
                _
            $region73: #{bert_base_cased_forward.13} parent=64 // pred_fallthru
              _
          $region65: #{bert_base_cased_forward.13} parent=60 // pred_fallthru
            _
          %291 = vnop
        $region61: #{bert_base_cased_forward.13} parent=15 // pred_fallthru
          _
        // Predicated region
        $region99: #{bert_base_cased_forward.13} parent=15 // pred_check
          %p292 = pneg %p104
        $region100: #{bert_base_cased_forward.13} parent=15 // pred_check_branch
          %294 = sbr.rel (%p292) target = $region102
        $region101: #{bert_base_cased_forward.13} parent=15 // pred_region
          %s295 = sand.u32 %s94, 1
          %s296 = sand.u32 %s94, 1
          %s297 = smul.addr %s296, 8
          %s298 = scalar_lea.vmem [#allocation4], %s297
          %s299 = sadd.s32 %s18, 2
          %s300 = smul.addr %s17, 6
          %s301 = sadd.s32 %s299, %s300
          %s302 = smul.addr %s301, 4
          %s303 = scalar_lea.vmem %s2, %s302
          // Predicated region
          $region103: #{bert_base_cased_forward.13} parent=101 // pred_check
            _
          $region104: #{bert_base_cased_forward.13} parent=101 // pred_check_branch
            %305 = sbr.rel (0) target = $region106
          $region105: #{bert_base_cased_forward.13} parent=101 // pred_region
            // Predicated region
            $region107: #{bert_base_cased_forward.13} parent=105 // pred_check
              _
            $region108: #{bert_base_cased_forward.13} parent=105 // pred_check_branch
              %307 = sbr.rel target = $region110
            $region109: #{bert_base_cased_forward.13} parent=105 // pred_region
              // Predicated region
              $region122: #{bert_base_cased_forward.13} parent=109 // pred_check
                _
              $region123: #{bert_base_cased_forward.13} parent=109 // pred_check_branch
                %324 = sbr.rel (0) target = $region125
              $region124: #{bert_base_cased_forward.13} parent=109 // pred_region
                loop: start=0, step=1, limit=1
                $region126: #{bert_base_cased_forward.13} parent=124 // loop_pre_header
                  _
                $region127: #{bert_base_cased_forward.13} parent=124 // loop_header
                  %s326 = sphi 0, %s330
                  %p327 = scmp.ge.s32.totalorder %s326, 1
                  %s331 = sphi %s303, %s303
                  %s332 = sphi %s298, %s298
                $region128: #{bert_base_cased_forward.13} parent=124 // loop_header_branch
                  %329 = sbr.rel (%p327) target = $region132
                $region129: #{bert_base_cased_forward.13} parent=124 // loop_body
                  _
                $region130: #{bert_base_cased_forward.13} parent=124 // loop_footer
                  %s330 = sadd.s32 1, %s326
                $region131: #{bert_base_cased_forward.13} parent=124 // loop_footer_branch
                  %325 = sbr.rel target = $region127
                $region132: #{bert_base_cased_forward.13} parent=124 // loop_exit
                  _
                loop: start=0, step=1, limit=1
                $region133: #{bert_base_cased_forward.13} parent=124 // loop_pre_header
                  _
                $region134: #{bert_base_cased_forward.13} parent=124 // loop_header
                  %s335 = sphi 0, %s339
                  %p336 = scmp.ge.s32.totalorder %s335, 1
                  %s340 = sphi %s303, %s303
                  %s341 = sphi %s298, %s298
                $region135: #{bert_base_cased_forward.13} parent=124 // loop_header_branch
                  %338 = sbr.rel (%p336) target = $region139
                $region136: #{bert_base_cased_forward.13} parent=124 // loop_body
                  %v342 = vld [vmem:[%s340] sm:$0xf]
                  %343 = vst [vmem:[%s341] sm:$0xf] %v342
                  %v344 = vld [vmem:[%s340 + $0xc] sm:$0xf]
                  %345 = vst [vmem:[%s341 + $0x4] sm:$0xf] %v344
                $region137: #{bert_base_cased_forward.13} parent=124 // loop_footer
                  %s339 = sadd.s32 1, %s335
                $region138: #{bert_base_cased_forward.13} parent=124 // loop_footer_branch
                  %334 = sbr.rel target = $region134
                $region139: #{bert_base_cased_forward.13} parent=124 // loop_exit
                  _
              $region125: #{bert_base_cased_forward.13} parent=109 // pred_fallthru
                _
            $region110: #{bert_base_cased_forward.13} parent=105 // pred_fallthru
              _
            // Predicated region
            $region111: #{bert_base_cased_forward.13} parent=105 // pred_check
              _
            $region112: #{bert_base_cased_forward.13} parent=105 // pred_check_branch
              %309 = sbr.rel (0) target = $region114
            $region113: #{bert_base_cased_forward.13} parent=105 // pred_region
              loop: start=0, step=1, limit=1
              $region115: #{bert_base_cased_forward.13} parent=113 // loop_pre_header
                _
              $region116: #{bert_base_cased_forward.13} parent=113 // loop_header
                %s312 = sphi 0, %s316
                %p313 = scmp.ge.s32.totalorder %s312, 1
                %s317 = sphi %s303, %s303
                %s318 = sphi %s298, %s298
              $region117: #{bert_base_cased_forward.13} parent=113 // loop_header_branch
                %315 = sbr.rel (%p313) target = $region121
              $region118: #{bert_base_cased_forward.13} parent=113 // loop_body
                %v319 = vld [vmem:[%s317] sm:$0xf]
                %320 = vst [vmem:[%s318] sm:$0xf] %v319
                %v321 = vld [vmem:[%s317 + $0xc] sm:$0xf]
                %322 = vst [vmem:[%s318 + $0x4] sm:$0xf] %v321
              $region119: #{bert_base_cased_forward.13} parent=113 // loop_footer
                %s316 = sadd.s32 1, %s312
              $region120: #{bert_base_cased_forward.13} parent=113 // loop_footer_branch
                %311 = sbr.rel target = $region116
              $region121: #{bert_base_cased_forward.13} parent=113 // loop_exit
                _
            $region114: #{bert_base_cased_forward.13} parent=105 // pred_fallthru
              _
          $region106: #{bert_base_cased_forward.13} parent=101 // pred_fallthru
            _
          %346 = vnop
        $region102: #{bert_base_cased_forward.13} parent=15 // pred_fallthru
          _
        // Predicated region
        $region140: #{bert_base_cased_forward.13} parent=15 // pred_check
          %p347 = pneg %p130
        $region141: #{bert_base_cased_forward.13} parent=15 // pred_check_branch
          %349 = sbr.rel (%p347) target = $region143
        $region142: #{bert_base_cased_forward.13} parent=15 // pred_region
          %p350 = scmp.lt.s32.totalorder %s17, 1
          %s351 = scalar_select %p350, %s17, 1
          %s352 = scalar_lea.vmem %s3, %s351
        $region143: #{bert_base_cased_forward.13} parent=15 // pred_fallthru
          _
      $region16: #{bert_base_cased_forward.13} parent=5 // pred_fallthru
        _
      %p353 = scmp.le.s32.totalorder 1, %s10
      %p354 = scmp.lt.s32.totalorder %s10, 3
      %p355 = pnand %p353, %p354
      %p356 = pneg %p355
      // Predicated region
      $region144: #{bert_base_cased_forward.13} parent=5 // pred_check
        _
      $region145: #{bert_base_cased_forward.13} parent=5 // pred_check_branch
        %358 = sbr.rel (%p355) target = $region147
      $region146: #{bert_base_cased_forward.13} parent=5 // pred_region
        %s359 = ssub.s32 %s10, 1
        %s360 = sand.u32 %s37, 1
        %s361 = sand.u32 %s37, 1
        %s362 = smul.addr %s361, 8
        %s363 = scalar_lea.vmem [#allocation2], %s362
        // Predicated region
        $region148: #{bert_base_cased_forward.13} parent=146 // pred_check
          %p364 = pneg %p50
        $region149: #{bert_base_cased_forward.13} parent=146 // pred_check_branch
          %366 = sbr.rel (%p364) target = $region151
        $region150: #{bert_base_cased_forward.13} parent=146 // pred_region
          _
        $region151: #{bert_base_cased_forward.13} parent=146 // pred_fallthru
          _
        %s367 = sand.u32 %s67, 1
        %s368 = sand.u32 %s67, 1
        %s369 = smul.addr %s368, 8
        %s370 = scalar_lea.vmem [#allocation3], %s369
        // Predicated region
        $region152: #{bert_base_cased_forward.13} parent=146 // pred_check
          %p371 = pneg %p80
        $region153: #{bert_base_cased_forward.13} parent=146 // pred_check_branch
          %373 = sbr.rel (%p371) target = $region155
        $region154: #{bert_base_cased_forward.13} parent=146 // pred_region
          _
        $region155: #{bert_base_cased_forward.13} parent=146 // pred_fallthru
          _
        %s374 = sand.u32 %s97, 1
        %s375 = sand.u32 %s97, 1
        %s376 = smul.addr %s375, 8
        %s377 = scalar_lea.vmem [#allocation4], %s376
        // Predicated region
        $region156: #{bert_base_cased_forward.13} parent=146 // pred_check
          %p378 = pneg %p110
        $region157: #{bert_base_cased_forward.13} parent=146 // pred_check_branch
          %380 = sbr.rel (%p378) target = $region159
        $region158: #{bert_base_cased_forward.13} parent=146 // pred_region
          _
        $region159: #{bert_base_cased_forward.13} parent=146 // pred_fallthru
          _
        %s381 = sand.u32 %s37, 1
        %s382 = sand.u32 %s37, 1
        %s383 = smul.addr %s382, 8
        %s384 = scalar_lea.vmem [#allocation2], %s383
        %p385 = pneg %p50
        %p386 = pneg %p47
        %s387 = sand.u32 %s67, 1
        %s388 = sand.u32 %s67, 1
        %s389 = smul.addr %s388, 8
        %s390 = scalar_lea.vmem [#allocation3], %s389
        %p391 = pneg %p80
        %p392 = pneg %p77
        %s393 = sand.u32 %s97, 1
        %s394 = sand.u32 %s97, 1
        %s395 = smul.addr %s394, 8
        %s396 = scalar_lea.vmem [#allocation4], %s395
        %p397 = pneg %p110
        %p398 = pneg %p107
        %p399 = scmp.lt.s32.totalorder %s19, 1
        %s400 = scalar_select %p399, %s19, 1
        %s401 = scalar_lea.vmem %s3, %s400
        %p402 = pneg %p136
        %p403 = pneg %p133
        %p404 = pneg %p164
        %p405 = pneg %p161
        %p406 = scmp.lt.s32.totalorder %s19, 1
        %s407 = scalar_select %p406, %s19, 1
        %p408 = scmp.lt.s32.totalorder %s20, 0
        %s409 = scalar_select %p408, %s20, 0
        %s410 = smul.addr %s407, 2
        %s411 = sadd.s32 %s409, %s410
        %s412 = smul.addr %s411, 4
        %s413 = scalar_lea.vmem %s4, %s412
        %s414 = sadd.s32 %s20, 1
        %s415 = sadd.s32 %s20, 2
        %p416 = scmp.lt.s32.totalorder %s19, 1
        %s417 = scalar_select %p416, %s19, 1
        %s418 = scalar_lea.vmem %s3, %s417
        %p419 = scmp.lt.s32.totalorder %s19, 1
        %s420 = scalar_select %p419, %s19, 1
        %p421 = scmp.lt.s32.totalorder %s20, 0
        %s422 = scalar_select %p421, %s20, 0
        %s423 = smul.addr %s420, 2
        %s424 = sadd.s32 %s422, %s423
        %s425 = smul.addr %s424, 4
        %s426 = scalar_lea.vmem %s4, %s425
        %v428 = vld [vmem:[%s418] sm:$0x1]
        %v429 = vld [vmem:[%s363] sm:$0xf]
        %v430 = vld [vmem:[%s363 + $0x4] sm:$0xf]
        %v431 = vld [vmem:[%s370] sm:$0xf]
        %v432 = vld [vmem:[%s370 + $0x4] sm:$0xf]
        %v433 = vld [vmem:[%s377] sm:$0xf]
        %v434 = vld [vmem:[%s377 + $0x4] sm:$0xf]
        %v437 = vunpack.c.l.b16 %v429
        %v438 = vunpack.c.l.b16 %v430
        %v439 = vpack.c.b16 %v438, %v437
        %v442 = vunpack.c.l.b16 %v431
        %v443 = vunpack.c.l.b16 %v432
        %v444 = vpack.c.b16 %v443, %v442
        %vm445 = vcmask 523264
        %v447 = vsel %vm445, %v439, 0
        %v450 = vsel %vm445, %v444, 0
        %452 = vmatprep.subr.bf16.mxu0 0
        %453 = vmatpush1.bf16.xpose.msra.mxu0 %v450
        %454 = vmatprep.subr.bf16.mxu0 0
        %455 = vmatpush1.bf16.xpose.msra.mxu0 0
        %456 = vmatprep.subr.bf16.mxu0 0
        %457 = vmatpush1.bf16.xpose.msra.mxu0 0
        %458 = vmatprep.subr.bf16.mxu0 0
        %459 = vmatpush1.bf16.xpose.msra.mxu0 0
        %460 = vmatprep.subr.bf16.mxu0 0
        %461 = vmatpush1.bf16.xpose.msra.mxu0 0
        %462 = vmatprep.subr.bf16.mxu0 0
        %463 = vmatpush1.bf16.xpose.msra.mxu0 0
        %464 = vmatprep.subr.bf16.mxu0 0
        %465 = vmatpush1.bf16.xpose.msra.mxu0 0
        %466 = vmatprep.subr.bf16.mxu0 0
        %467 = vmatpush1.bf16.xpose.msra.mxu0 0
        %468 = vmatprep.subr.bf16.mxu0 0
        %469 = vmatpush1.bf16.xpose.msra.mxu0 0
        %470 = vmatprep.subr.bf16.mxu0 0
        %471 = vmatpush1.bf16.xpose.msra.mxu0 0
        %472 = vmatprep.subr.bf16.mxu0 0
        %473 = vmatpush1.bf16.xpose.msra.mxu0 0
        %474 = vmatprep.subr.bf16.mxu0 0
        %475 = vmatpush1.bf16.xpose.msra.mxu0 0
        %476 = vmatprep.subr.bf16.mxu0 0
        %477 = vmatpush1.bf16.xpose.msra.mxu0 0
        %478 = vmatprep.subr.bf16.mxu0 0
        %479 = vmatpush1.bf16.xpose.msra.mxu0 0
        %480 = vmatprep.subr.bf16.mxu0 0
        %481 = vmatpush1.bf16.xpose.msra.mxu0 0
        %482 = vmatprep.subr.bf16.mxu0 0
        %483 = vmatpush1.bf16.xpose.msra.mxu0 0
        %484 = vmatprep.mubr.bf16.mxu0 0
        %485 = vmatmul.mubr.bf16.gmra.mrb[0].mxu0 %v447
        %v486 = vpop.f32.mrb[0].mxu0
        %v487 = vadd.f32 0.0, %v486
        %v488 = vpop.f32.mrb[0].mxu0
        %v489 = vpop.f32.mrb[0].mxu0
        %v490 = vadd.f32 0.0, %v489
        %v491 = vpop.f32.mrb[0].mxu0
        %492 = vdwg.mxu0
        %v493 = vmul.f32 %v487, 0.125
        %v494 = vmul.f32 %v490, 0.125
        %v496 = vlaneseq
        %v497 = vshrl.u32 %v496, 7
        %v498 = vsub.s32 0, %v497
        %v499 = vrot.slane %v428, %v498
        %v501 = vadd.f32 %v493, %v499
        %v502 = vadd.f32 %v494, %v499
        %vm503 = vcmask 130048
        %v504 = vsel %vm503, %v501, -inf
        %505 = vmax.xlane.f32.xlu0 %v504
        %v506 = vpop.xlane.xlu0 %505
        %v507 = vsel %vm503, %v502, -inf
        %508 = vmax.xlane.f32.xlu0 %v507
        %v509 = vpop.xlane.xlu0 %508
        %v510 = vsub.f32 %v501, %v506
        %v511 = vsub.f32 %v502, %v509
        %v512 = vmul.f32 %v510, 1.442695
        %v513 = vpow.pop %v512
        %v514 = vmul.f32 %v511, 1.442695
        %v515 = vpow.pop %v514
        %v516 = vsel %vm503, %v513, 0.0
        %517 = vadd.xlane.f32.xlu0 %v516
        %v518 = vpop.xlane.xlu0 %517
        %v519 = vsel %vm503, %v515, 0.0
        %520 = vadd.xlane.f32.xlu0 %v519
        %v521 = vpop.xlane.xlu0 %520
        %v522 = vrcp.pop %v518
        %v523 = vrcp.pop %v521
        %v524 = vmul.f32 %v513, %v522
        %v525 = vmul.f32 %v515, %v523
        %v526 = vpack.c.bf16 %v525, %v524
        %v529 = vunpack.c.l.b16 %v433
        %v530 = vunpack.c.l.b16 %v434
        %v531 = vpack.c.b16 %v530, %v529
        %v534 = vsel %vm503, %v526, 0
        %536 = vmatprep.subr.bf16.mxu0 0
        %537 = vmatpush1.bf16.msra.mxu0 %v531
        %538 = vmatprep.subr.bf16.mxu0 0
        %539 = vmatpush1.bf16.msra.mxu0 0
        %540 = vmatprep.subr.bf16.mxu0 0
        %541 = vmatpush1.bf16.msra.mxu0 0
        %542 = vmatprep.subr.bf16.mxu0 0
        %543 = vmatpush1.bf16.msra.mxu0 0
        %544 = vmatprep.subr.bf16.mxu0 0
        %545 = vmatpush1.bf16.msra.mxu0 0
        %546 = vmatprep.subr.bf16.mxu0 0
        %547 = vmatpush1.bf16.msra.mxu0 0
        %548 = vmatprep.subr.bf16.mxu0 0
        %549 = vmatpush1.bf16.msra.mxu0 0
        %550 = vmatprep.subr.bf16.mxu0 0
        %551 = vmatpush1.bf16.msra.mxu0 0
        %552 = vmatprep.subr.bf16.mxu0 0
        %553 = vmatpush1.bf16.msra.mxu0 0
        %554 = vmatprep.subr.bf16.mxu0 0
        %555 = vmatpush1.bf16.msra.mxu0 0
        %556 = vmatprep.subr.bf16.mxu0 0
        %557 = vmatpush1.bf16.msra.mxu0 0
        %558 = vmatprep.subr.bf16.mxu0 0
        %559 = vmatpush1.bf16.msra.mxu0 0
        %560 = vmatprep.subr.bf16.mxu0 0
        %561 = vmatpush1.bf16.msra.mxu0 0
        %562 = vmatprep.subr.bf16.mxu0 0
        %563 = vmatpush1.bf16.msra.mxu0 0
        %564 = vmatprep.subr.bf16.mxu0 0
        %565 = vmatpush1.bf16.msra.mxu0 0
        %566 = vmatprep.subr.bf16.mxu0 0
        %567 = vmatpush1.bf16.msra.mxu0 0
        %568 = vmatprep.mubr.bf16.mxu0 0
        %569 = vmatmul.mubr.bf16.gmra.mrb[0].mxu0 %v534
        %v570 = vpop.f32.mrb[0].mxu0
        %v571 = vadd.f32 0.0, %v570
        %v572 = vpop.f32.mrb[0].mxu0
        %v573 = vpop.f32.mrb[0].mxu0
        %v574 = vadd.f32 0.0, %v573
        %v575 = vpop.f32.mrb[0].mxu0
        %576 = vdwg.mxu0
        %v577 = vpack.c.bf16 %v574, %v571
        %578 = vrot.lane.b32.xlu0 %v439, 64
        %v579 = vpop.permute.xlu0 %578
        %580 = vrot.lane.b32.xlu0 %v444, 64
        %v581 = vpop.permute.xlu0 %580
        %v583 = vsel %vm445, %v579, 0
        %v586 = vsel %vm445, %v581, 0
        %588 = vmatprep.subr.bf16.mxu0 0
        %589 = vmatpush1.bf16.xpose.msra.mxu0 %v586
        %590 = vmatprep.subr.bf16.mxu0 0
        %591 = vmatpush1.bf16.xpose.msra.mxu0 0
        %592 = vmatprep.subr.bf16.mxu0 0
        %593 = vmatpush1.bf16.xpose.msra.mxu0 0
        %594 = vmatprep.subr.bf16.mxu0 0
        %595 = vmatpush1.bf16.xpose.msra.mxu0 0
        %596 = vmatprep.subr.bf16.mxu0 0
        %597 = vmatpush1.bf16.xpose.msra.mxu0 0
        %598 = vmatprep.subr.bf16.mxu0 0
        %599 = vmatpush1.bf16.xpose.msra.mxu0 0
        %600 = vmatprep.subr.bf16.mxu0 0
        %601 = vmatpush1.bf16.xpose.msra.mxu0 0
        %602 = vmatprep.subr.bf16.mxu0 0
        %603 = vmatpush1.bf16.xpose.msra.mxu0 0
        %604 = vmatprep.subr.bf16.mxu0 0
        %605 = vmatpush1.bf16.xpose.msra.mxu0 0
        %606 = vmatprep.subr.bf16.mxu0 0
        %607 = vmatpush1.bf16.xpose.msra.mxu0 0
        %608 = vmatprep.subr.bf16.mxu0 0
        %609 = vmatpush1.bf16.xpose.msra.mxu0 0
        %610 = vmatprep.subr.bf16.mxu0 0
        %611 = vmatpush1.bf16.xpose.msra.mxu0 0
        %612 = vmatprep.subr.bf16.mxu0 0
        %613 = vmatpush1.bf16.xpose.msra.mxu0 0
        %614 = vmatprep.subr.bf16.mxu0 0
        %615 = vmatpush1.bf16.xpose.msra.mxu0 0
        %616 = vmatprep.subr.bf16.mxu0 0
        %617 = vmatpush1.bf16.xpose.msra.mxu0 0
        %618 = vmatprep.subr.bf16.mxu0 0
        %619 = vmatpush1.bf16.xpose.msra.mxu0 0
        %620 = vmatprep.mubr.bf16.mxu0 0
        %621 = vmatmul.mubr.bf16.gmra.mrb[0].mxu0 %v583
        %v622 = vpop.f32.mrb[0].mxu0
        %v623 = vadd.f32 0.0, %v622
        %v624 = vpop.f32.mrb[0].mxu0
        %v625 = vpop.f32.mrb[0].mxu0
        %v626 = vadd.f32 0.0, %v625
        %v627 = vpop.f32.mrb[0].mxu0
        %628 = vdwg.mxu0
        %v629 = vmul.f32 %v623, 0.125
        %v630 = vmul.f32 %v626, 0.125
        %v631 = vadd.f32 %v629, %v499
        %v632 = vadd.f32 %v630, %v499
        %v633 = vsel %vm503, %v631, -inf
        %634 = vmax.xlane.f32.xlu0 %v633
        %v635 = vpop.xlane.xlu0 %634
        %v636 = vsel %vm503, %v632, -inf
        %637 = vmax.xlane.f32.xlu0 %v636
        %v638 = vpop.xlane.xlu0 %637
        %v639 = vsub.f32 %v631, %v635
        %v640 = vsub.f32 %v632, %v638
        %v641 = vmul.f32 %v639, 1.442695
        %v642 = vpow.pop %v641
        %v643 = vmul.f32 %v640, 1.442695
        %v644 = vpow.pop %v643
        %v645 = vsel %vm503, %v642, 0.0
        %646 = vadd.xlane.f32.xlu0 %v645
        %v647 = vpop.xlane.xlu0 %646
        %v648 = vsel %vm503, %v644, 0.0
        %649 = vadd.xlane.f32.xlu0 %v648
        %v650 = vpop.xlane.xlu0 %649
        %v651 = vrcp.pop %v647
        %v652 = vrcp.pop %v650
        %v653 = vmul.f32 %v642, %v651
        %v654 = vmul.f32 %v644, %v652
        %v655 = vpack.c.bf16 %v654, %v653
        %656 = vrot.lane.b32.xlu0 %v531, 64
        %v657 = vpop.permute.xlu0 %656
        %v660 = vsel %vm503, %v655, 0
        %662 = vmatprep.subr.bf16.mxu0 0
        %663 = vmatpush1.bf16.msra.mxu0 %v657
        %664 = vmatprep.subr.bf16.mxu0 0
        %665 = vmatpush1.bf16.msra.mxu0 0
        %666 = vmatprep.subr.bf16.mxu0 0
        %667 = vmatpush1.bf16.msra.mxu0 0
        %668 = vmatprep.subr.bf16.mxu0 0
        %669 = vmatpush1.bf16.msra.mxu0 0
        %670 = vmatprep.subr.bf16.mxu0 0
        %671 = vmatpush1.bf16.msra.mxu0 0
        %672 = vmatprep.subr.bf16.mxu0 0
        %673 = vmatpush1.bf16.msra.mxu0 0
        %674 = vmatprep.subr.bf16.mxu0 0
        %675 = vmatpush1.bf16.msra.mxu0 0
        %676 = vmatprep.subr.bf16.mxu0 0
        %677 = vmatpush1.bf16.msra.mxu0 0
        %678 = vmatprep.subr.bf16.mxu0 0
        %679 = vmatpush1.bf16.msra.mxu0 0
        %680 = vmatprep.subr.bf16.mxu0 0
        %681 = vmatpush1.bf16.msra.mxu0 0
        %682 = vmatprep.subr.bf16.mxu0 0
        %683 = vmatpush1.bf16.msra.mxu0 0
        %684 = vmatprep.subr.bf16.mxu0 0
        %685 = vmatpush1.bf16.msra.mxu0 0
        %686 = vmatprep.subr.bf16.mxu0 0
        %687 = vmatpush1.bf16.msra.mxu0 0
        %688 = vmatprep.subr.bf16.mxu0 0
        %689 = vmatpush1.bf16.msra.mxu0 0
        %690 = vmatprep.subr.bf16.mxu0 0
        %691 = vmatpush1.bf16.msra.mxu0 0
        %692 = vmatprep.subr.bf16.mxu0 0
        %693 = vmatpush1.bf16.msra.mxu0 0
        %694 = vmatprep.mubr.bf16.mxu0 0
        %695 = vmatmul.mubr.bf16.gmra.mrb[0].mxu0 %v660
        %v696 = vpop.f32.mrb[0].mxu0
        %v697 = vadd.f32 0.0, %v696
        %v698 = vpop.f32.mrb[0].mxu0
        %v699 = vpop.f32.mrb[0].mxu0
        %v700 = vadd.f32 0.0, %v699
        %v701 = vpop.f32.mrb[0].mxu0
        %702 = vdwg.mxu0
        %v703 = vpack.c.bf16 %v700, %v697
        %705 = vrot.lane.b32.xlu0 %v703, 64
        %v706 = vpop.permute.xlu0 %705
        %v709 = vsel %vm445, %v577, %v706
        %v711 = vunpack.c.l.b16 %v709
        %v712 = vunpack.c.h.b16 %v709
        %v713 = vpack.c.b16 %v711, %v711
        %v714 = vpack.c.b16 %v712, %v712
        %717 = vst [vmem:[%s426] sm:$0xf] %v713
        %718 = vst [vmem:[%s426 + $0x4] sm:$0xf] %v714
        %p719 = scmp.lt.s32.totalorder %s19, 1
        %s720 = scalar_select %p719, %s19, 1
        %p721 = scmp.lt.s32.totalorder %s20, 0
        %s722 = scalar_select %p721, %s20, 0
        %s723 = smul.addr %s720, 2
        %s724 = sadd.s32 %s722, %s723
        %s725 = smul.addr %s724, 4
        %s726 = scalar_lea.vmem %s4, %s725
        // Predicated region
        $region160: #{bert_base_cased_forward.13} parent=146 // pred_check
          %p727 = pneg %p161
        $region161: #{bert_base_cased_forward.13} parent=146 // pred_check_branch
          %729 = sbr.rel (%p727) target = $region163
        $region162: #{bert_base_cased_forward.13} parent=146 // pred_region
          _
        $region163: #{bert_base_cased_forward.13} parent=146 // pred_fallthru
          _
      $region147: #{bert_base_cased_forward.13} parent=5 // pred_fallthru
        _
      %p730 = scmp.le.s32.totalorder 2, %s10
      // Predicated region
      $region164: #{bert_base_cased_forward.13} parent=5 // pred_check
        %p731 = pneg %p730
      $region165: #{bert_base_cased_forward.13} parent=5 // pred_check_branch
        %733 = sbr.rel (%p731) target = $region167
      $region166: #{bert_base_cased_forward.13} parent=5 // pred_region
        %s734 = ssub.s32 %s10, 2
        // Predicated region
        $region168: #{bert_base_cased_forward.13} parent=166 // pred_check
          %p735 = pneg %p167
        $region169: #{bert_base_cased_forward.13} parent=166 // pred_check_branch
          %737 = sbr.rel (%p735) target = $region171
        $region170: #{bert_base_cased_forward.13} parent=166 // pred_region
          %p738 = scmp.lt.s32.totalorder %s21, 1
          %s739 = scalar_select %p738, %s21, 1
          %p740 = scmp.lt.s32.totalorder %s22, 0
          %s741 = scalar_select %p740, %s22, 0
          %s742 = smul.addr %s739, 2
          %s743 = sadd.s32 %s741, %s742
          %s744 = smul.addr %s743, 4
          %s745 = scalar_lea.vmem %s4, %s744
        $region171: #{bert_base_cased_forward.13} parent=166 // pred_fallthru
          _
      $region167: #{bert_base_cased_forward.13} parent=5 // pred_fallthru
        _
    $region6: #{bert_base_cased_forward.13} parent=1 // loop_footer
      %s14 = sadd.s32 1, %s10
    $region7: #{bert_base_cased_forward.13} parent=1 // loop_footer_branch
      %9 = sbr.rel target = $region3
    $region8: #{bert_base_cased_forward.13} parent=1 // loop_exit
      _

// kernel: bert_base_cased_forward.12
$region0: #{bert_base_cased_forward.12}
  #allocation0 [shape = 'u32[]', space=smem, size = 0x4, offset = 0x4, fixed_abs, tag = 'smem constant byte address 0x4 - core index']
  #allocation1 [shape = 'u32[144,128]{1,0:T(1,128)}', space=vmem, size = 0x12000, scoped, tag = 'internal scratch']
  #allocation2 [shape = 'f32[32,384]{1,0:T(8,128)}', space=vmem, size = 0xc000, scoped, tag = 'scratch operand']
  %s0 = inlined_call_operand.vmem [shape: bf16[32,128], index: 0, kind: input, shape index: {}]
  %s1 = inlined_call_operand.vmem [shape: bf16[128,384], index: 1, kind: input, shape index: {}]
  %s2 = inlined_call_operand.vmem [shape: f32[1,384], index: 2, kind: input, shape index: {}]
  %s3 = inlined_call_operand.vmem [shape: bf16[32,384], index: 3, kind: output, shape index: {}]
  %s4 = sld [smem:[#allocation0]]
  $region30: #{bert_base_cased_forward.12} parent=0
    _
  %s6 = ssub.s32 1, %s4
  %s7 = scalar_select 0, %s6, %s4
  // Predicated region
  $region2: #{bert_base_cased_forward.12} parent=0 // pred_check
    _
  $region3: #{bert_base_cased_forward.12} parent=0 // pred_check_branch
    %9 = sbr.rel (0) target = $region5
  $region4: #{bert_base_cased_forward.12} parent=0 // pred_region
    _
  $region5: #{bert_base_cased_forward.12} parent=0 // pred_fallthru
    _
  // Predicated region
  $region6: #{bert_base_cased_forward.12} parent=0 // pred_check
    _
  $region7: #{bert_base_cased_forward.12} parent=0 // pred_check_branch
    %11 = sbr.rel (0) target = $region9
  $region8: #{bert_base_cased_forward.12} parent=0 // pred_region
    _
  $region9: #{bert_base_cased_forward.12} parent=0 // pred_fallthru
    _
  // Predicated region
  $region10: #{bert_base_cased_forward.12} parent=0 // pred_check
    _
  $region11: #{bert_base_cased_forward.12} parent=0 // pred_check_branch
    %13 = sbr.rel (0) target = $region13
  $region12: #{bert_base_cased_forward.12} parent=0 // pred_region
    _
  $region13: #{bert_base_cased_forward.12} parent=0 // pred_fallthru
    _
  %p15 = scmp.eq.s32.totalorder 0, 0
  // Predicated region
  $region14: #{bert_base_cased_forward.12} parent=0 // pred_check
    %p16 = pneg %p15
  $region15: #{bert_base_cased_forward.12} parent=0 // pred_check_branch
    %18 = sbr.rel (%p16) target = $region17
  $region16: #{bert_base_cased_forward.12} parent=0 // pred_region
    %19 = vst [vmem:[#allocation2] sm:$0xff] 0.0
    %20 = vst [vmem:[#allocation2 + $0x8] sm:$0xff] 0.0
    %21 = vst [vmem:[#allocation2 + $0x10] sm:$0xff] 0.0
    %22 = vst [vmem:[#allocation2 + $0x18] sm:$0xff] 0.0
    %23 = vst [vmem:[#allocation2 + $0x20] sm:$0xff] 0.0
    %24 = vst [vmem:[#allocation2 + $0x28] sm:$0xff] 0.0
    %25 = vst [vmem:[#allocation2 + $0x30] sm:$0xff] 0.0
    %26 = vst [vmem:[#allocation2 + $0x38] sm:$0xff] 0.0
    %27 = vst [vmem:[#allocation2 + $0x40] sm:$0xff] 0.0
    %28 = vst [vmem:[#allocation2 + $0x48] sm:$0xff] 0.0
    %29 = vst [vmem:[#allocation2 + $0x50] sm:$0xff] 0.0
    %30 = vst [vmem:[#allocation2 + $0x58] sm:$0xff] 0.0
  $region17: #{bert_base_cased_forward.12} parent=0 // pred_fallthru
    _
  %v31 = vld [vmem:[#allocation2] sm:$0xff]
  %v32 = vld [vmem:[#allocation2 + $0x8] sm:$0xff]
  %v33 = vld [vmem:[#allocation2 + $0x10] sm:$0xff]
  %v34 = vld [vmem:[#allocation2 + $0x18] sm:$0xff]
  %v35 = vld [vmem:[#allocation2 + $0x20] sm:$0xff]
  %v36 = vld [vmem:[#allocation2 + $0x28] sm:$0xff]
  %v37 = vld [vmem:[#allocation2 + $0x30] sm:$0xff]
  %v38 = vld [vmem:[#allocation2 + $0x38] sm:$0xff]
  %v39 = vld [vmem:[#allocation2 + $0x40] sm:$0xff]
  %v40 = vld [vmem:[#allocation2 + $0x48] sm:$0xff]
  %v41 = vld [vmem:[#allocation2 + $0x50] sm:$0xff]
  %v42 = vld [vmem:[#allocation2 + $0x58] sm:$0xff]
  %v43 = vld [vmem:[%s0] sm:$0xf]
  %v44 = vld [vmem:[%s0 + $0x4] sm:$0xf]
  %v45 = vld [vmem:[%s0 + $0x8] sm:$0xf]
  %v46 = vld [vmem:[%s0 + $0xc] sm:$0xf]
  %v47 = vld [vmem:[%s1] sm:$0xff]
  %v48 = vld [vmem:[%s1 + $0x8] sm:$0xf]
  %v49 = vld [vmem:[%s1 + $0xc] sm:$0xff]
  %v50 = vld [vmem:[%s1 + $0x14] sm:$0xf]
  %v51 = vld [vmem:[%s1 + $0x18] sm:$0xff]
  %v52 = vld [vmem:[%s1 + $0x20] sm:$0xf]
  %v53 = vld [vmem:[%s1 + $0x24] sm:$0xff]
  %v54 = vld [vmem:[%s1 + $0x2c] sm:$0xf]
  %v55 = vld [vmem:[%s1 + $0x30] sm:$0xff]
  %v56 = vld [vmem:[%s1 + $0x38] sm:$0xf]
  %v57 = vld [vmem:[%s1 + $0x3c] sm:$0xff]
  %v58 = vld [vmem:[%s1 + $0x44] sm:$0xf]
  %v59 = vld [vmem:[%s1 + $0x48] sm:$0xff]
  %v60 = vld [vmem:[%s1 + $0x50] sm:$0xf]
  %v61 = vld [vmem:[%s1 + $0x54] sm:$0xff]
  %v62 = vld [vmem:[%s1 + $0x5c] sm:$0xf]
  %v63 = vld [vmem:[%s1 + $0x60] sm:$0xff]
  %v64 = vld [vmem:[%s1 + $0x68] sm:$0xf]
  %v65 = vld [vmem:[%s1 + $0x6c] sm:$0xff]
  %v66 = vld [vmem:[%s1 + $0x74] sm:$0xf]
  %v67 = vld [vmem:[%s1 + $0x78] sm:$0xff]
  %v68 = vld [vmem:[%s1 + $0x80] sm:$0xf]
  %v69 = vld [vmem:[%s1 + $0x84] sm:$0xff]
  %v70 = vld [vmem:[%s1 + $0x8c] sm:$0xf]
  %v71 = vld [vmem:[%s1 + $0x90] sm:$0xff]
  %v72 = vld [vmem:[%s1 + $0x98] sm:$0xf]
  %v73 = vld [vmem:[%s1 + $0x9c] sm:$0xff]
  %v74 = vld [vmem:[%s1 + $0xa4] sm:$0xf]
  %v75 = vld [vmem:[%s1 + $0xa8] sm:$0xff]
  %v76 = vld [vmem:[%s1 + $0xb0] sm:$0xf]
  %v77 = vld [vmem:[%s1 + $0xb4] sm:$0xff]
  %v78 = vld [vmem:[%s1 + $0xbc] sm:$0xf]
  %v83 = vunpack.c.l.b16 %v43
  %v84 = vunpack.c.l.b16 %v44
  %v85 = vunpack.c.l.b16 %v45
  %v86 = vunpack.c.l.b16 %v46
  %v87 = vpack.c.b16 %v84, %v83
  %v88 = vpack.c.b16 %v86, %v85
  %v123 = vunpack.c.l.b16 %v47
  %v124 = vunpack.c.h.b16 %v47
  %v125 = vunpack.c.l.b16 %v48
  %v126 = vunpack.c.l.b16 %v49
  %v127 = vunpack.c.h.b16 %v49
  %v128 = vunpack.c.l.b16 %v50
  %v129 = vunpack.c.l.b16 %v51
  %v130 = vunpack.c.h.b16 %v51
  %v131 = vunpack.c.l.b16 %v52
  %v132 = vunpack.c.l.b16 %v53
  %v133 = vunpack.c.h.b16 %v53
  %v134 = vunpack.c.l.b16 %v54
  %v135 = vunpack.c.l.b16 %v55
  %v136 = vunpack.c.h.b16 %v55
  %v137 = vunpack.c.l.b16 %v56
  %v138 = vunpack.c.l.b16 %v57
  %v139 = vunpack.c.h.b16 %v57
  %v140 = vunpack.c.l.b16 %v58
  %v141 = vunpack.c.l.b16 %v59
  %v142 = vunpack.c.h.b16 %v59
  %v143 = vunpack.c.l.b16 %v60
  %v144 = vunpack.c.l.b16 %v61
  %v145 = vunpack.c.h.b16 %v61
  %v146 = vunpack.c.l.b16 %v62
  %v147 = vunpack.c.l.b16 %v63
  %v148 = vunpack.c.h.b16 %v63
  %v149 = vunpack.c.l.b16 %v64
  %v150 = vunpack.c.l.b16 %v65
  %v151 = vunpack.c.h.b16 %v65
  %v152 = vunpack.c.l.b16 %v66
  %v153 = vunpack.c.l.b16 %v67
  %v154 = vunpack.c.h.b16 %v67
  %v155 = vunpack.c.l.b16 %v68
  %v156 = vunpack.c.l.b16 %v69
  %v157 = vunpack.c.h.b16 %v69
  %v158 = vunpack.c.l.b16 %v70
  %v159 = vunpack.c.l.b16 %v71
  %v160 = vunpack.c.h.b16 %v71
  %v161 = vunpack.c.l.b16 %v72
  %v162 = vunpack.c.l.b16 %v73
  %v163 = vunpack.c.h.b16 %v73
  %v164 = vunpack.c.l.b16 %v74
  %v165 = vunpack.c.l.b16 %v75
  %v166 = vunpack.c.h.b16 %v75
  %v167 = vunpack.c.l.b16 %v76
  %v168 = vunpack.c.l.b16 %v77
  %v169 = vunpack.c.h.b16 %v77
  %v170 = vunpack.c.l.b16 %v78
  %v171 = vpack.c.b16 %v126, %v123
  %v172 = vpack.c.b16 %v127, %v124
  %v173 = vpack.c.b16 %v128, %v125
  %v174 = vpack.c.b16 %v132, %v129
  %v175 = vpack.c.b16 %v133, %v130
  %v176 = vpack.c.b16 %v134, %v131
  %v177 = vpack.c.b16 %v138, %v135
  %v178 = vpack.c.b16 %v139, %v136
  %v179 = vpack.c.b16 %v140, %v137
  %v180 = vpack.c.b16 %v144, %v141
  %v181 = vpack.c.b16 %v145, %v142
  %v182 = vpack.c.b16 %v146, %v143
  %v183 = vpack.c.b16 %v150, %v147
  %v184 = vpack.c.b16 %v151, %v148
  %v185 = vpack.c.b16 %v152, %v149
  %v186 = vpack.c.b16 %v156, %v153
  %v187 = vpack.c.b16 %v157, %v154
  %v188 = vpack.c.b16 %v158, %v155
  %v189 = vpack.c.b16 %v162, %v159
  %v190 = vpack.c.b16 %v163, %v160
  %v191 = vpack.c.b16 %v164, %v161
  %v192 = vpack.c.b16 %v168, %v165
  %v193 = vpack.c.b16 %v169, %v166
  %v194 = vpack.c.b16 %v170, %v167
  %219 = vmatprep.subr.bf16.mxu0 %v172
  %220 = vmatpush1.bf16.msra.mxu0 %v171
  %221 = vmatprep.subr.bf16.mxu0 %v175
  %222 = vmatpush1.bf16.msra.mxu0 %v174
  %223 = vmatprep.subr.bf16.mxu0 %v178
  %224 = vmatpush1.bf16.msra.mxu0 %v177
  %225 = vmatprep.subr.bf16.mxu0 %v181
  %226 = vmatpush1.bf16.msra.mxu0 %v180
  %227 = vmatprep.subr.bf16.mxu0 %v184
  %228 = vmatpush1.bf16.msra.mxu0 %v183
  %229 = vmatprep.subr.bf16.mxu0 %v187
  %230 = vmatpush1.bf16.msra.mxu0 %v186
  %231 = vmatprep.subr.bf16.mxu0 %v190
  %232 = vmatpush1.bf16.msra.mxu0 %v189
  %233 = vmatprep.subr.bf16.mxu0 %v193
  %234 = vmatpush1.bf16.msra.mxu0 %v192
  %235 = vmatprep.subr.bf16.mxu0 0
  %236 = vmatpush1.bf16.msra.mxu0 0
  %237 = vmatprep.subr.bf16.mxu0 0
  %238 = vmatpush1.bf16.msra.mxu0 0
  %239 = vmatprep.subr.bf16.mxu0 0
  %240 = vmatpush1.bf16.msra.mxu0 0
  %241 = vmatprep.subr.bf16.mxu0 0
  %242 = vmatpush1.bf16.msra.mxu0 0
  %243 = vmatprep.subr.bf16.mxu0 0
  %244 = vmatpush1.bf16.msra.mxu0 0
  %245 = vmatprep.subr.bf16.mxu0 0
  %246 = vmatpush1.bf16.msra.mxu0 0
  %247 = vmatprep.subr.bf16.mxu0 0
  %248 = vmatpush1.bf16.msra.mxu0 0
  %249 = vmatprep.subr.bf16.mxu0 0
  %250 = vmatpush1.bf16.msra.mxu0 0
  %251 = vmatprep.mubr.bf16.mxu0 0
  %252 = vmatmul.mubr.bf16.gmra.mrb[0].mxu0 %v87
  %v253 = vpop.f32.mrb[0].mxu0
  %v254 = vadd.f32 0.0, %v253
  %v255 = vpop.f32.mrb[0].mxu0
  %v256 = vadd.f32 0.0, %v255
  %v257 = vpop.f32.mrb[0].mxu0
  %v258 = vadd.f32 0.0, %v257
  %v259 = vpop.f32.mrb[0].mxu0
  %v260 = vadd.f32 0.0, %v259
  %261 = vmatprep.mubr.bf16.mxu0 0
  %262 = vmatmul.mubr.bf16.gmra.mrb[0].mxu0 %v88
  %v263 = vpop.f32.mrb[0].mxu0
  %v264 = vadd.f32 0.0, %v263
  %v265 = vpop.f32.mrb[0].mxu0
  %v266 = vadd.f32 0.0, %v265
  %v267 = vpop.f32.mrb[0].mxu0
  %v268 = vadd.f32 0.0, %v267
  %v269 = vpop.f32.mrb[0].mxu0
  %v270 = vadd.f32 0.0, %v269
  %271 = vdwg.mxu0
  %272 = vmatprep.subr.bf16.mxu0 0
  %273 = vmatpush1.bf16.msra.mxu0 %v173
  %274 = vmatprep.subr.bf16.mxu0 0
  %275 = vmatpush1.bf16.msra.mxu0 %v176
  %276 = vmatprep.subr.bf16.mxu0 0
  %277 = vmatpush1.bf16.msra.mxu0 %v179
  %278 = vmatprep.subr.bf16.mxu0 0
  %279 = vmatpush1.bf16.msra.mxu0 %v182
  %280 = vmatprep.subr.bf16.mxu0 0
  %281 = vmatpush1.bf16.msra.mxu0 %v185
  %282 = vmatprep.subr.bf16.mxu0 0
  %283 = vmatpush1.bf16.msra.mxu0 %v188
  %284 = vmatprep.subr.bf16.mxu0 0
  %285 = vmatpush1.bf16.msra.mxu0 %v191
  %286 = vmatprep.subr.bf16.mxu0 0
  %287 = vmatpush1.bf16.msra.mxu0 %v194
  %288 = vmatprep.subr.bf16.mxu0 0
  %289 = vmatpush1.bf16.msra.mxu0 0
  %290 = vmatprep.subr.bf16.mxu0 0
  %291 = vmatpush1.bf16.msra.mxu0 0
  %292 = vmatprep.subr.bf16.mxu0 0
  %293 = vmatpush1.bf16.msra.mxu0 0
  %294 = vmatprep.subr.bf16.mxu0 0
  %295 = vmatpush1.bf16.msra.mxu0 0
  %296 = vmatprep.subr.bf16.mxu0 0
  %297 = vmatpush1.bf16.msra.mxu0 0
  %298 = vmatprep.subr.bf16.mxu0 0
  %299 = vmatpush1.bf16.msra.mxu0 0
  %300 = vmatprep.subr.bf16.mxu0 0
  %301 = vmatpush1.bf16.msra.mxu0 0
  %302 = vmatprep.subr.bf16.mxu0 0
  %303 = vmatpush1.bf16.msra.mxu0 0
  %304 = vmatprep.mubr.bf16.mxu0 0
  %305 = vmatmul.mubr.bf16.gmra.mrb[0].mxu0 %v87
  %v306 = vpop.f32.mrb[0].mxu0
  %v307 = vadd.f32 0.0, %v306
  %v308 = vpop.f32.mrb[0].mxu0
  %v309 = vpop.f32.mrb[0].mxu0
  %v310 = vadd.f32 0.0, %v309
  %v311 = vpop.f32.mrb[0].mxu0
  %312 = vmatprep.mubr.bf16.mxu0 0
  %313 = vmatmul.mubr.bf16.gmra.mrb[0].mxu0 %v88
  %v314 = vpop.f32.mrb[0].mxu0
  %v315 = vadd.f32 0.0, %v314
  %v316 = vpop.f32.mrb[0].mxu0
  %v317 = vpop.f32.mrb[0].mxu0
  %v318 = vadd.f32 0.0, %v317
  %v319 = vpop.f32.mrb[0].mxu0
  %320 = vdwg.mxu0
  %v321 = vadd.f32 %v31, %v254
  %v322 = vadd.f32 %v32, %v256
  %v323 = vadd.f32 %v33, %v307
  %v324 = vadd.f32 %v34, %v258
  %v325 = vadd.f32 %v35, %v260
  %v326 = vadd.f32 %v36, %v310
  %v327 = vadd.f32 %v37, %v264
  %v328 = vadd.f32 %v38, %v266
  %v329 = vadd.f32 %v39, %v315
  %v330 = vadd.f32 %v40, %v268
  %v331 = vadd.f32 %v41, %v270
  %v332 = vadd.f32 %v42, %v318
  %333 = vst [vmem:[#allocation2] sm:$0xff] %v321
  %334 = vst [vmem:[#allocation2 + $0x8] sm:$0xff] %v322
  %335 = vst [vmem:[#allocation2 + $0x10] sm:$0xff] %v323
  %336 = vst [vmem:[#allocation2 + $0x18] sm:$0xff] %v324
  %337 = vst [vmem:[#allocation2 + $0x20] sm:$0xff] %v325
  %338 = vst [vmem:[#allocation2 + $0x28] sm:$0xff] %v326
  %339 = vst [vmem:[#allocation2 + $0x30] sm:$0xff] %v327
  %340 = vst [vmem:[#allocation2 + $0x38] sm:$0xff] %v328
  %341 = vst [vmem:[#allocation2 + $0x40] sm:$0xff] %v329
  %342 = vst [vmem:[#allocation2 + $0x48] sm:$0xff] %v330
  %343 = vst [vmem:[#allocation2 + $0x50] sm:$0xff] %v331
  %344 = vst [vmem:[#allocation2 + $0x58] sm:$0xff] %v332
  // Predicated region
  $region18: #{bert_base_cased_forward.12} parent=0 // pred_check
    %p345 = pneg %p15
  $region19: #{bert_base_cased_forward.12} parent=0 // pred_check_branch
    %347 = sbr.rel (%p345) target = $region21
  $region20: #{bert_base_cased_forward.12} parent=0 // pred_region
    %v348 = vld [vmem:[#allocation2] sm:$0xff]
    %v349 = vld [vmem:[#allocation2 + $0x8] sm:$0xff]
    %v350 = vld [vmem:[#allocation2 + $0x10] sm:$0xff]
    %v351 = vld [vmem:[#allocation2 + $0x18] sm:$0xff]
    %v352 = vld [vmem:[#allocation2 + $0x20] sm:$0xff]
    %v353 = vld [vmem:[#allocation2 + $0x28] sm:$0xff]
    %v354 = vld [vmem:[#allocation2 + $0x30] sm:$0xff]
    %v355 = vld [vmem:[#allocation2 + $0x38] sm:$0xff]
    %v356 = vld [vmem:[#allocation2 + $0x40] sm:$0xff]
    %v357 = vld [vmem:[#allocation2 + $0x48] sm:$0xff]
    %v358 = vld [vmem:[#allocation2 + $0x50] sm:$0xff]
    %v359 = vld [vmem:[#allocation2 + $0x58] sm:$0xff]
    %v360 = vld [vmem:[%s2] sm:$0x7]
    %v362 = vlaneseq
    %v363 = vshrl.u32 %v362, 7
    %v364 = vsub.s32 0, %v363
    %v365 = vrot.slane %v360, %v364
    %v366 = vlaneseq
    %v367 = vshrl.u32 %v366, 7
    %v368 = vsub.s32 1, %v367
    %v369 = vrot.slane %v360, %v368
    %v370 = vlaneseq
    %v371 = vshrl.u32 %v370, 7
    %v372 = vsub.s32 2, %v371
    %v373 = vrot.slane %v360, %v372
    %v377 = vadd.f32 %v348, %v365
    %v378 = vadd.f32 %v349, %v369
    %v379 = vadd.f32 %v350, %v373
    %v380 = vadd.f32 %v351, %v365
    %v381 = vadd.f32 %v352, %v369
    %v382 = vadd.f32 %v353, %v373
    %v383 = vadd.f32 %v354, %v365
    %v384 = vadd.f32 %v355, %v369
    %v385 = vadd.f32 %v356, %v373
    %v386 = vadd.f32 %v357, %v365
    %v387 = vadd.f32 %v358, %v369
    %v388 = vadd.f32 %v359, %v373
    %v389 = vpack.c.bf16 %v380, %v377
    %v390 = vpack.c.bf16 %v381, %v378
    %v391 = vpack.c.bf16 %v382, %v379
    %v392 = vpack.c.bf16 %v386, %v383
    %v393 = vpack.c.bf16 %v387, %v384
    %v394 = vpack.c.bf16 %v388, %v385
    %v401 = vunpack.c.l.b16 %v389
    %v402 = vunpack.c.l.b16 %v390
    %v403 = vunpack.c.l.b16 %v391
    %v404 = vunpack.c.h.b16 %v389
    %v405 = vunpack.c.h.b16 %v390
    %v406 = vunpack.c.h.b16 %v391
    %v407 = vunpack.c.l.b16 %v392
    %v408 = vunpack.c.l.b16 %v393
    %v409 = vunpack.c.l.b16 %v394
    %v410 = vunpack.c.h.b16 %v392
    %v411 = vunpack.c.h.b16 %v393
    %v412 = vunpack.c.h.b16 %v394
    %v413 = vpack.c.b16 %v402, %v401
    %v414 = vpack.c.b16 %v403, %v403
    %v415 = vpack.c.b16 %v405, %v404
    %v416 = vpack.c.b16 %v406, %v406
    %v417 = vpack.c.b16 %v408, %v407
    %v418 = vpack.c.b16 %v409, %v409
    %v419 = vpack.c.b16 %v411, %v410
    %v420 = vpack.c.b16 %v412, %v412
    %429 = vst [vmem:[%s3] sm:$0xff] %v413
    %430 = vst [vmem:[%s3 + $0x8] sm:$0xf] %v414
    %431 = vst [vmem:[%s3 + $0xc] sm:$0xff] %v415
    %432 = vst [vmem:[%s3 + $0x14] sm:$0xf] %v416
    %433 = vst [vmem:[%s3 + $0x18] sm:$0xff] %v417
    %434 = vst [vmem:[%s3 + $0x20] sm:$0xf] %v418
    %435 = vst [vmem:[%s3 + $0x24] sm:$0xff] %v419
    %436 = vst [vmem:[%s3 + $0x2c] sm:$0xf] %v420
  $region21: #{bert_base_cased_forward.12} parent=0 // pred_fallthru
    _
  // Predicated region
  $region22: #{bert_base_cased_forward.12} parent=0 // pred_check
    _
  $region23: #{bert_base_cased_forward.12} parent=0 // pred_check_branch
    %438 = sbr.rel (0) target = $region25
  $region24: #{bert_base_cased_forward.12} parent=0 // pred_region
    _
  $region25: #{bert_base_cased_forward.12} parent=0 // pred_fallthru
    _
  // Predicated region
  $region26: #{bert_base_cased_forward.12} parent=0 // pred_check
    _
  $region27: #{bert_base_cased_forward.12} parent=0 // pred_check_branch
    %440 = sbr.rel (0) target = $region29
  $region28: #{bert_base_cased_forward.12} parent=0 // pred_region
    _
  $region29: #{bert_base_cased_forward.12} parent=0 // pred_fallthru
    _

// kernel: bert_base_cased_forward.15
$region0: #{bert_base_cased_forward.15}
  #allocation0 [shape = 'u32[]', space=smem, size = 0x4, offset = 0x4, fixed_abs, tag = 'smem constant byte address 0x4 - core index']
  #allocation1 [shape = 'u32[144,128]{1,0:T(1,128)}', space=vmem, size = 0x12000, scoped, tag = 'internal scratch']
  #allocation2 [shape = 'f32[32,512]{1,0:T(8,128)}', space=vmem, size = 0x10000, scoped, tag = 'scratch operand']
  %s0 = inlined_call_operand.vmem [shape: bf16[32,128], index: 0, kind: input, shape index: {}]
  %s1 = inlined_call_operand.vmem [shape: bf16[128,512], index: 1, kind: input, shape index: {}]
  %s2 = inlined_call_operand.vmem [shape: f32[1,512], index: 2, kind: input, shape index: {}]
  %s3 = inlined_call_operand.vmem [shape: bf16[32,512], index: 3, kind: output, shape index: {}]
  %s4 = sld [smem:[#allocation0]]
  $region30: #{bert_base_cased_forward.15} parent=0
    _
  %s6 = ssub.s32 1, %s4
  %s7 = scalar_select 0, %s6, %s4
  // Predicated region
  $region2: #{bert_base_cased_forward.15} parent=0 // pred_check
    _
  $region3: #{bert_base_cased_forward.15} parent=0 // pred_check_branch
    %9 = sbr.rel (0) target = $region5
  $region4: #{bert_base_cased_forward.15} parent=0 // pred_region
    _
  $region5: #{bert_base_cased_forward.15} parent=0 // pred_fallthru
    _
  // Predicated region
  $region6: #{bert_base_cased_forward.15} parent=0 // pred_check
    _
  $region7: #{bert_base_cased_forward.15} parent=0 // pred_check_branch
    %11 = sbr.rel (0) target = $region9
  $region8: #{bert_base_cased_forward.15} parent=0 // pred_region
    _
  $region9: #{bert_base_cased_forward.15} parent=0 // pred_fallthru
    _
  // Predicated region
  $region10: #{bert_base_cased_forward.15} parent=0 // pred_check
    _
  $region11: #{bert_base_cased_forward.15} parent=0 // pred_check_branch
    %13 = sbr.rel (0) target = $region13
  $region12: #{bert_base_cased_forward.15} parent=0 // pred_region
    _
  $region13: #{bert_base_cased_forward.15} parent=0 // pred_fallthru
    _
  %p15 = scmp.eq.s32.totalorder 0, 0
  // Predicated region
  $region14: #{bert_base_cased_forward.15} parent=0 // pred_check
    %p16 = pneg %p15
  $region15: #{bert_base_cased_forward.15} parent=0 // pred_check_branch
    %18 = sbr.rel (%p16) target = $region17
  $region16: #{bert_base_cased_forward.15} parent=0 // pred_region
    %19 = vst [vmem:[#allocation2] sm:$0xff] 0.0
    %20 = vst [vmem:[#allocation2 + $0x8] sm:$0xff] 0.0
    %21 = vst [vmem:[#allocation2 + $0x10] sm:$0xff] 0.0
    %22 = vst [vmem:[#allocation2 + $0x18] sm:$0xff] 0.0
    %23 = vst [vmem:[#allocation2 + $0x20] sm:$0xff] 0.0
    %24 = vst [vmem:[#allocation2 + $0x28] sm:$0xff] 0.0
    %25 = vst [vmem:[#allocation2 + $0x30] sm:$0xff] 0.0
    %26 = vst [vmem:[#allocation2 + $0x38] sm:$0xff] 0.0
    %27 = vst [vmem:[#allocation2 + $0x40] sm:$0xff] 0.0
    %28 = vst [vmem:[#allocation2 + $0x48] sm:$0xff] 0.0
    %29 = vst [vmem:[#allocation2 + $0x50] sm:$0xff] 0.0
    %30 = vst [vmem:[#allocation2 + $0x58] sm:$0xff] 0.0
    %31 = vst [vmem:[#allocation2 + $0x60] sm:$0xff] 0.0
    %32 = vst [vmem:[#allocation2 + $0x68] sm:$0xff] 0.0
    %33 = vst [vmem:[#allocation2 + $0x70] sm:$0xff] 0.0
    %34 = vst [vmem:[#allocation2 + $0x78] sm:$0xff] 0.0
  $region17: #{bert_base_cased_forward.15} parent=0 // pred_fallthru
    _
  %v35 = vld [vmem:[#allocation2] sm:$0xff]
  %v36 = vld [vmem:[#allocation2 + $0x8] sm:$0xff]
  %v37 = vld [vmem:[#allocation2 + $0x10] sm:$0xff]
  %v38 = vld [vmem:[#allocation2 + $0x18] sm:$0xff]
  %v39 = vld [vmem:[#allocation2 + $0x20] sm:$0xff]
  %v40 = vld [vmem:[#allocation2 + $0x28] sm:$0xff]
  %v41 = vld [vmem:[#allocation2 + $0x30] sm:$0xff]
  %v42 = vld [vmem:[#allocation2 + $0x38] sm:$0xff]
  %v43 = vld [vmem:[#allocation2 + $0x40] sm:$0xff]
  %v44 = vld [vmem:[#allocation2 + $0x48] sm:$0xff]
  %v45 = vld [vmem:[#allocation2 + $0x50] sm:$0xff]
  %v46 = vld [vmem:[#allocation2 + $0x58] sm:$0xff]
  %v47 = vld [vmem:[#allocation2 + $0x60] sm:$0xff]
  %v48 = vld [vmem:[#allocation2 + $0x68] sm:$0xff]
  %v49 = vld [vmem:[#allocation2 + $0x70] sm:$0xff]
  %v50 = vld [vmem:[#allocation2 + $0x78] sm:$0xff]
  %v51 = vld [vmem:[%s0] sm:$0xf]
  %v52 = vld [vmem:[%s0 + $0x4] sm:$0xf]
  %v53 = vld [vmem:[%s0 + $0x8] sm:$0xf]
  %v54 = vld [vmem:[%s0 + $0xc] sm:$0xf]
  %v55 = vld [vmem:[%s1] sm:$0xff]
  %v56 = vld [vmem:[%s1 + $0x8] sm:$0xff]
  %v57 = vld [vmem:[%s1 + $0x10] sm:$0xff]
  %v58 = vld [vmem:[%s1 + $0x18] sm:$0xff]
  %v59 = vld [vmem:[%s1 + $0x20] sm:$0xff]
  %v60 = vld [vmem:[%s1 + $0x28] sm:$0xff]
  %v61 = vld [vmem:[%s1 + $0x30] sm:$0xff]
  %v62 = vld [vmem:[%s1 + $0x38] sm:$0xff]
  %v63 = vld [vmem:[%s1 + $0x40] sm:$0xff]
  %v64 = vld [vmem:[%s1 + $0x48] sm:$0xff]
  %v65 = vld [vmem:[%s1 + $0x50] sm:$0xff]
  %v66 = vld [vmem:[%s1 + $0x58] sm:$0xff]
  %v67 = vld [vmem:[%s1 + $0x60] sm:$0xff]
  %v68 = vld [vmem:[%s1 + $0x68] sm:$0xff]
  %v69 = vld [vmem:[%s1 + $0x70] sm:$0xff]
  %v70 = vld [vmem:[%s1 + $0x78] sm:$0xff]
  %v71 = vld [vmem:[%s1 + $0x80] sm:$0xff]
  %v72 = vld [vmem:[%s1 + $0x88] sm:$0xff]
  %v73 = vld [vmem:[%s1 + $0x90] sm:$0xff]
  %v74 = vld [vmem:[%s1 + $0x98] sm:$0xff]
  %v75 = vld [vmem:[%s1 + $0xa0] sm:$0xff]
  %v76 = vld [vmem:[%s1 + $0xa8] sm:$0xff]
  %v77 = vld [vmem:[%s1 + $0xb0] sm:$0xff]
  %v78 = vld [vmem:[%s1 + $0xb8] sm:$0xff]
  %v79 = vld [vmem:[%s1 + $0xc0] sm:$0xff]
  %v80 = vld [vmem:[%s1 + $0xc8] sm:$0xff]
  %v81 = vld [vmem:[%s1 + $0xd0] sm:$0xff]
  %v82 = vld [vmem:[%s1 + $0xd8] sm:$0xff]
  %v83 = vld [vmem:[%s1 + $0xe0] sm:$0xff]
  %v84 = vld [vmem:[%s1 + $0xe8] sm:$0xff]
  %v85 = vld [vmem:[%s1 + $0xf0] sm:$0xff]
  %v86 = vld [vmem:[%s1 + $0xf8] sm:$0xff]
  %v91 = vunpack.c.l.b16 %v51
  %v92 = vunpack.c.l.b16 %v52
  %v93 = vunpack.c.l.b16 %v53
  %v94 = vunpack.c.l.b16 %v54
  %v95 = vpack.c.b16 %v92, %v91
  %v96 = vpack.c.b16 %v94, %v93
  %v131 = vunpack.c.l.b16 %v55
  %v132 = vunpack.c.h.b16 %v55
  %v133 = vunpack.c.l.b16 %v56
  %v134 = vunpack.c.h.b16 %v56
  %v135 = vunpack.c.l.b16 %v57
  %v136 = vunpack.c.h.b16 %v57
  %v137 = vunpack.c.l.b16 %v58
  %v138 = vunpack.c.h.b16 %v58
  %v139 = vunpack.c.l.b16 %v59
  %v140 = vunpack.c.h.b16 %v59
  %v141 = vunpack.c.l.b16 %v60
  %v142 = vunpack.c.h.b16 %v60
  %v143 = vunpack.c.l.b16 %v61
  %v144 = vunpack.c.h.b16 %v61
  %v145 = vunpack.c.l.b16 %v62
  %v146 = vunpack.c.h.b16 %v62
  %v147 = vunpack.c.l.b16 %v63
  %v148 = vunpack.c.h.b16 %v63
  %v149 = vunpack.c.l.b16 %v64
  %v150 = vunpack.c.h.b16 %v64
  %v151 = vunpack.c.l.b16 %v65
  %v152 = vunpack.c.h.b16 %v65
  %v153 = vunpack.c.l.b16 %v66
  %v154 = vunpack.c.h.b16 %v66
  %v155 = vunpack.c.l.b16 %v67
  %v156 = vunpack.c.h.b16 %v67
  %v157 = vunpack.c.l.b16 %v68
  %v158 = vunpack.c.h.b16 %v68
  %v159 = vunpack.c.l.b16 %v69
  %v160 = vunpack.c.h.b16 %v69
  %v161 = vunpack.c.l.b16 %v70
  %v162 = vunpack.c.h.b16 %v70
  %v163 = vunpack.c.l.b16 %v71
  %v164 = vunpack.c.h.b16 %v71
  %v165 = vunpack.c.l.b16 %v72
  %v166 = vunpack.c.h.b16 %v72
  %v167 = vunpack.c.l.b16 %v73
  %v168 = vunpack.c.h.b16 %v73
  %v169 = vunpack.c.l.b16 %v74
  %v170 = vunpack.c.h.b16 %v74
  %v171 = vunpack.c.l.b16 %v75
  %v172 = vunpack.c.h.b16 %v75
  %v173 = vunpack.c.l.b16 %v76
  %v174 = vunpack.c.h.b16 %v76
  %v175 = vunpack.c.l.b16 %v77
  %v176 = vunpack.c.h.b16 %v77
  %v177 = vunpack.c.l.b16 %v78
  %v178 = vunpack.c.h.b16 %v78
  %v179 = vunpack.c.l.b16 %v79
  %v180 = vunpack.c.h.b16 %v79
  %v181 = vunpack.c.l.b16 %v80
  %v182 = vunpack.c.h.b16 %v80
  %v183 = vunpack.c.l.b16 %v81
  %v184 = vunpack.c.h.b16 %v81
  %v185 = vunpack.c.l.b16 %v82
  %v186 = vunpack.c.h.b16 %v82
  %v187 = vunpack.c.l.b16 %v83
  %v188 = vunpack.c.h.b16 %v83
  %v189 = vunpack.c.l.b16 %v84
  %v190 = vunpack.c.h.b16 %v84
  %v191 = vunpack.c.l.b16 %v85
  %v192 = vunpack.c.h.b16 %v85
  %v193 = vunpack.c.l.b16 %v86
  %v194 = vunpack.c.h.b16 %v86
  %v195 = vpack.c.b16 %v135, %v131
  %v196 = vpack.c.b16 %v136, %v132
  %v197 = vpack.c.b16 %v137, %v133
  %v198 = vpack.c.b16 %v138, %v134
  %v199 = vpack.c.b16 %v143, %v139
  %v200 = vpack.c.b16 %v144, %v140
  %v201 = vpack.c.b16 %v145, %v141
  %v202 = vpack.c.b16 %v146, %v142
  %v203 = vpack.c.b16 %v151, %v147
  %v204 = vpack.c.b16 %v152, %v148
  %v205 = vpack.c.b16 %v153, %v149
  %v206 = vpack.c.b16 %v154, %v150
  %v207 = vpack.c.b16 %v159, %v155
  %v208 = vpack.c.b16 %v160, %v156
  %v209 = vpack.c.b16 %v161, %v157
  %v210 = vpack.c.b16 %v162, %v158
  %v211 = vpack.c.b16 %v167, %v163
  %v212 = vpack.c.b16 %v168, %v164
  %v213 = vpack.c.b16 %v169, %v165
  %v214 = vpack.c.b16 %v170, %v166
  %v215 = vpack.c.b16 %v175, %v171
  %v216 = vpack.c.b16 %v176, %v172
  %v217 = vpack.c.b16 %v177, %v173
  %v218 = vpack.c.b16 %v178, %v174
  %v219 = vpack.c.b16 %v183, %v179
  %v220 = vpack.c.b16 %v184, %v180
  %v221 = vpack.c.b16 %v185, %v181
  %v222 = vpack.c.b16 %v186, %v182
  %v223 = vpack.c.b16 %v191, %v187
  %v224 = vpack.c.b16 %v192, %v188
  %v225 = vpack.c.b16 %v193, %v189
  %v226 = vpack.c.b16 %v194, %v190
  %259 = vmatprep.subr.bf16.mxu0 %v196
  %260 = vmatpush1.bf16.msra.mxu0 %v195
  %261 = vmatprep.subr.bf16.mxu0 %v200
  %262 = vmatpush1.bf16.msra.mxu0 %v199
  %263 = vmatprep.subr.bf16.mxu0 %v204
  %264 = vmatpush1.bf16.msra.mxu0 %v203
  %265 = vmatprep.subr.bf16.mxu0 %v208
  %266 = vmatpush1.bf16.msra.mxu0 %v207
  %267 = vmatprep.subr.bf16.mxu0 %v212
  %268 = vmatpush1.bf16.msra.mxu0 %v211
  %269 = vmatprep.subr.bf16.mxu0 %v216
  %270 = vmatpush1.bf16.msra.mxu0 %v215
  %271 = vmatprep.subr.bf16.mxu0 %v220
  %272 = vmatpush1.bf16.msra.mxu0 %v219
  %273 = vmatprep.subr.bf16.mxu0 %v224
  %274 = vmatpush1.bf16.msra.mxu0 %v223
  %275 = vmatprep.subr.bf16.mxu0 0
  %276 = vmatpush1.bf16.msra.mxu0 0
  %277 = vmatprep.subr.bf16.mxu0 0
  %278 = vmatpush1.bf16.msra.mxu0 0
  %279 = vmatprep.subr.bf16.mxu0 0
  %280 = vmatpush1.bf16.msra.mxu0 0
  %281 = vmatprep.subr.bf16.mxu0 0
  %282 = vmatpush1.bf16.msra.mxu0 0
  %283 = vmatprep.subr.bf16.mxu0 0
  %284 = vmatpush1.bf16.msra.mxu0 0
  %285 = vmatprep.subr.bf16.mxu0 0
  %286 = vmatpush1.bf16.msra.mxu0 0
  %287 = vmatprep.subr.bf16.mxu0 0
  %288 = vmatpush1.bf16.msra.mxu0 0
  %289 = vmatprep.subr.bf16.mxu0 0
  %290 = vmatpush1.bf16.msra.mxu0 0
  %291 = vmatprep.mubr.bf16.mxu0 0
  %292 = vmatmul.mubr.bf16.gmra.mrb[0].mxu0 %v95
  %v293 = vpop.f32.mrb[0].mxu0
  %v294 = vadd.f32 0.0, %v293
  %v295 = vpop.f32.mrb[0].mxu0
  %v296 = vadd.f32 0.0, %v295
  %v297 = vpop.f32.mrb[0].mxu0
  %v298 = vadd.f32 0.0, %v297
  %v299 = vpop.f32.mrb[0].mxu0
  %v300 = vadd.f32 0.0, %v299
  %301 = vmatprep.mubr.bf16.mxu0 0
  %302 = vmatmul.mubr.bf16.gmra.mrb[0].mxu0 %v96
  %v303 = vpop.f32.mrb[0].mxu0
  %v304 = vadd.f32 0.0, %v303
  %v305 = vpop.f32.mrb[0].mxu0
  %v306 = vadd.f32 0.0, %v305
  %v307 = vpop.f32.mrb[0].mxu0
  %v308 = vadd.f32 0.0, %v307
  %v309 = vpop.f32.mrb[0].mxu0
  %v310 = vadd.f32 0.0, %v309
  %311 = vdwg.mxu0
  %312 = vmatprep.subr.bf16.mxu0 %v198
  %313 = vmatpush1.bf16.msra.mxu0 %v197
  %314 = vmatprep.subr.bf16.mxu0 %v202
  %315 = vmatpush1.bf16.msra.mxu0 %v201
  %316 = vmatprep.subr.bf16.mxu0 %v206
  %317 = vmatpush1.bf16.msra.mxu0 %v205
  %318 = vmatprep.subr.bf16.mxu0 %v210
  %319 = vmatpush1.bf16.msra.mxu0 %v209
  %320 = vmatprep.subr.bf16.mxu0 %v214
  %321 = vmatpush1.bf16.msra.mxu0 %v213
  %322 = vmatprep.subr.bf16.mxu0 %v218
  %323 = vmatpush1.bf16.msra.mxu0 %v217
  %324 = vmatprep.subr.bf16.mxu0 %v222
  %325 = vmatpush1.bf16.msra.mxu0 %v221
  %326 = vmatprep.subr.bf16.mxu0 %v226
  %327 = vmatpush1.bf16.msra.mxu0 %v225
  %328 = vmatprep.subr.bf16.mxu0 0
  %329 = vmatpush1.bf16.msra.mxu0 0
  %330 = vmatprep.subr.bf16.mxu0 0
  %331 = vmatpush1.bf16.msra.mxu0 0
  %332 = vmatprep.subr.bf16.mxu0 0
  %333 = vmatpush1.bf16.msra.mxu0 0
  %334 = vmatprep.subr.bf16.mxu0 0
  %335 = vmatpush1.bf16.msra.mxu0 0
  %336 = vmatprep.subr.bf16.mxu0 0
  %337 = vmatpush1.bf16.msra.mxu0 0
  %338 = vmatprep.subr.bf16.mxu0 0
  %339 = vmatpush1.bf16.msra.mxu0 0
  %340 = vmatprep.subr.bf16.mxu0 0
  %341 = vmatpush1.bf16.msra.mxu0 0
  %342 = vmatprep.subr.bf16.mxu0 0
  %343 = vmatpush1.bf16.msra.mxu0 0
  %344 = vmatprep.mubr.bf16.mxu0 0
  %345 = vmatmul.mubr.bf16.gmra.mrb[0].mxu0 %v95
  %v346 = vpop.f32.mrb[0].mxu0
  %v347 = vadd.f32 0.0, %v346
  %v348 = vpop.f32.mrb[0].mxu0
  %v349 = vadd.f32 0.0, %v348
  %v350 = vpop.f32.mrb[0].mxu0
  %v351 = vadd.f32 0.0, %v350
  %v352 = vpop.f32.mrb[0].mxu0
  %v353 = vadd.f32 0.0, %v352
  %354 = vmatprep.mubr.bf16.mxu0 0
  %355 = vmatmul.mubr.bf16.gmra.mrb[0].mxu0 %v96
  %v356 = vpop.f32.mrb[0].mxu0
  %v357 = vadd.f32 0.0, %v356
  %v358 = vpop.f32.mrb[0].mxu0
  %v359 = vadd.f32 0.0, %v358
  %v360 = vpop.f32.mrb[0].mxu0
  %v361 = vadd.f32 0.0, %v360
  %v362 = vpop.f32.mrb[0].mxu0
  %v363 = vadd.f32 0.0, %v362
  %364 = vdwg.mxu0
  %v365 = vadd.f32 %v35, %v294
  %v366 = vadd.f32 %v36, %v296
  %v367 = vadd.f32 %v37, %v347
  %v368 = vadd.f32 %v38, %v349
  %v369 = vadd.f32 %v39, %v298
  %v370 = vadd.f32 %v40, %v300
  %v371 = vadd.f32 %v41, %v351
  %v372 = vadd.f32 %v42, %v353
  %v373 = vadd.f32 %v43, %v304
  %v374 = vadd.f32 %v44, %v306
  %v375 = vadd.f32 %v45, %v357
  %v376 = vadd.f32 %v46, %v359
  %v377 = vadd.f32 %v47, %v308
  %v378 = vadd.f32 %v48, %v310
  %v379 = vadd.f32 %v49, %v361
  %v380 = vadd.f32 %v50, %v363
  %381 = vst [vmem:[#allocation2] sm:$0xff] %v365
  %382 = vst [vmem:[#allocation2 + $0x8] sm:$0xff] %v366
  %383 = vst [vmem:[#allocation2 + $0x10] sm:$0xff] %v367
  %384 = vst [vmem:[#allocation2 + $0x18] sm:$0xff] %v368
  %385 = vst [vmem:[#allocation2 + $0x20] sm:$0xff] %v369
  %386 = vst [vmem:[#allocation2 + $0x28] sm:$0xff] %v370
  %387 = vst [vmem:[#allocation2 + $0x30] sm:$0xff] %v371
  %388 = vst [vmem:[#allocation2 + $0x38] sm:$0xff] %v372
  %389 = vst [vmem:[#allocation2 + $0x40] sm:$0xff] %v373
  %390 = vst [vmem:[#allocation2 + $0x48] sm:$0xff] %v374
  %391 = vst [vmem:[#allocation2 + $0x50] sm:$0xff] %v375
  %392 = vst [vmem:[#allocation2 + $0x58] sm:$0xff] %v376
  %393 = vst [vmem:[#allocation2 + $0x60] sm:$0xff] %v377
  %394 = vst [vmem:[#allocation2 + $0x68] sm:$0xff] %v378
  %395 = vst [vmem:[#allocation2 + $0x70] sm:$0xff] %v379
  %396 = vst [vmem:[#allocation2 + $0x78] sm:$0xff] %v380
  // Predicated region
  $region18: #{bert_base_cased_forward.15} parent=0 // pred_check
    %p397 = pneg %p15
  $region19: #{bert_base_cased_forward.15} parent=0 // pred_check_branch
    %399 = sbr.rel (%p397) target = $region21
  $region20: #{bert_base_cased_forward.15} parent=0 // pred_region
    %v400 = vld [vmem:[#allocation2] sm:$0xff]
    %v401 = vld [vmem:[#allocation2 + $0x8] sm:$0xff]
    %v402 = vld [vmem:[#allocation2 + $0x10] sm:$0xff]
    %v403 = vld [vmem:[#allocation2 + $0x18] sm:$0xff]
    %v404 = vld [vmem:[#allocation2 + $0x20] sm:$0xff]
    %v405 = vld [vmem:[#allocation2 + $0x28] sm:$0xff]
    %v406 = vld [vmem:[#allocation2 + $0x30] sm:$0xff]
    %v407 = vld [vmem:[#allocation2 + $0x38] sm:$0xff]
    %v408 = vld [vmem:[#allocation2 + $0x40] sm:$0xff]
    %v409 = vld [vmem:[#allocation2 + $0x48] sm:$0xff]
    %v410 = vld [vmem:[#allocation2 + $0x50] sm:$0xff]
    %v411 = vld [vmem:[#allocation2 + $0x58] sm:$0xff]
    %v412 = vld [vmem:[#allocation2 + $0x60] sm:$0xff]
    %v413 = vld [vmem:[#allocation2 + $0x68] sm:$0xff]
    %v414 = vld [vmem:[#allocation2 + $0x70] sm:$0xff]
    %v415 = vld [vmem:[#allocation2 + $0x78] sm:$0xff]
    %v416 = vld [vmem:[%s2] sm:$0xf]
    %v418 = vlaneseq
    %v419 = vshrl.u32 %v418, 7
    %v420 = vsub.s32 0, %v419
    %v421 = vrot.slane %v416, %v420
    %v422 = vlaneseq
    %v423 = vshrl.u32 %v422, 7
    %v424 = vsub.s32 1, %v423
    %v425 = vrot.slane %v416, %v424
    %v426 = vlaneseq
    %v427 = vshrl.u32 %v426, 7
    %v428 = vsub.s32 2, %v427
    %v429 = vrot.slane %v416, %v428
    %v430 = vlaneseq
    %v431 = vshrl.u32 %v430, 7
    %v432 = vsub.s32 3, %v431
    %v433 = vrot.slane %v416, %v432
    %v438 = vadd.f32 %v400, %v421
    %v439 = vadd.f32 %v401, %v425
    %v440 = vadd.f32 %v402, %v429
    %v441 = vadd.f32 %v403, %v433
    %v442 = vadd.f32 %v404, %v421
    %v443 = vadd.f32 %v405, %v425
    %v444 = vadd.f32 %v406, %v429
    %v445 = vadd.f32 %v407, %v433
    %v446 = vadd.f32 %v408, %v421
    %v447 = vadd.f32 %v409, %v425
    %v448 = vadd.f32 %v410, %v429
    %v449 = vadd.f32 %v411, %v433
    %v450 = vadd.f32 %v412, %v421
    %v451 = vadd.f32 %v413, %v425
    %v452 = vadd.f32 %v414, %v429
    %v453 = vadd.f32 %v415, %v433
    %v454 = vmul.f32 %v438, 0.5
    %v455 = vmul.f32 %v439, 0.5
    %v456 = vmul.f32 %v440, 0.5
    %v457 = vmul.f32 %v441, 0.5
    %v458 = vmul.f32 %v442, 0.5
    %v459 = vmul.f32 %v443, 0.5
    %v460 = vmul.f32 %v444, 0.5
    %v461 = vmul.f32 %v445, 0.5
    %v462 = vmul.f32 %v446, 0.5
    %v463 = vmul.f32 %v447, 0.5
    %v464 = vmul.f32 %v448, 0.5
    %v465 = vmul.f32 %v449, 0.5
    %v466 = vmul.f32 %v450, 0.5
    %v467 = vmul.f32 %v451, 0.5
    %v468 = vmul.f32 %v452, 0.5
    %v469 = vmul.f32 %v453, 0.5
    %v470 = vmul.f32 %v438, 0.70710677
    %v471 = vmul.f32 %v439, 0.70710677
    %v472 = vmul.f32 %v440, 0.70710677
    %v473 = vmul.f32 %v441, 0.70710677
    %v474 = vmul.f32 %v442, 0.70710677
    %v475 = vmul.f32 %v443, 0.70710677
    %v476 = vmul.f32 %v444, 0.70710677
    %v477 = vmul.f32 %v445, 0.70710677
    %v478 = vmul.f32 %v446, 0.70710677
    %v479 = vmul.f32 %v447, 0.70710677
    %v480 = vmul.f32 %v448, 0.70710677
    %v481 = vmul.f32 %v449, 0.70710677
    %v482 = vmul.f32 %v450, 0.70710677
    %v483 = vmul.f32 %v451, 0.70710677
    %v484 = vmul.f32 %v452, 0.70710677
    %v485 = vmul.f32 %v453, 0.70710677
    %v486 = verf.f32.pop %v470
    %v487 = verf.f32.pop %v471
    %v488 = verf.f32.pop %v472
    %v489 = verf.f32.pop %v473
    %v490 = verf.f32.pop %v474
    %v491 = verf.f32.pop %v475
    %v492 = verf.f32.pop %v476
    %v493 = verf.f32.pop %v477
    %v494 = verf.f32.pop %v478
    %v495 = verf.f32.pop %v479
    %v496 = verf.f32.pop %v480
    %v497 = verf.f32.pop %v481
    %v498 = verf.f32.pop %v482
    %v499 = verf.f32.pop %v483
    %v500 = verf.f32.pop %v484
    %v501 = verf.f32.pop %v485
    %v502 = vadd.f32 %v486, 1.0
    %v503 = vadd.f32 %v487, 1.0
    %v504 = vadd.f32 %v488, 1.0
    %v505 = vadd.f32 %v489, 1.0
    %v506 = vadd.f32 %v490, 1.0
    %v507 = vadd.f32 %v491, 1.0
    %v508 = vadd.f32 %v492, 1.0
    %v509 = vadd.f32 %v493, 1.0
    %v510 = vadd.f32 %v494, 1.0
    %v511 = vadd.f32 %v495, 1.0
    %v512 = vadd.f32 %v496, 1.0
    %v513 = vadd.f32 %v497, 1.0
    %v514 = vadd.f32 %v498, 1.0
    %v515 = vadd.f32 %v499, 1.0
    %v516 = vadd.f32 %v500, 1.0
    %v517 = vadd.f32 %v501, 1.0
    %v518 = vmul.f32 %v454, %v502
    %v519 = vmul.f32 %v455, %v503
    %v520 = vmul.f32 %v456, %v504
    %v521 = vmul.f32 %v457, %v505
    %v522 = vmul.f32 %v458, %v506
    %v523 = vmul.f32 %v459, %v507
    %v524 = vmul.f32 %v460, %v508
    %v525 = vmul.f32 %v461, %v509
    %v526 = vmul.f32 %v462, %v510
    %v527 = vmul.f32 %v463, %v511
    %v528 = vmul.f32 %v464, %v512
    %v529 = vmul.f32 %v465, %v513
    %v530 = vmul.f32 %v466, %v514
    %v531 = vmul.f32 %v467, %v515
    %v532 = vmul.f32 %v468, %v516
    %v533 = vmul.f32 %v469, %v517
    %v534 = vpack.c.bf16 %v522, %v518
    %v535 = vpack.c.bf16 %v523, %v519
    %v536 = vpack.c.bf16 %v524, %v520
    %v537 = vpack.c.bf16 %v525, %v521
    %v538 = vpack.c.bf16 %v530, %v526
    %v539 = vpack.c.bf16 %v531, %v527
    %v540 = vpack.c.bf16 %v532, %v528
    %v541 = vpack.c.bf16 %v533, %v529
    %v550 = vunpack.c.l.b16 %v534
    %v551 = vunpack.c.l.b16 %v535
    %v552 = vunpack.c.l.b16 %v536
    %v553 = vunpack.c.l.b16 %v537
    %v554 = vunpack.c.h.b16 %v534
    %v555 = vunpack.c.h.b16 %v535
    %v556 = vunpack.c.h.b16 %v536
    %v557 = vunpack.c.h.b16 %v537
    %v558 = vunpack.c.l.b16 %v538
    %v559 = vunpack.c.l.b16 %v539
    %v560 = vunpack.c.l.b16 %v540
    %v561 = vunpack.c.l.b16 %v541
    %v562 = vunpack.c.h.b16 %v538
    %v563 = vunpack.c.h.b16 %v539
    %v564 = vunpack.c.h.b16 %v540
    %v565 = vunpack.c.h.b16 %v541
    %v566 = vpack.c.b16 %v551, %v550
    %v567 = vpack.c.b16 %v553, %v552
    %v568 = vpack.c.b16 %v555, %v554
    %v569 = vpack.c.b16 %v557, %v556
    %v570 = vpack.c.b16 %v559, %v558
    %v571 = vpack.c.b16 %v561, %v560
    %v572 = vpack.c.b16 %v563, %v562
    %v573 = vpack.c.b16 %v565, %v564
    %582 = vst [vmem:[%s3] sm:$0xff] %v566
    %583 = vst [vmem:[%s3 + $0x8] sm:$0xff] %v567
    %584 = vst [vmem:[%s3 + $0x10] sm:$0xff] %v568
    %585 = vst [vmem:[%s3 + $0x18] sm:$0xff] %v569
    %586 = vst [vmem:[%s3 + $0x20] sm:$0xff] %v570
    %587 = vst [vmem:[%s3 + $0x28] sm:$0xff] %v571
    %588 = vst [vmem:[%s3 + $0x30] sm:$0xff] %v572
    %589 = vst [vmem:[%s3 + $0x38] sm:$0xff] %v573
  $region21: #{bert_base_cased_forward.15} parent=0 // pred_fallthru
    _
  // Predicated region
  $region22: #{bert_base_cased_forward.15} parent=0 // pred_check
    _
  $region23: #{bert_base_cased_forward.15} parent=0 // pred_check_branch
    %591 = sbr.rel (0) target = $region25
  $region24: #{bert_base_cased_forward.15} parent=0 // pred_region
    _
  $region25: #{bert_base_cased_forward.15} parent=0 // pred_fallthru
    _
  // Predicated region
  $region26: #{bert_base_cased_forward.15} parent=0 // pred_check
    _
  $region27: #{bert_base_cased_forward.15} parent=0 // pred_check_branch
    %593 = sbr.rel (0) target = $region29
  $region28: #{bert_base_cased_forward.15} parent=0 // pred_region
    _
  $region29: #{bert_base_cased_forward.15} parent=0 // pred_fallthru
    _

// kernel: bert_base_cased_forward.16
$region0: #{bert_base_cased_forward.16}
  #allocation0 [shape = 'u32[]', space=smem, size = 0x4, offset = 0x4, fixed_abs, tag = 'smem constant byte address 0x4 - core index']
  #allocation1 [shape = 'u32[144,128]{1,0:T(1,128)}', space=vmem, size = 0x12000, scoped, tag = 'internal scratch']
  #allocation2 [shape = 'f32[32,128]{1,0:T(8,128)}', space=vmem, size = 0x4000, scoped, tag = 'scratch operand']
  %s0 = inlined_call_operand.vmem [shape: bf16[32,512], index: 0, kind: input, shape index: {}]
  %s1 = inlined_call_operand.vmem [shape: bf16[512,128], index: 1, kind: input, shape index: {}]
  %s2 = inlined_call_operand.vmem [shape: f32[1,128], index: 2, kind: input, shape index: {}]
  %s3 = inlined_call_operand.vmem [shape: bf16[32,128], index: 3, kind: input, shape index: {}]
  %s4 = inlined_call_operand.vmem [shape: f32[1,128], index: 4, kind: input, shape index: {}]
  %s5 = inlined_call_operand.vmem [shape: f32[1,128], index: 5, kind: input, shape index: {}]
  %s6 = inlined_call_operand.vmem [shape: bf16[32,128], index: 6, kind: output, shape index: {}]
  %s7 = sld [smem:[#allocation0]]
  $region42: #{bert_base_cased_forward.16} parent=0
    _
  %s9 = ssub.s32 1, %s7
  %s10 = scalar_select 0, %s9, %s7
  // Predicated region
  $region2: #{bert_base_cased_forward.16} parent=0 // pred_check
    _
  $region3: #{bert_base_cased_forward.16} parent=0 // pred_check_branch
    %12 = sbr.rel (0) target = $region5
  $region4: #{bert_base_cased_forward.16} parent=0 // pred_region
    _
  $region5: #{bert_base_cased_forward.16} parent=0 // pred_fallthru
    _
  // Predicated region
  $region6: #{bert_base_cased_forward.16} parent=0 // pred_check
    _
  $region7: #{bert_base_cased_forward.16} parent=0 // pred_check_branch
    %14 = sbr.rel (0) target = $region9
  $region8: #{bert_base_cased_forward.16} parent=0 // pred_region
    _
  $region9: #{bert_base_cased_forward.16} parent=0 // pred_fallthru
    _
  // Predicated region
  $region10: #{bert_base_cased_forward.16} parent=0 // pred_check
    _
  $region11: #{bert_base_cased_forward.16} parent=0 // pred_check_branch
    %16 = sbr.rel (0) target = $region13
  $region12: #{bert_base_cased_forward.16} parent=0 // pred_region
    _
  $region13: #{bert_base_cased_forward.16} parent=0 // pred_fallthru
    _
  // Predicated region
  $region14: #{bert_base_cased_forward.16} parent=0 // pred_check
    _
  $region15: #{bert_base_cased_forward.16} parent=0 // pred_check_branch
    %18 = sbr.rel (0) target = $region17
  $region16: #{bert_base_cased_forward.16} parent=0 // pred_region
    _
  $region17: #{bert_base_cased_forward.16} parent=0 // pred_fallthru
    _
  // Predicated region
  $region18: #{bert_base_cased_forward.16} parent=0 // pred_check
    _
  $region19: #{bert_base_cased_forward.16} parent=0 // pred_check_branch
    %20 = sbr.rel (0) target = $region21
  $region20: #{bert_base_cased_forward.16} parent=0 // pred_region
    _
  $region21: #{bert_base_cased_forward.16} parent=0 // pred_fallthru
    _
  // Predicated region
  $region22: #{bert_base_cased_forward.16} parent=0 // pred_check
    _
  $region23: #{bert_base_cased_forward.16} parent=0 // pred_check_branch
    %22 = sbr.rel (0) target = $region25
  $region24: #{bert_base_cased_forward.16} parent=0 // pred_region
    _
  $region25: #{bert_base_cased_forward.16} parent=0 // pred_fallthru
    _
  %p24 = scmp.eq.s32.totalorder 0, 0
  // Predicated region
  $region26: #{bert_base_cased_forward.16} parent=0 // pred_check
    %p25 = pneg %p24
  $region27: #{bert_base_cased_forward.16} parent=0 // pred_check_branch
    %27 = sbr.rel (%p25) target = $region29
  $region28: #{bert_base_cased_forward.16} parent=0 // pred_region
    %28 = vst [vmem:[#allocation2] sm:$0xff] 0.0
    %29 = vst [vmem:[#allocation2 + $0x8] sm:$0xff] 0.0
    %30 = vst [vmem:[#allocation2 + $0x10] sm:$0xff] 0.0
    %31 = vst [vmem:[#allocation2 + $0x18] sm:$0xff] 0.0
  $region29: #{bert_base_cased_forward.16} parent=0 // pred_fallthru
    _
  %v32 = vld [vmem:[#allocation2] sm:$0xff]
  %v33 = vld [vmem:[#allocation2 + $0x8] sm:$0xff]
  %v34 = vld [vmem:[#allocation2 + $0x10] sm:$0xff]
  %v35 = vld [vmem:[#allocation2 + $0x18] sm:$0xff]
  %v36 = vld [vmem:[%s0] sm:$0xff]
  %v37 = vld [vmem:[%s0 + $0x8] sm:$0xff]
  %v38 = vld [vmem:[%s0 + $0x10] sm:$0xff]
  %v39 = vld [vmem:[%s0 + $0x18] sm:$0xff]
  %v40 = vld [vmem:[%s0 + $0x20] sm:$0xff]
  %v41 = vld [vmem:[%s0 + $0x28] sm:$0xff]
  %v42 = vld [vmem:[%s0 + $0x30] sm:$0xff]
  %v43 = vld [vmem:[%s0 + $0x38] sm:$0xff]
  %v44 = vld [vmem:[%s1] sm:$0xf]
  %v45 = vld [vmem:[%s1 + $0x4] sm:$0xf]
  %v46 = vld [vmem:[%s1 + $0x8] sm:$0xf]
  %v47 = vld [vmem:[%s1 + $0xc] sm:$0xf]
  %v48 = vld [vmem:[%s1 + $0x10] sm:$0xf]
  %v49 = vld [vmem:[%s1 + $0x14] sm:$0xf]
  %v50 = vld [vmem:[%s1 + $0x18] sm:$0xf]
  %v51 = vld [vmem:[%s1 + $0x1c] sm:$0xf]
  %v52 = vld [vmem:[%s1 + $0x20] sm:$0xf]
  %v53 = vld [vmem:[%s1 + $0x24] sm:$0xf]
  %v54 = vld [vmem:[%s1 + $0x28] sm:$0xf]
  %v55 = vld [vmem:[%s1 + $0x2c] sm:$0xf]
  %v56 = vld [vmem:[%s1 + $0x30] sm:$0xf]
  %v57 = vld [vmem:[%s1 + $0x34] sm:$0xf]
  %v58 = vld [vmem:[%s1 + $0x38] sm:$0xf]
  %v59 = vld [vmem:[%s1 + $0x3c] sm:$0xf]
  %v60 = vld [vmem:[%s1 + $0x40] sm:$0xf]
  %v61 = vld [vmem:[%s1 + $0x44] sm:$0xf]
  %v62 = vld [vmem:[%s1 + $0x48] sm:$0xf]
  %v63 = vld [vmem:[%s1 + $0x4c] sm:$0xf]
  %v64 = vld [vmem:[%s1 + $0x50] sm:$0xf]
  %v65 = vld [vmem:[%s1 + $0x54] sm:$0xf]
  %v66 = vld [vmem:[%s1 + $0x58] sm:$0xf]
  %v67 = vld [vmem:[%s1 + $0x5c] sm:$0xf]
  %v68 = vld [vmem:[%s1 + $0x60] sm:$0xf]
  %v69 = vld [vmem:[%s1 + $0x64] sm:$0xf]
  %v70 = vld [vmem:[%s1 + $0x68] sm:$0xf]
  %v71 = vld [vmem:[%s1 + $0x6c] sm:$0xf]
  %v72 = vld [vmem:[%s1 + $0x70] sm:$0xf]
  %v73 = vld [vmem:[%s1 + $0x74] sm:$0xf]
  %v74 = vld [vmem:[%s1 + $0x78] sm:$0xf]
  %v75 = vld [vmem:[%s1 + $0x7c] sm:$0xf]
  %v76 = vld [vmem:[%s1 + $0x80] sm:$0xf]
  %v77 = vld [vmem:[%s1 + $0x84] sm:$0xf]
  %v78 = vld [vmem:[%s1 + $0x88] sm:$0xf]
  %v79 = vld [vmem:[%s1 + $0x8c] sm:$0xf]
  %v80 = vld [vmem:[%s1 + $0x90] sm:$0xf]
  %v81 = vld [vmem:[%s1 + $0x94] sm:$0xf]
  %v82 = vld [vmem:[%s1 + $0x98] sm:$0xf]
  %v83 = vld [vmem:[%s1 + $0x9c] sm:$0xf]
  %v84 = vld [vmem:[%s1 + $0xa0] sm:$0xf]
  %v85 = vld [vmem:[%s1 + $0xa4] sm:$0xf]
  %v86 = vld [vmem:[%s1 + $0xa8] sm:$0xf]
  %v87 = vld [vmem:[%s1 + $0xac] sm:$0xf]
  %v88 = vld [vmem:[%s1 + $0xb0] sm:$0xf]
  %v89 = vld [vmem:[%s1 + $0xb4] sm:$0xf]
  %v90 = vld [vmem:[%s1 + $0xb8] sm:$0xf]
  %v91 = vld [vmem:[%s1 + $0xbc] sm:$0xf]
  %v92 = vld [vmem:[%s1 + $0xc0] sm:$0xf]
  %v93 = vld [vmem:[%s1 + $0xc4] sm:$0xf]
  %v94 = vld [vmem:[%s1 + $0xc8] sm:$0xf]
  %v95 = vld [vmem:[%s1 + $0xcc] sm:$0xf]
  %v96 = vld [vmem:[%s1 + $0xd0] sm:$0xf]
  %v97 = vld [vmem:[%s1 + $0xd4] sm:$0xf]
  %v98 = vld [vmem:[%s1 + $0xd8] sm:$0xf]
  %v99 = vld [vmem:[%s1 + $0xdc] sm:$0xf]
  %v100 = vld [vmem:[%s1 + $0xe0] sm:$0xf]
  %v101 = vld [vmem:[%s1 + $0xe4] sm:$0xf]
  %v102 = vld [vmem:[%s1 + $0xe8] sm:$0xf]
  %v103 = vld [vmem:[%s1 + $0xec] sm:$0xf]
  %v104 = vld [vmem:[%s1 + $0xf0] sm:$0xf]
  %v105 = vld [vmem:[%s1 + $0xf4] sm:$0xf]
  %v106 = vld [vmem:[%s1 + $0xf8] sm:$0xf]
  %v107 = vld [vmem:[%s1 + $0xfc] sm:$0xf]
  %v116 = vunpack.c.l.b16 %v36
  %v117 = vunpack.c.h.b16 %v36
  %v118 = vunpack.c.l.b16 %v37
  %v119 = vunpack.c.h.b16 %v37
  %v120 = vunpack.c.l.b16 %v38
  %v121 = vunpack.c.h.b16 %v38
  %v122 = vunpack.c.l.b16 %v39
  %v123 = vunpack.c.h.b16 %v39
  %v124 = vunpack.c.l.b16 %v40
  %v125 = vunpack.c.h.b16 %v40
  %v126 = vunpack.c.l.b16 %v41
  %v127 = vunpack.c.h.b16 %v41
  %v128 = vunpack.c.l.b16 %v42
  %v129 = vunpack.c.h.b16 %v42
  %v130 = vunpack.c.l.b16 %v43
  %v131 = vunpack.c.h.b16 %v43
  %v132 = vpack.c.b16 %v120, %v116
  %v133 = vpack.c.b16 %v121, %v117
  %v134 = vpack.c.b16 %v122, %v118
  %v135 = vpack.c.b16 %v123, %v119
  %v136 = vpack.c.b16 %v128, %v124
  %v137 = vpack.c.b16 %v129, %v125
  %v138 = vpack.c.b16 %v130, %v126
  %v139 = vpack.c.b16 %v131, %v127
  %v212 = vunpack.c.l.b16 %v44
  %v213 = vunpack.c.l.b16 %v45
  %v214 = vunpack.c.l.b16 %v46
  %v215 = vunpack.c.l.b16 %v47
  %v216 = vunpack.c.l.b16 %v48
  %v217 = vunpack.c.l.b16 %v49
  %v218 = vunpack.c.l.b16 %v50
  %v219 = vunpack.c.l.b16 %v51
  %v220 = vunpack.c.l.b16 %v52
  %v221 = vunpack.c.l.b16 %v53
  %v222 = vunpack.c.l.b16 %v54
  %v223 = vunpack.c.l.b16 %v55
  %v224 = vunpack.c.l.b16 %v56
  %v225 = vunpack.c.l.b16 %v57
  %v226 = vunpack.c.l.b16 %v58
  %v227 = vunpack.c.l.b16 %v59
  %v228 = vunpack.c.l.b16 %v60
  %v229 = vunpack.c.l.b16 %v61
  %v230 = vunpack.c.l.b16 %v62
  %v231 = vunpack.c.l.b16 %v63
  %v232 = vunpack.c.l.b16 %v64
  %v233 = vunpack.c.l.b16 %v65
  %v234 = vunpack.c.l.b16 %v66
  %v235 = vunpack.c.l.b16 %v67
  %v236 = vunpack.c.l.b16 %v68
  %v237 = vunpack.c.l.b16 %v69
  %v238 = vunpack.c.l.b16 %v70
  %v239 = vunpack.c.l.b16 %v71
  %v240 = vunpack.c.l.b16 %v72
  %v241 = vunpack.c.l.b16 %v73
  %v242 = vunpack.c.l.b16 %v74
  %v243 = vunpack.c.l.b16 %v75
  %v244 = vunpack.c.l.b16 %v76
  %v245 = vunpack.c.l.b16 %v77
  %v246 = vunpack.c.l.b16 %v78
  %v247 = vunpack.c.l.b16 %v79
  %v248 = vunpack.c.l.b16 %v80
  %v249 = vunpack.c.l.b16 %v81
  %v250 = vunpack.c.l.b16 %v82
  %v251 = vunpack.c.l.b16 %v83
  %v252 = vunpack.c.l.b16 %v84
  %v253 = vunpack.c.l.b16 %v85
  %v254 = vunpack.c.l.b16 %v86
  %v255 = vunpack.c.l.b16 %v87
  %v256 = vunpack.c.l.b16 %v88
  %v257 = vunpack.c.l.b16 %v89
  %v258 = vunpack.c.l.b16 %v90
  %v259 = vunpack.c.l.b16 %v91
  %v260 = vunpack.c.l.b16 %v92
  %v261 = vunpack.c.l.b16 %v93
  %v262 = vunpack.c.l.b16 %v94
  %v263 = vunpack.c.l.b16 %v95
  %v264 = vunpack.c.l.b16 %v96
  %v265 = vunpack.c.l.b16 %v97
  %v266 = vunpack.c.l.b16 %v98
  %v267 = vunpack.c.l.b16 %v99
  %v268 = vunpack.c.l.b16 %v100
  %v269 = vunpack.c.l.b16 %v101
  %v270 = vunpack.c.l.b16 %v102
  %v271 = vunpack.c.l.b16 %v103
  %v272 = vunpack.c.l.b16 %v104
  %v273 = vunpack.c.l.b16 %v105
  %v274 = vunpack.c.l.b16 %v106
  %v275 = vunpack.c.l.b16 %v107
  %v276 = vpack.c.b16 %v213, %v212
  %v277 = vpack.c.b16 %v215, %v214
  %v278 = vpack.c.b16 %v217, %v216
  %v279 = vpack.c.b16 %v219, %v218
  %v280 = vpack.c.b16 %v221, %v220
  %v281 = vpack.c.b16 %v223, %v222
  %v282 = vpack.c.b16 %v225, %v224
  %v283 = vpack.c.b16 %v227, %v226
  %v284 = vpack.c.b16 %v229, %v228
  %v285 = vpack.c.b16 %v231, %v230
  %v286 = vpack.c.b16 %v233, %v232
  %v287 = vpack.c.b16 %v235, %v234
  %v288 = vpack.c.b16 %v237, %v236
  %v289 = vpack.c.b16 %v239, %v238
  %v290 = vpack.c.b16 %v241, %v240
  %v291 = vpack.c.b16 %v243, %v242
  %v292 = vpack.c.b16 %v245, %v244
  %v293 = vpack.c.b16 %v247, %v246
  %v294 = vpack.c.b16 %v249, %v248
  %v295 = vpack.c.b16 %v251, %v250
  %v296 = vpack.c.b16 %v253, %v252
  %v297 = vpack.c.b16 %v255, %v254
  %v298 = vpack.c.b16 %v257, %v256
  %v299 = vpack.c.b16 %v259, %v258
  %v300 = vpack.c.b16 %v261, %v260
  %v301 = vpack.c.b16 %v263, %v262
  %v302 = vpack.c.b16 %v265, %v264
  %v303 = vpack.c.b16 %v267, %v266
  %v304 = vpack.c.b16 %v269, %v268
  %v305 = vpack.c.b16 %v271, %v270
  %v306 = vpack.c.b16 %v273, %v272
  %v307 = vpack.c.b16 %v275, %v274
  %340 = vmatprep.subr.bf16.mxu0 0
  %341 = vmatpush1.bf16.msra.mxu0 %v276
  %342 = vmatprep.subr.bf16.mxu0 0
  %343 = vmatpush1.bf16.msra.mxu0 %v277
  %344 = vmatprep.subr.bf16.mxu0 0
  %345 = vmatpush1.bf16.msra.mxu0 %v278
  %346 = vmatprep.subr.bf16.mxu0 0
  %347 = vmatpush1.bf16.msra.mxu0 %v279
  %348 = vmatprep.subr.bf16.mxu0 0
  %349 = vmatpush1.bf16.msra.mxu0 %v280
  %350 = vmatprep.subr.bf16.mxu0 0
  %351 = vmatpush1.bf16.msra.mxu0 %v281
  %352 = vmatprep.subr.bf16.mxu0 0
  %353 = vmatpush1.bf16.msra.mxu0 %v282
  %354 = vmatprep.subr.bf16.mxu0 0
  %355 = vmatpush1.bf16.msra.mxu0 %v283
  %356 = vmatprep.subr.bf16.mxu0 0
  %357 = vmatpush1.bf16.msra.mxu0 %v284
  %358 = vmatprep.subr.bf16.mxu0 0
  %359 = vmatpush1.bf16.msra.mxu0 %v285
  %360 = vmatprep.subr.bf16.mxu0 0
  %361 = vmatpush1.bf16.msra.mxu0 %v286
  %362 = vmatprep.subr.bf16.mxu0 0
  %363 = vmatpush1.bf16.msra.mxu0 %v287
  %364 = vmatprep.subr.bf16.mxu0 0
  %365 = vmatpush1.bf16.msra.mxu0 %v288
  %366 = vmatprep.subr.bf16.mxu0 0
  %367 = vmatpush1.bf16.msra.mxu0 %v289
  %368 = vmatprep.subr.bf16.mxu0 0
  %369 = vmatpush1.bf16.msra.mxu0 %v290
  %370 = vmatprep.subr.bf16.mxu0 0
  %371 = vmatpush1.bf16.msra.mxu0 %v291
  %372 = vmatprep.mubr.bf16.mxu0 %v133
  %373 = vmatmul.mubr.bf16.gmra.mrb[0].mxu0 %v132
  %v374 = vpop.f32.mrb[0].mxu0
  %v375 = vadd.f32 0.0, %v374
  %v376 = vpop.f32.mrb[0].mxu0
  %v377 = vpop.f32.mrb[0].mxu0
  %v378 = vadd.f32 0.0, %v377
  %v379 = vpop.f32.mrb[0].mxu0
  %380 = vmatprep.mubr.bf16.mxu0 %v137
  %381 = vmatmul.mubr.bf16.gmra.mrb[0].mxu0 %v136
  %v382 = vpop.f32.mrb[0].mxu0
  %v383 = vadd.f32 0.0, %v382
  %v384 = vpop.f32.mrb[0].mxu0
  %v385 = vpop.f32.mrb[0].mxu0
  %v386 = vadd.f32 0.0, %v385
  %v387 = vpop.f32.mrb[0].mxu0
  %388 = vdwg.mxu0
  %389 = vmatprep.subr.bf16.mxu0 0
  %390 = vmatpush1.bf16.msra.mxu0 %v292
  %391 = vmatprep.subr.bf16.mxu0 0
  %392 = vmatpush1.bf16.msra.mxu0 %v293
  %393 = vmatprep.subr.bf16.mxu0 0
  %394 = vmatpush1.bf16.msra.mxu0 %v294
  %395 = vmatprep.subr.bf16.mxu0 0
  %396 = vmatpush1.bf16.msra.mxu0 %v295
  %397 = vmatprep.subr.bf16.mxu0 0
  %398 = vmatpush1.bf16.msra.mxu0 %v296
  %399 = vmatprep.subr.bf16.mxu0 0
  %400 = vmatpush1.bf16.msra.mxu0 %v297
  %401 = vmatprep.subr.bf16.mxu0 0
  %402 = vmatpush1.bf16.msra.mxu0 %v298
  %403 = vmatprep.subr.bf16.mxu0 0
  %404 = vmatpush1.bf16.msra.mxu0 %v299
  %405 = vmatprep.subr.bf16.mxu0 0
  %406 = vmatpush1.bf16.msra.mxu0 %v300
  %407 = vmatprep.subr.bf16.mxu0 0
  %408 = vmatpush1.bf16.msra.mxu0 %v301
  %409 = vmatprep.subr.bf16.mxu0 0
  %410 = vmatpush1.bf16.msra.mxu0 %v302
  %411 = vmatprep.subr.bf16.mxu0 0
  %412 = vmatpush1.bf16.msra.mxu0 %v303
  %413 = vmatprep.subr.bf16.mxu0 0
  %414 = vmatpush1.bf16.msra.mxu0 %v304
  %415 = vmatprep.subr.bf16.mxu0 0
  %416 = vmatpush1.bf16.msra.mxu0 %v305
  %417 = vmatprep.subr.bf16.mxu0 0
  %418 = vmatpush1.bf16.msra.mxu0 %v306
  %419 = vmatprep.subr.bf16.mxu0 0
  %420 = vmatpush1.bf16.msra.mxu0 %v307
  %421 = vmatprep.mubr.bf16.mxu0 %v135
  %422 = vmatmul.mubr.bf16.gmra.mrb[0].mxu0 %v134
  %v423 = vpop.f32.mrb[0].mxu0
  %v424 = vadd.f32 %v375, %v423
  %v425 = vpop.f32.mrb[0].mxu0
  %v426 = vpop.f32.mrb[0].mxu0
  %v427 = vadd.f32 %v378, %v426
  %v428 = vpop.f32.mrb[0].mxu0
  %429 = vmatprep.mubr.bf16.mxu0 %v139
  %430 = vmatmul.mubr.bf16.gmra.mrb[0].mxu0 %v138
  %v431 = vpop.f32.mrb[0].mxu0
  %v432 = vadd.f32 %v383, %v431
  %v433 = vpop.f32.mrb[0].mxu0
  %v434 = vpop.f32.mrb[0].mxu0
  %v435 = vadd.f32 %v386, %v434
  %v436 = vpop.f32.mrb[0].mxu0
  %437 = vdwg.mxu0
  %v438 = vadd.f32 %v32, %v424
  %v439 = vadd.f32 %v33, %v427
  %v440 = vadd.f32 %v34, %v432
  %v441 = vadd.f32 %v35, %v435
  %442 = vst [vmem:[#allocation2] sm:$0xff] %v438
  %443 = vst [vmem:[#allocation2 + $0x8] sm:$0xff] %v439
  %444 = vst [vmem:[#allocation2 + $0x10] sm:$0xff] %v440
  %445 = vst [vmem:[#allocation2 + $0x18] sm:$0xff] %v441
  // Predicated region
  $region30: #{bert_base_cased_forward.16} parent=0 // pred_check
    %p446 = pneg %p24
  $region31: #{bert_base_cased_forward.16} parent=0 // pred_check_branch
    %448 = sbr.rel (%p446) target = $region33
  $region32: #{bert_base_cased_forward.16} parent=0 // pred_region
    %v449 = vld [vmem:[#allocation2] sm:$0xff]
    %v450 = vld [vmem:[#allocation2 + $0x8] sm:$0xff]
    %v451 = vld [vmem:[#allocation2 + $0x10] sm:$0xff]
    %v452 = vld [vmem:[#allocation2 + $0x18] sm:$0xff]
    %v453 = vld [vmem:[%s2] sm:$0x1]
    %v455 = vlaneseq
    %v456 = vshrl.u32 %v455, 7
    %v457 = vsub.s32 0, %v456
    %v458 = vrot.slane %v453, %v457
    %v460 = vadd.f32 %v449, %v458
    %v461 = vadd.f32 %v450, %v458
    %v462 = vadd.f32 %v451, %v458
    %v463 = vadd.f32 %v452, %v458
    %v464 = vld [vmem:[%s3] sm:$0xf]
    %v465 = vld [vmem:[%s3 + $0x4] sm:$0xf]
    %v466 = vld [vmem:[%s3 + $0x8] sm:$0xf]
    %v467 = vld [vmem:[%s3 + $0xc] sm:$0xf]
    %v468 = vunpack.c.l.bf16 %v464
    %v469 = vunpack.c.l.bf16 %v465
    %v470 = vunpack.c.l.bf16 %v466
    %v471 = vunpack.c.l.bf16 %v467
    %v472 = vadd.f32 %v460, %v468
    %v473 = vadd.f32 %v461, %v469
    %v474 = vadd.f32 %v462, %v470
    %v475 = vadd.f32 %v463, %v471
    %476 = vadd.xlane.f32.xlu0 %v472
    %v477 = vpop.xlane.xlu0 %476
    %478 = vadd.xlane.f32.xlu0 %v473
    %v479 = vpop.xlane.xlu0 %478
    %480 = vadd.xlane.f32.xlu0 %v474
    %v481 = vpop.xlane.xlu0 %480
    %482 = vadd.xlane.f32.xlu0 %v475
    %v483 = vpop.xlane.xlu0 %482
    %v484 = vrcp.pop 128.0
    %v485 = vmul.f32 %v477, %v484
    %v486 = vmul.f32 %v479, %v484
    %v487 = vmul.f32 %v481, %v484
    %v488 = vmul.f32 %v483, %v484
    %v489 = vsub.f32 %v472, %v485
    %v490 = vsub.f32 %v473, %v486
    %v491 = vsub.f32 %v474, %v487
    %v492 = vsub.f32 %v475, %v488
    %v493 = vmul.f32 %v489, %v489
    %v494 = vmul.f32 %v490, %v490
    %v495 = vmul.f32 %v491, %v491
    %v496 = vmul.f32 %v492, %v492
    %497 = vadd.xlane.f32.xlu0 %v493
    %v498 = vpop.xlane.xlu0 %497
    %499 = vadd.xlane.f32.xlu0 %v494
    %v500 = vpop.xlane.xlu0 %499
    %501 = vadd.xlane.f32.xlu0 %v495
    %v502 = vpop.xlane.xlu0 %501
    %503 = vadd.xlane.f32.xlu0 %v496
    %v504 = vpop.xlane.xlu0 %503
    %v505 = vmul.f32 %v498, %v484
    %v506 = vmul.f32 %v500, %v484
    %v507 = vmul.f32 %v502, %v484
    %v508 = vmul.f32 %v504, %v484
    %v509 = vadd.f32 %v505, 1e-12
    %v510 = vadd.f32 %v506, 1e-12
    %v511 = vadd.f32 %v507, 1e-12
    %v512 = vadd.f32 %v508, 1e-12
    %v513 = vrsqrt.pop %v509
    %v514 = vrsqrt.pop %v510
    %v515 = vrsqrt.pop %v511
    %v516 = vrsqrt.pop %v512
    %v517 = vmul.f32 %v489, %v513
    %v518 = vmul.f32 %v490, %v514
    %v519 = vmul.f32 %v491, %v515
    %v520 = vmul.f32 %v492, %v516
    %v521 = vld [vmem:[%s4] sm:$0x1]
    %v523 = vlaneseq
    %v524 = vshrl.u32 %v523, 7
    %v525 = vsub.s32 0, %v524
    %v526 = vrot.slane %v521, %v525
    %v528 = vmul.f32 %v517, %v526
    %v529 = vmul.f32 %v518, %v526
    %v530 = vmul.f32 %v519, %v526
    %v531 = vmul.f32 %v520, %v526
    %v532 = vld [vmem:[%s5] sm:$0x1]
    %v534 = vlaneseq
    %v535 = vshrl.u32 %v534, 7
    %v536 = vsub.s32 0, %v535
    %v537 = vrot.slane %v532, %v536
    %v539 = vadd.f32 %v528, %v537
    %v540 = vadd.f32 %v529, %v537
    %v541 = vadd.f32 %v530, %v537
    %v542 = vadd.f32 %v531, %v537
    %v543 = vpack.c.bf16 %v540, %v539
    %v544 = vpack.c.bf16 %v542, %v541
    %v547 = vunpack.c.l.b16 %v543
    %v548 = vunpack.c.h.b16 %v543
    %v549 = vunpack.c.l.b16 %v544
    %v550 = vunpack.c.h.b16 %v544
    %v551 = vpack.c.b16 %v547, %v547
    %v552 = vpack.c.b16 %v548, %v548
    %v553 = vpack.c.b16 %v549, %v549
    %v554 = vpack.c.b16 %v550, %v550
    %559 = vst [vmem:[%s6] sm:$0xf] %v551
    %560 = vst [vmem:[%s6 + $0x4] sm:$0xf] %v552
    %561 = vst [vmem:[%s6 + $0x8] sm:$0xf] %v553
    %562 = vst [vmem:[%s6 + $0xc] sm:$0xf] %v554
  $region33: #{bert_base_cased_forward.16} parent=0 // pred_fallthru
    _
  // Predicated region
  $region34: #{bert_base_cased_forward.16} parent=0 // pred_check
    _
  $region35: #{bert_base_cased_forward.16} parent=0 // pred_check_branch
    %564 = sbr.rel (0) target = $region37
  $region36: #{bert_base_cased_forward.16} parent=0 // pred_region
    _
  $region37: #{bert_base_cased_forward.16} parent=0 // pred_fallthru
    _
  // Predicated region
  $region38: #{bert_base_cased_forward.16} parent=0 // pred_check
    _
  $region39: #{bert_base_cased_forward.16} parent=0 // pred_check_branch
    %566 = sbr.rel (0) target = $region41
  $region40: #{bert_base_cased_forward.16} parent=0 // pred_region
    _
  $region41: #{bert_base_cased_forward.16} parent=0 // pred_fallthru
    _

</llo_original>
